<compile_context>
chip_gen: v5e
topology: v5e:2x2
jax: 0.10.0
libtpu: 0.0.40
codegen_flags: <defaults>
</compile_context>

<pallas_src>
import numpy as np
import jax
import jax.numpy as jnp
from jax.experimental import pallas as pl
from jax.experimental.pallas import tpu as pltpu

EPS = 1e-5
AVG_D_LOG = 1.0  # avg_d={'log': 1.0} as in PNAGNN.__init__

AGGREGATORS = ["mean", "max", "min", "std"]
SCALERS = ["identity", "amplification", "attenuation"]


# ----------------------------------------------------------------------------
# Pallas kernel: all PNA layers fused, node state resident in VMEM
# ----------------------------------------------------------------------------
def pnagnn_fused_kernel(x0_ref, oh_ref, ef_ref,
                        wsrc_ref, wedge_ref, wdst_ref, bpre_ref,
                        wpost_ref, bpost_ref, out_ref):
    l = pl.program_id(0)
    N, H = x0_ref.shape
    ND = ef_ref.shape[0]
    D = ND // N

    # Layer 0: seed the resident carry (out_ref block index is constant across
    # the layer grid -> it stays in VMEM for the whole kernel).
    @pl.when(l == 0)
    def _():
        out_ref[...] = x0_ref[...]

    h = out_ref[...]                                   # [N, H] f32 node state

    # dst half of pretrans (+bias): identical for every incoming edge of a
    # node -> hoisted out of the edge dimension entirely. (Kept f32: tiny.)
    dst_term = (jnp.dot(h, wdst_ref[0], preferred_element_type=jnp.float32)
                + bpre_ref[0])                         # [N, H]

    # src half: project once per node, then gather per edge with an exact 0/1
    # one-hot bf16 MXU matmul (replaces the per-layer HBM mailbox + JAX gather).
    xw = jnp.dot(h.astype(jnp.bfloat16), wsrc_ref[0],
                 preferred_element_type=jnp.float32)           # [N, H]
    e_src = jnp.dot(oh_ref[...], xw.astype(jnp.bfloat16),
                    preferred_element_type=jnp.float32)        # [N*D, H]

    # edge half: bond features resident in VMEM (bf16) across all layers.
    e_edge = jnp.dot(ef_ref[...], wedge_ref[0],
                     preferred_element_type=jnp.float32)       # [N*D, H]

    e = (e_src + e_edge).reshape(N, D, H)              # raw messages (dst hoisted)

    # PNA aggregation, shift-invariant form (no VMEM scratch, no per-edge add).
    inv_d = np.float32(1.0 / D)
    mean_raw = jnp.sum(e, axis=1) * inv_d              # [N, H]
    sq_mean = jnp.sum(e * e, axis=1) * inv_d
    mx = jnp.max(e, axis=1) + dst_term
    mn = jnp.min(e, axis=1) + dst_term
    var = jnp.maximum(sq_mean - mean_raw * mean_raw, 0.0)   # torch.relu(E[x^2]-E[x]^2)
    std = jnp.sqrt(var + EPS)                          # invariant to dst shift
    mean = mean_raw + dst_term

    # posttrans Linear: scaler constants already folded into wpost (wrapper),
    # so the 13-block virtual concat collapses to cat([h,mean,max,min,std]).
    hcat = jnp.concatenate([h, mean, mx, mn, std], axis=-1)   # [N, 5H]
    out = (jnp.dot(hcat, wpost_ref[0], preferred_element_type=jnp.float32)
           + bpost_ref[0])

    out_ref[...] = out + h                             # residual; carried to layer l+1


def pnagnn_layers(x0, onehot, ef, wsrc, wedge, wdst, bpre, wpost, bpost):
    L, H, _ = wsrc.shape
    N = x0.shape[0]
    ND = ef.shape[0]
    return pl.pallas_call(
        pnagnn_fused_kernel,
        out_shape=jax.ShapeDtypeStruct((N, H), jnp.float32),
        grid_spec=pltpu.PrefetchScalarGridSpec(
            num_scalar_prefetch=0,
            grid=(L,),                                             # layer axis
            in_specs=[
                pl.BlockSpec((N, H), lambda l: (0, 0)),            # x0 (DMA'd once)
                pl.BlockSpec((ND, N), lambda l: (0, 0)),           # one-hot gather, bf16, resident
                pl.BlockSpec((ND, H), lambda l: (0, 0)),           # bond feats, bf16, resident
                pl.BlockSpec((1, H, H), lambda l: (l, 0, 0)),      # Wpre[src]  (bf16)
                pl.BlockSpec((1, H, H), lambda l: (l, 0, 0)),      # Wpre[edge] (bf16)
                pl.BlockSpec((1, H, H), lambda l: (l, 0, 0)),      # Wpre[dst]  (f32)
                pl.BlockSpec((1, 1, H), lambda l: (l, 0, 0)),      # bpre
                pl.BlockSpec((1, 5 * H, H), lambda l: (l, 0, 0)),  # Wpost (scalers folded)
                pl.BlockSpec((1, 1, H), lambda l: (l, 0, 0)),      # bpost
            ],
            out_specs=pl.BlockSpec((N, H), lambda l: (0, 0)),      # resident node-state carry
        ),
        compiler_params=pltpu.CompilerParams(
            dimension_semantics=("arbitrary",)),                   # layers are sequential
    )(x0, onehot, ef, wsrc, wedge, wdst, bpre, wpost, bpost)


# ----------------------------------------------------------------------------
# Wrapper-time weight preparation (per layer; stacked along a leading L axis)
# ----------------------------------------------------------------------------
def fold_all_params(layers, D):
    """Split pretrans weights into src/dst/edge blocks and fold the PNA scaler
    constants into the posttrans weight: [13H, H] -> [5H, H]."""
    c_amp = np.float32(np.log(D + 1) / AVG_D_LOG)
    c_att = np.float32(AVG_D_LOG / np.log(D + 1))
    wsrc, wedge, wdst, bpre, wpost, bpost = [], [], [], [], [], []
    for lp in layers:
        wp = lp["wpre"]
        H = wp.shape[1]
        wsrc.append(wp[0:H].astype(jnp.bfloat16))
        wdst.append(wp[H:2 * H])
        wedge.append(wp[2 * H:3 * H].astype(jnp.bfloat16))
        bpre.append(lp["bpre"])
        w = lp["wpost"]
        w_x = w[0:H]                        # multiplies h_in
        w_id = w[H:5 * H]                   # identity-scaled aggs (mean,max,min,std)
        w_amp = w[5 * H:9 * H]              # amplification-scaled aggs
        w_att = w[9 * H:13 * H]             # attenuation-scaled aggs
        wpost.append(jnp.concatenate(
            [w_x, w_id + c_amp * w_amp + c_att * w_att], axis=0))
        bpost.append(lp["bpost"])
    stack = lambda xs: jnp.stack(xs, axis=0)
    return (stack(wsrc), stack(wedge), stack(wdst),
            stack(bpre), stack(wpost), stack(bpost))


# ----------------------------------------------------------------------------
# Encoders (embedding-sum, OGB-style AtomEncoder / BondEncoder) -- JAX glue
# ----------------------------------------------------------------------------
def embedding_sum_encode(tables, feats):
    # tables: [F, VOCAB, H], feats: int32 [..., F]
    out = jnp.zeros(feats.shape[:-1] + (tables.shape[-1],), jnp.float32)
    for f in range(tables.shape[0]):
        out = out + tables[f][feats[..., f]]
    return out


# ----------------------------------------------------------------------------
# Parameter init (deterministic, PyTorch-Linear-style uniform)
# ----------------------------------------------------------------------------
def init_linear(key, in_dim, out_dim):
    kw, kb = jax.random.split(key)
    bound = 1.0 / np.sqrt(in_dim)
    w = jax.random.uniform(kw, (in_dim, out_dim), jnp.float32, -bound, bound)
    b = jax.random.uniform(kb, (1, out_dim), jnp.float32, -bound, bound)
    return w, b


def init_params(key, hidden_dim, depth, num_atom_feats, num_bond_feats, vocab):
    keys = jax.random.split(key, 2 + depth)
    atom_emb = 0.1 * jax.random.normal(keys[0], (num_atom_feats, vocab, hidden_dim), jnp.float32)
    bond_emb = 0.1 * jax.random.normal(keys[1], (num_bond_feats, vocab, hidden_dim), jnp.float32)
    layers = []
    n_cat = len(AGGREGATORS) * len(SCALERS) + 1   # 13
    for l in range(depth):
        k1, k2 = jax.random.split(keys[2 + l])
        wpre, bpre = init_linear(k1, 3 * hidden_dim, hidden_dim)        # pretrans MLP (1 layer)
        wpost, bpost = init_linear(k2, n_cat * hidden_dim, hidden_dim)  # posttrans MLP (1 layer)
        layers.append(dict(wpre=wpre, bpre=bpre, wpost=wpost, bpost=bpost))
    return dict(atom_emb=atom_emb, bond_emb=bond_emb, layers=layers)


# ----------------------------------------------------------------------------
# Full PNAGNN forward
# ----------------------------------------------------------------------------
def pnagnn_forward(params, atom_feats, bond_feats, nbr):
    N = atom_feats.shape[0]
    D = nbr.shape[1]
    x0 = embedding_sum_encode(params["atom_emb"], atom_feats)          # [N, H]   f32
    ef = embedding_sum_encode(params["bond_emb"], bond_feats)          # [N, D, H] f32
    H = x0.shape[1]
    # Bond features encoded ONCE, bf16, node-major flatten; resident in VMEM for
    # all layers inside the fused kernel.
    ef_bf = ef.reshape(N * D, H).astype(jnp.bfloat16)
    # Exact 0/1 gather matrix for the in-kernel neighbor gather (one MXU matmul).
    onehot = jax.nn.one_hot(nbr.reshape(-1), N, dtype=jnp.bfloat16)    # [N*D, N]
    wsrc, wedge, wdst, bpre, wpost, bpost = fold_all_params(params["layers"], D)
    return pnagnn_layers(x0, onehot, ef_bf, wsrc, wedge, wdst, bpre, wpost, bpost)


pnagnn_forward_jit = jax.jit(pnagnn_forward)


# ----------------------------------------------------------------------------
# Pure-JAX reference (mirrors the PyTorch PNALayer math) for a sanity check
# ----------------------------------------------------------------------------
def ref_layer(x, nbr, ef, wpre, bpre, wpost, bpost):
    N, H = x.shape
    D = nbr.shape[1]
    xs = x[nbr]
    xd = jnp.broadcast_to(x[:, None, :], (N, D, H))
    z2 = jnp.concatenate([xs, xd, ef], axis=-1)
    e = jnp.einsum("ndk,kh->ndh", z2, wpre,
                   precision=jax.lax.Precision.HIGHEST) + bpre[0]
    mean = e.mean(axis=-2)
    mx = e.max(axis=-2)
    mn = e.min(axis=-2)
    var = jnp.maximum((e * e).mean(axis=-2) - mean * mean, 0.0)
    std = jnp.sqrt(var + EPS)
    agg = jnp.concatenate([mean, mx, mn, std], axis=-1)
    c_amp = np.log(D + 1) / AVG_D_LOG
    c_att = AVG_D_LOG / np.log(D + 1)
    scaled = jnp.concatenate([agg, agg * c_amp, agg * c_att], axis=-1)
    hcat = jnp.concatenate([x, scaled], axis=-1)
    out = jnp.dot(hcat, wpost, precision=jax.lax.Precision.HIGHEST) + bpost[0]
    return out + x


def ref_forward(params, atom_feats, bond_feats, nbr):
    x = embedding_sum_encode(params["atom_emb"], atom_feats)
    ef = embedding_sum_encode(params["bond_emb"], bond_feats)
    for lp in params["layers"]:
        x = ref_layer(x, nbr, ef, lp["wpre"], lp["bpre"], lp["wpost"], lp["bpost"])
    return x


# ----------------------------------------------------------------------------
if __name__ == "__main__":
    N = 64            # nodes
    D = 8             # fixed in-degree (edges per node)
    H = 32            # hidden_dim
    DEPTH = 5         # propagation_depth
    NUM_ATOM_FEATS = 9
    NUM_BOND_FEATS = 3
    VOCAB = 16

    key = jax.random.PRNGKey(0)
    k_p, k_a, k_b = jax.random.split(key, 3)

    params = init_params(k_p, H, DEPTH, NUM_ATOM_FEATS, NUM_BOND_FEATS, VOCAB)

    atom_feats = jax.random.randint(k_a, (N, NUM_ATOM_FEATS), 0, VOCAB, jnp.int32)
    bond_feats = jax.random.randint(k_b, (N, D, NUM_BOND_FEATS), 0, VOCAB, jnp.int32)
    # deterministic neighbor table: node i receives from (i+1..i+D) mod N
    nbr = (jnp.arange(N, dtype=jnp.int32)[:, None]
           + jnp.arange(1, D + 1, dtype=jnp.int32)[None, :]) % N

    out = jax.block_until_ready(pnagnn_forward_jit(params, atom_feats, bond_feats, nbr))
    ref = jax.block_until_ready(ref_forward(params, atom_feats, bond_feats, nbr))

    assert out.shape == (N, H)
    max_err = float(np.max(np.abs(np.asarray(out) - np.asarray(ref))))
    # bf16 message path (gather / src / edge projections and bond feats) over 5
    # residual layers vs. the f32 HIGHEST reference -> allow 2.5e-2.
    assert np.allclose(np.asarray(out), np.asarray(ref), rtol=2.5e-2, atol=2.5e-2), max_err

    print("KERNEL_OK")
</pallas_src>

<mosaic_0001>
module attributes {stable_mosaic.version = 11 : i64} {
  func.func @pnagnn_fused_kernel(%arg0: i32, %arg1: memref<64x32xf32, #tpu.memory_space<vmem>>, %arg2: memref<512x64xbf16, #tpu.memory_space<vmem>>, %arg3: memref<512x32xbf16, #tpu.memory_space<vmem>>, %arg4: memref<1x32x32xbf16, #tpu.memory_space<vmem>>, %arg5: memref<1x32x32xbf16, #tpu.memory_space<vmem>>, %arg6: memref<1x32x32xf32, #tpu.memory_space<vmem>>, %arg7: memref<1x1x32xf32, #tpu.memory_space<vmem>>, %arg8: memref<1x160x32xf32, #tpu.memory_space<vmem>>, %arg9: memref<1x1x32xf32, #tpu.memory_space<vmem>>, %arg10: memref<64x32xf32, #tpu.memory_space<vmem>>) attributes {dimension_semantics = [#tpu.dimension_semantics<arbitrary>], iteration_bounds = array<i64: 5>, scalar_prefetch = 0 : i64, scratch_operands = 0 : i64, tpu.core_type = #tpu.core_type<tc>, window_params = [{pipeline_mode = #tpu.pipeline_mode<synchronous>, transform_indices = @transform_0, window_bounds = array<i64: 64, 32>}, {pipeline_mode = #tpu.pipeline_mode<synchronous>, transform_indices = @transform_1, window_bounds = array<i64: 512, 64>}, {pipeline_mode = #tpu.pipeline_mode<synchronous>, transform_indices = @transform_2, window_bounds = array<i64: 512, 32>}, {transform_indices = @transform_3, window_bounds = array<i64: 1, 32, 32>}, {transform_indices = @transform_4, window_bounds = array<i64: 1, 32, 32>}, {transform_indices = @transform_5, window_bounds = array<i64: 1, 32, 32>}, {transform_indices = @transform_6, window_bounds = array<i64: 1, 1, 32>}, {transform_indices = @transform_7, window_bounds = array<i64: 1, 160, 32>}, {transform_indices = @transform_8, window_bounds = array<i64: 1, 1, 32>}, {pipeline_mode = #tpu.pipeline_mode<synchronous>, transform_indices = @transform_9, window_bounds = array<i64: 64, 32>}]} {
    %c0_i32 = arith.constant 0 : i32
    %0 = arith.cmpi eq, %arg0, %c0_i32 : i32
    %1 = arith.extui %0 : i1 to i32
    %c0_i32_0 = arith.constant 0 : i32
    %2 = arith.cmpi ne, %1, %c0_i32_0 : i32
    scf.if %2 {
      %c0_38 = arith.constant 0 : index
      %c0_39 = arith.constant 0 : index
      %53 = vector.load %arg1[%c0_38, %c0_39] : memref<64x32xf32, #tpu.memory_space<vmem>>, vector<64x32xf32>
      %c0_40 = arith.constant 0 : index
      %c0_41 = arith.constant 0 : index
      %54 = vector.load %arg10[%c0_40, %c0_41] : memref<64x32xf32, #tpu.memory_space<vmem>>, vector<64x32xf32>
      tpu.vector_store %arg10[%c0_40, %c0_41], %53 {strides = array<i32>} : memref<64x32xf32, #tpu.memory_space<vmem>>, vector<64x32xf32>,
    } else {
    }
    %c0 = arith.constant 0 : index
    %c0_1 = arith.constant 0 : index
    %3 = vector.load %arg10[%c0, %c0_1] : memref<64x32xf32, #tpu.memory_space<vmem>>, vector<64x32xf32>
    %c0_2 = arith.constant 0 : index
    %c0_3 = arith.constant 0 : index
    %c0_4 = arith.constant 0 : index
    %4 = vector.load %arg6[%c0_2, %c0_3, %c0_4] : memref<1x32x32xf32, #tpu.memory_space<vmem>>, vector<1x32x32xf32>
    %5 = vector.shape_cast %4 : vector<1x32x32xf32> to vector<32x32xf32>
    %cst = arith.constant dense<0.000000e+00> : vector<64x32xf32>
    %6 = tpu.matmul %3, %5, %cst {dimension_numbers = #tpu.dot_dimension_numbers<[1], [0], [0], [1], [0, 0, 1, 1], [], []>} : vector<64x32xf32>, vector<32x32xf32>, vector<64x32xf32> -> vector<64x32xf32>
    %c0_5 = arith.constant 0 : index
    %c0_6 = arith.constant 0 : index
    %c0_7 = arith.constant 0 : index
    %7 = vector.load %arg7[%c0_5, %c0_6, %c0_7] : memref<1x1x32xf32, #tpu.memory_space<vmem>>, vector<1x1x32xf32>
    %8 = vector.shape_cast %7 : vector<1x1x32xf32> to vector<1x32xf32>
    %9 = vector.broadcast %8 : vector<1x32xf32> to vector<64x32xf32>
    %10 = arith.addf %6, %9 : vector<64x32xf32>
    %11 = arith.truncf %3 : vector<64x32xf32> to vector<64x32xbf16>
    %c0_8 = arith.constant 0 : index
    %c0_9 = arith.constant 0 : index
    %c0_10 = arith.constant 0 : index
    %12 = vector.load %arg4[%c0_8, %c0_9, %c0_10] : memref<1x32x32xbf16, #tpu.memory_space<vmem>>, vector<1x32x32xbf16>
    %13 = vector.shape_cast %12 : vector<1x32x32xbf16> to vector<32x32xbf16>
    %cst_11 = arith.constant dense<0.000000e+00> : vector<64x32xf32>
    %14 = tpu.matmul %11, %13, %cst_11 {dimension_numbers = #tpu.dot_dimension_numbers<[1], [0], [0], [1], [0, 0, 1, 1], [], []>} : vector<64x32xbf16>, vector<32x32xbf16>, vector<64x32xf32> -> vector<64x32xf32>
    %c0_12 = arith.constant 0 : index
    %c0_13 = arith.constant 0 : index
    %15 = vector.load %arg2[%c0_12, %c0_13] : memref<512x64xbf16, #tpu.memory_space<vmem>>, vector<512x64xbf16>
    %16 = arith.truncf %14 : vector<64x32xf32> to vector<64x32xbf16>
    %cst_14 = arith.constant dense<0.000000e+00> : vector<512x32xf32>
    %17 = tpu.matmul %15, %16, %cst_14 {dimension_numbers = #tpu.dot_dimension_numbers<[1], [0], [0], [1], [0, 0, 1, 1], [], []>} : vector<512x64xbf16>, vector<64x32xbf16>, vector<512x32xf32> -> vector<512x32xf32>
    %c0_15 = arith.constant 0 : index
    %c0_16 = arith.constant 0 : index
    %18 = vector.load %arg3[%c0_15, %c0_16] : memref<512x32xbf16, #tpu.memory_space<vmem>>, vector<512x32xbf16>
    %c0_17 = arith.constant 0 : index
    %c0_18 = arith.constant 0 : index
    %c0_19 = arith.constant 0 : index
    %19 = vector.load %arg5[%c0_17, %c0_18, %c0_19] : memref<1x32x32xbf16, #tpu.memory_space<vmem>>, vector<1x32x32xbf16>
    %20 = vector.shape_cast %19 : vector<1x32x32xbf16> to vector<32x32xbf16>
    %cst_20 = arith.constant dense<0.000000e+00> : vector<512x32xf32>
    %21 = tpu.matmul %18, %20, %cst_20 {dimension_numbers = #tpu.dot_dimension_numbers<[1], [0], [0], [1], [0, 0, 1, 1], [], []>} : vector<512x32xbf16>, vector<32x32xbf16>, vector<512x32xf32> -> vector<512x32xf32>
    %22 = arith.addf %17, %21 : vector<512x32xf32>
    %23 = vector.shape_cast %22 : vector<512x32xf32> to vector<64x8x32xf32>
    %cst_21 = arith.constant dense<0.000000e+00> : vector<64x32xf32>
    %24 = vector.multi_reduction <add>, %23, %cst_21 [1] : vector<64x8x32xf32> to vector<64x32xf32>
    %cst_22 = arith.constant 1.250000e-01 : f32
    %25 = vector.broadcast %cst_22 : f32 to vector<64x32xf32>
    %26 = arith.mulf %24, %25 : vector<64x32xf32>
    %27 = arith.mulf %23, %23 : vector<64x8x32xf32>
    %cst_23 = arith.constant dense<0.000000e+00> : vector<64x32xf32>
    %28 = vector.multi_reduction <add>, %27, %cst_23 [1] : vector<64x8x32xf32> to vector<64x32xf32>
    %cst_24 = arith.constant 1.250000e-01 : f32
    %29 = vector.broadcast %cst_24 : f32 to vector<64x32xf32>
    %30 = arith.mulf %28, %29 : vector<64x32xf32>
    %cst_25 = arith.constant dense<0xFF800000> : vector<64x32xf32>
    %31 = vector.multi_reduction <maximumf>, %23, %cst_25 [1] : vector<64x8x32xf32> to vector<64x32xf32>
    %32 = arith.addf %31, %10 : vector<64x32xf32>
    %cst_26 = arith.constant dense<0x7F800000> : vector<64x32xf32>
    %33 = vector.multi_reduction <minimumf>, %23, %cst_26 [1] : vector<64x8x32xf32> to vector<64x32xf32>
    %34 = arith.addf %33, %10 : vector<64x32xf32>
    %35 = arith.mulf %26, %26 : vector<64x32xf32>
    %36 = arith.subf %30, %35 : vector<64x32xf32>
    %cst_27 = arith.constant 0.000000e+00 : f32
    %37 = vector.broadcast %cst_27 : f32 to vector<64x32xf32>
    %38 = arith.maximumf %36, %37 : vector<64x32xf32>
    %cst_28 = arith.constant 9.99999974E-6 : f32
    %39 = vector.broadcast %cst_28 : f32 to vector<64x32xf32>
    %40 = arith.addf %38, %39 : vector<64x32xf32>
    %41 = math.sqrt %40 : vector<64x32xf32>
    %42 = arith.addf %26, %10 : vector<64x32xf32>
    %43 = tpu.concatenate %3, %42, %32, %34, %41 in 1 : vector<64x32xf32>, vector<64x32xf32>, vector<64x32xf32>, vector<64x32xf32>, vector<64x32xf32> -> vector<64x160xf32>
    %c0_29 = arith.constant 0 : index
    %c0_30 = arith.constant 0 : index
    %c0_31 = arith.constant 0 : index
    %44 = vector.load %arg8[%c0_29, %c0_30, %c0_31] : memref<1x160x32xf32, #tpu.memory_space<vmem>>, vector<1x160x32xf32>
    %45 = vector.shape_cast %44 : vector<1x160x32xf32> to vector<160x32xf32>
    %cst_32 = arith.constant dense<0.000000e+00> : vector<64x32xf32>
    %46 = tpu.matmul %43, %45, %cst_32 {dimension_numbers = #tpu.dot_dimension_numbers<[1], [0], [0], [1], [0, 0, 1, 1], [], []>} : vector<64x160xf32>, vector<160x32xf32>, vector<64x32xf32> -> vector<64x32xf32>
    %c0_33 = arith.constant 0 : index
    %c0_34 = arith.constant 0 : index
    %c0_35 = arith.constant 0 : index
    %47 = vector.load %arg9[%c0_33, %c0_34, %c0_35] : memref<1x1x32xf32, #tpu.memory_space<vmem>>, vector<1x1x32xf32>
    %48 = vector.shape_cast %47 : vector<1x1x32xf32> to vector<1x32xf32>
    %49 = vector.broadcast %48 : vector<1x32xf32> to vector<64x32xf32>
    %50 = arith.addf %46, %49 : vector<64x32xf32>
    %51 = arith.addf %50, %3 : vector<64x32xf32>
    %c0_36 = arith.constant 0 : index
    %c0_37 = arith.constant 0 : index
    %52 = vector.load %arg10[%c0_36, %c0_37] : memref<64x32xf32, #tpu.memory_space<vmem>>, vector<64x32xf32>
    tpu.vector_store %arg10[%c0_36, %c0_37], %51 {strides = array<i32>} : memref<64x32xf32, #tpu.memory_space<vmem>>, vector<64x32xf32>,
    return
  }
  func.func @transform_0(%arg0: i32) -> (i32, i32) {
    %c0_i32 = arith.constant 0 : i32
    %c0_i32_0 = arith.constant 0 : i32
    %c0_i32_1 = arith.constant 0 : i32
    return %c0_i32, %c0_i32_0 : i32, i32
  }
  func.func @transform_1(%arg0: i32) -> (i32, i32) {
    %c0_i32 = arith.constant 0 : i32
    %c0_i32_0 = arith.constant 0 : i32
    %c0_i32_1 = arith.constant 0 : i32
    return %c0_i32, %c0_i32_0 : i32, i32
  }
  func.func @transform_2(%arg0: i32) -> (i32, i32) {
    %c0_i32 = arith.constant 0 : i32
    %c0_i32_0 = arith.constant 0 : i32
    %c0_i32_1 = arith.constant 0 : i32
    return %c0_i32, %c0_i32_0 : i32, i32
  }
  func.func @transform_3(%arg0: i32) -> (i32, i32, i32) {
    %c0_i32 = arith.constant 0 : i32
    %c0_i32_0 = arith.constant 0 : i32
    %c0_i32_1 = arith.constant 0 : i32
    return %arg0, %c0_i32, %c0_i32_0 : i32, i32, i32
  }
  func.func @transform_4(%arg0: i32) -> (i32, i32, i32) {
    %c0_i32 = arith.constant 0 : i32
    %c0_i32_0 = arith.constant 0 : i32
    %c0_i32_1 = arith.constant 0 : i32
    return %arg0, %c0_i32, %c0_i32_0 : i32, i32, i32
  }
  func.func @transform_5(%arg0: i32) -> (i32, i32, i32) {
    %c0_i32 = arith.constant 0 : i32
    %c0_i32_0 = arith.constant 0 : i32
    %c0_i32_1 = arith.constant 0 : i32
    return %arg0, %c0_i32, %c0_i32_0 : i32, i32, i32
  }
  func.func @transform_6(%arg0: i32) -> (i32, i32, i32) {
    %c0_i32 = arith.constant 0 : i32
    %c0_i32_0 = arith.constant 0 : i32
    %c0_i32_1 = arith.constant 0 : i32
    return %arg0, %c0_i32, %c0_i32_0 : i32, i32, i32
  }
  func.func @transform_7(%arg0: i32) -> (i32, i32, i32) {
    %c0_i32 = arith.constant 0 : i32
    %c0_i32_0 = arith.constant 0 : i32
    %c0_i32_1 = arith.constant 0 : i32
    return %arg0, %c0_i32, %c0_i32_0 : i32, i32, i32
  }
  func.func @transform_8(%arg0: i32) -> (i32, i32, i32) {
    %c0_i32 = arith.constant 0 : i32
    %c0_i32_0 = arith.constant 0 : i32
    %c0_i32_1 = arith.constant 0 : i32
    return %arg0, %c0_i32, %c0_i32_0 : i32, i32, i32
  }
  func.func @transform_9(%arg0: i32) -> (i32, i32) {
    %c0_i32 = arith.constant 0 : i32
    %c0_i32_0 = arith.constant 0 : i32
    %c0_i32_1 = arith.constant 0 : i32
    return %c0_i32, %c0_i32_0 : i32, i32
  }
}

</mosaic_0001>

<llo_original>
// kernel: eq.1
$region0: #{eq.1}
  %s0 = inlined_call_operand.vmem [shape: s32[64,8], index: 0, kind: input, shape index: {}]
  %s1 = inlined_call_operand.vmem [shape: s32[512], index: 1, kind: output, shape index: {}]
  $region1: #{eq.1} parent=0
    #allocation0 [shape = 'u8[4096]{0}', space=vmem, size = 0x1000, scoped, tag = 'scoped mem for output reshape']
    %s2 = smov 3
    %v3 = vld [vmem:[%s0] ss:$16 sm:%s2]
    %s4 = smov 12
    %v5 = vld [vmem:[%s0] ss:$16 sm:%s4]
    %vm6 = vcmask 1043458
    %v7 = vsel %vm6, %v5, %v3
    %vm8 = vcmask 64512
    %9 = vst.msk [vmem:[#allocation0] sm:$0xf] %vm8, %v7
    %s10 = scalar_lea.vmem %s0, 15
    %s11 = smov 3
    %v12 = vld [vmem:[%s10] ss:$16 sm:%s11]
    %s13 = scalar_lea.vmem %s0, 15
    %s14 = smov 12
    %v15 = vld [vmem:[%s13] ss:$16 sm:%s14]
    %vm16 = vcmask 1043458
    %v17 = vsel %vm16, %v15, %v12
    %18 = vrot.lane.b32.xlu0 %v17, 120
    %v19 = vpop.permute.xlu0 %18
    %vm20 = vcmask 1048512
    %21 = vst.msk [vmem:[#allocation0] sm:$0xf] %vm20, %v19
    %s22 = scalar_lea.vmem %s0, 14
    %s23 = smov 3
    %v24 = vld [vmem:[%s22] ss:$16 sm:%s23]
    %s25 = scalar_lea.vmem %s0, 14
    %s26 = smov 12
    %v27 = vld [vmem:[%s25] ss:$16 sm:%s26]
    %vm28 = vcmask 1043458
    %v29 = vsel %vm28, %v27, %v24
    %30 = vrot.lane.b32.xlu0 %v29, 112
    %v31 = vpop.permute.xlu0 %30
    %vm32 = vcmask 982912
    %33 = vst.msk [vmem:[#allocation0] sm:$0xf] %vm32, %v31
    %s34 = scalar_lea.vmem %s0, 13
    %s35 = smov 3
    %v36 = vld [vmem:[%s34] ss:$16 sm:%s35]
    %s37 = scalar_lea.vmem %s0, 13
    %s38 = smov 12
    %v39 = vld [vmem:[%s37] ss:$16 sm:%s38]
    %vm40 = vcmask 1043458
    %v41 = vsel %vm40, %v39, %v36
    %42 = vrot.lane.b32.xlu0 %v41, 104
    %v43 = vpop.permute.xlu0 %42
    %vm44 = vcmask 917312
    %45 = vst.msk [vmem:[#allocation0] sm:$0xf] %vm44, %v43
    %s46 = scalar_lea.vmem %s0, 12
    %s47 = smov 3
    %v48 = vld [vmem:[%s46] ss:$16 sm:%s47]
    %s49 = scalar_lea.vmem %s0, 12
    %s50 = smov 12
    %v51 = vld [vmem:[%s49] ss:$16 sm:%s50]
    %vm52 = vcmask 1043458
    %v53 = vsel %vm52, %v51, %v48
    %54 = vrot.lane.b32.xlu0 %v53, 96
    %v55 = vpop.permute.xlu0 %54
    %vm56 = vcmask 851712
    %57 = vst.msk [vmem:[#allocation0] sm:$0xf] %vm56, %v55
    %s58 = scalar_lea.vmem %s0, 11
    %s59 = smov 3
    %v60 = vld [vmem:[%s58] ss:$16 sm:%s59]
    %s61 = scalar_lea.vmem %s0, 11
    %s62 = smov 12
    %v63 = vld [vmem:[%s61] ss:$16 sm:%s62]
    %vm64 = vcmask 1043458
    %v65 = vsel %vm64, %v63, %v60
    %66 = vrot.lane.b32.xlu0 %v65, 88
    %v67 = vpop.permute.xlu0 %66
    %vm68 = vcmask 786112
    %69 = vst.msk [vmem:[#allocation0] sm:$0xf] %vm68, %v67
    %s70 = scalar_lea.vmem %s0, 10
    %s71 = smov 3
    %v72 = vld [vmem:[%s70] ss:$16 sm:%s71]
    %s73 = scalar_lea.vmem %s0, 10
    %s74 = smov 12
    %v75 = vld [vmem:[%s73] ss:$16 sm:%s74]
    %vm76 = vcmask 1043458
    %v77 = vsel %vm76, %v75, %v72
    %78 = vrot.lane.b32.xlu0 %v77, 80
    %v79 = vpop.permute.xlu0 %78
    %vm80 = vcmask 720512
    %81 = vst.msk [vmem:[#allocation0] sm:$0xf] %vm80, %v79
    %s82 = scalar_lea.vmem %s0, 9
    %s83 = smov 3
    %v84 = vld [vmem:[%s82] ss:$16 sm:%s83]
    %s85 = scalar_lea.vmem %s0, 9
    %s86 = smov 12
    %v87 = vld [vmem:[%s85] ss:$16 sm:%s86]
    %vm88 = vcmask 1043458
    %v89 = vsel %vm88, %v87, %v84
    %90 = vrot.lane.b32.xlu0 %v89, 72
    %v91 = vpop.permute.xlu0 %90
    %vm92 = vcmask 654912
    %93 = vst.msk [vmem:[#allocation0] sm:$0xf] %vm92, %v91
    %s94 = scalar_lea.vmem %s0, 8
    %s95 = smov 3
    %v96 = vld [vmem:[%s94] ss:$16 sm:%s95]
    %s97 = scalar_lea.vmem %s0, 8
    %s98 = smov 12
    %v99 = vld [vmem:[%s97] ss:$16 sm:%s98]
    %vm100 = vcmask 1043458
    %v101 = vsel %vm100, %v99, %v96
    %102 = vrot.lane.b32.xlu0 %v101, 64
    %v103 = vpop.permute.xlu0 %102
    %vm104 = vcmask 589312
    %105 = vst.msk [vmem:[#allocation0] sm:$0xf] %vm104, %v103
    %s106 = scalar_lea.vmem %s0, 7
    %s107 = smov 3
    %v108 = vld [vmem:[%s106] ss:$16 sm:%s107]
    %s109 = scalar_lea.vmem %s0, 7
    %s110 = smov 12
    %v111 = vld [vmem:[%s109] ss:$16 sm:%s110]
    %vm112 = vcmask 1043458
    %v113 = vsel %vm112, %v111, %v108
    %114 = vrot.lane.b32.xlu0 %v113, 56
    %v115 = vpop.permute.xlu0 %114
    %vm116 = vcmask 523712
    %117 = vst.msk [vmem:[#allocation0] sm:$0xf] %vm116, %v115
    %s118 = scalar_lea.vmem %s0, 6
    %s119 = smov 3
    %v120 = vld [vmem:[%s118] ss:$16 sm:%s119]
    %s121 = scalar_lea.vmem %s0, 6
    %s122 = smov 12
    %v123 = vld [vmem:[%s121] ss:$16 sm:%s122]
    %vm124 = vcmask 1043458
    %v125 = vsel %vm124, %v123, %v120
    %126 = vrot.lane.b32.xlu0 %v125, 48
    %v127 = vpop.permute.xlu0 %126
    %vm128 = vcmask 458112
    %129 = vst.msk [vmem:[#allocation0] sm:$0xf] %vm128, %v127
    %s130 = scalar_lea.vmem %s0, 5
    %s131 = smov 3
    %v132 = vld [vmem:[%s130] ss:$16 sm:%s131]
    %s133 = scalar_lea.vmem %s0, 5
    %s134 = smov 12
    %v135 = vld [vmem:[%s133] ss:$16 sm:%s134]
    %vm136 = vcmask 1043458
    %v137 = vsel %vm136, %v135, %v132
    %138 = vrot.lane.b32.xlu0 %v137, 40
    %v139 = vpop.permute.xlu0 %138
    %vm140 = vcmask 392512
    %141 = vst.msk [vmem:[#allocation0] sm:$0xf] %vm140, %v139
    %s142 = scalar_lea.vmem %s0, 4
    %s143 = smov 3
    %v144 = vld [vmem:[%s142] ss:$16 sm:%s143]
    %s145 = scalar_lea.vmem %s0, 4
    %s146 = smov 12
    %v147 = vld [vmem:[%s145] ss:$16 sm:%s146]
    %vm148 = vcmask 1043458
    %v149 = vsel %vm148, %v147, %v144
    %150 = vrot.lane.b32.xlu0 %v149, 32
    %v151 = vpop.permute.xlu0 %150
    %vm152 = vcmask 326912
    %153 = vst.msk [vmem:[#allocation0] sm:$0xf] %vm152, %v151
    %s154 = scalar_lea.vmem %s0, 3
    %s155 = smov 3
    %v156 = vld [vmem:[%s154] ss:$16 sm:%s155]
    %s157 = scalar_lea.vmem %s0, 3
    %s158 = smov 12
    %v159 = vld [vmem:[%s157] ss:$16 sm:%s158]
    %vm160 = vcmask 1043458
    %v161 = vsel %vm160, %v159, %v156
    %162 = vrot.lane.b32.xlu0 %v161, 24
    %v163 = vpop.permute.xlu0 %162
    %vm164 = vcmask 261312
    %165 = vst.msk [vmem:[#allocation0] sm:$0xf] %vm164, %v163
    %s166 = scalar_lea.vmem %s0, 2
    %s167 = smov 3
    %v168 = vld [vmem:[%s166] ss:$16 sm:%s167]
    %s169 = scalar_lea.vmem %s0, 2
    %s170 = smov 12
    %v171 = vld [vmem:[%s169] ss:$16 sm:%s170]
    %vm172 = vcmask 1043458
    %v173 = vsel %vm172, %v171, %v168
    %174 = vrot.lane.b32.xlu0 %v173, 16
    %v175 = vpop.permute.xlu0 %174
    %vm176 = vcmask 195712
    %177 = vst.msk [vmem:[#allocation0] sm:$0xf] %vm176, %v175
    %s178 = scalar_lea.vmem %s0, 1
    %s179 = smov 3
    %v180 = vld [vmem:[%s178] ss:$16 sm:%s179]
    %s181 = scalar_lea.vmem %s0, 1
    %s182 = smov 12
    %v183 = vld [vmem:[%s181] ss:$16 sm:%s182]
    %vm184 = vcmask 1043458
    %v185 = vsel %vm184, %v183, %v180
    %186 = vrot.lane.b32.xlu0 %v185, 8
    %v187 = vpop.permute.xlu0 %186
    %vm188 = vcmask 130112
    %189 = vst.msk [vmem:[#allocation0] sm:$0xf] %vm188, %v187
    %s191 = ssub.s32 16, 1
    %v192 = vld [vmem:[#allocation0] sm:%s191]
    %s194 = ssub.s32 16, 1
    %195 = vst [vmem:[%s1] sm:%s194] %v192

// kernel: pnagnn_forward.1
$region0: #{pnagnn_forward.1}
  #allocation0 [shape = 'u32[]', space=smem, size = 0x4, offset = 0x4, fixed_abs, tag = 'smem constant byte address 0x4 - core index']
  #allocation1 [shape = 'u32[72,128]{1,0:T(1,128)}', space=vmem, size = 0x9000, scoped, tag = 'internal scratch']
  %s0 = inlined_call_operand.vmem [shape: f32[64,32], index: 0, kind: input, shape index: {}]
  %s1 = inlined_call_operand.vmem [shape: bf16[512,64], index: 1, kind: input, shape index: {}]
  %s2 = inlined_call_operand.vmem [shape: bf16[512,32], index: 2, kind: input, shape index: {}]
  %s3 = inlined_call_operand.vmem [shape: bf16[5,32,32], index: 3, kind: input, shape index: {}]
  %s4 = inlined_call_operand.vmem [shape: bf16[5,32,32], index: 4, kind: input, shape index: {}]
  %s5 = inlined_call_operand.vmem [shape: f32[5,32,32], index: 5, kind: input, shape index: {}]
  %s6 = inlined_call_operand.vmem [shape: f32[5,1,32], index: 6, kind: input, shape index: {}]
  %s7 = inlined_call_operand.vmem [shape: f32[5,160,32], index: 7, kind: input, shape index: {}]
  %s8 = inlined_call_operand.vmem [shape: f32[5,1,32], index: 8, kind: input, shape index: {}]
  %s9 = inlined_call_operand.vmem [shape: f32[64,32], index: 9, kind: output, shape index: {}]
  %s10 = sld [smem:[#allocation0]]
  $region73: #{pnagnn_forward.1} parent=0
    _
  %s12 = ssub.s32 1, %s10
  %s13 = scalar_select 0, %s12, %s10
  loop: start=0, step=1, limit=7
  $region2: #{pnagnn_forward.1} parent=0 // loop_pre_header
    _
  $region3: #{pnagnn_forward.1} parent=0 // loop_header
    %s15 = sphi 0, %s19
    %p16 = scmp.ge.s32.totalorder %s15, 7
    %s23 = sphi 0, %s23
    %s25 = sphi 0, %s23
    %s26 = sphi 0, %s25
    %s40 = sphi 0, %s26
    %s44 = sphi 0, %s44
    %s46 = sphi 0, %s44
    %s47 = sphi 0, %s46
    %s61 = sphi 0, %s47
    %s65 = sphi 0, %s65
    %s67 = sphi 0, %s65
    %s68 = sphi 0, %s67
    %s82 = sphi 0, %s68
    %s88 = sphi 0, %s90
    %s91 = sphi 0, %s88
    %s92 = sphi 0, %s91
    %s108 = sphi 0, %s92
    %s114 = sphi 0, %s116
    %s117 = sphi 0, %s114
    %s118 = sphi 0, %s117
    %s134 = sphi 0, %s118
    %s140 = sphi 0, %s142
    %s143 = sphi 0, %s140
    %s144 = sphi 0, %s143
    %s160 = sphi 0, %s144
    %s166 = sphi 0, %s168
    %s169 = sphi 0, %s166
    %s170 = sphi 0, %s169
    %s186 = sphi 0, %s170
    %s192 = sphi 0, %s194
    %s195 = sphi 0, %s192
    %s196 = sphi 0, %s195
    %s212 = sphi 0, %s196
    %s218 = sphi 0, %s220
    %s221 = sphi 0, %s218
    %s222 = sphi 0, %s221
    %s238 = sphi 0, %s222
    %s242 = sphi 0, %s242
    %s244 = sphi 0, %s242
    %s245 = sphi 0, %s244
    %s259 = sphi 0, %s245
  $region4: #{pnagnn_forward.1} parent=0 // loop_header_branch
    %18 = sbr.rel (%p16) target = $region8
  $region5: #{pnagnn_forward.1} parent=0 // loop_body
    %s20 = ssub.s32 %s15, 1
    %s21 = ssub.s32 %s15, 2
    %s22 = sadd.s32 %s15, 1
    %s24 = sadd.s32 %s23, 1
    %p27 = scmp.eq.s32.totalorder %s15, 4
    %p28 = scmp.ne.s32.totalorder %s23, %s25
    %p29 = scmp.eq.s32.totalorder %s15, 0
    %p30 = por %p28, %p29
    %p31 = scmp.ne.s32.totalorder %s23, %s25
    %p32 = scmp.eq.s32.totalorder %s20, 4
    %p33 = por %p31, %p32
    %p34 = scmp.ne.s32.totalorder %s25, %s26
    %p35 = scmp.eq.s32.totalorder %s20, 0
    %p36 = por %p34, %p35
    %p37 = scmp.ne.s32.totalorder %s25, %s26
    %p38 = scmp.eq.s32.totalorder %s21, 4
    %p39 = por %p37, %p38
    %p41 = scmp.ne.s32.totalorder %s26, %s40
    %p42 = scmp.eq.s32.totalorder %s21, 0
    %p43 = por %p41, %p42
    %s45 = sadd.s32 %s44, 1
    %p48 = scmp.eq.s32.totalorder %s15, 4
    %p49 = scmp.ne.s32.totalorder %s44, %s46
    %p50 = scmp.eq.s32.totalorder %s15, 0
    %p51 = por %p49, %p50
    %p52 = scmp.ne.s32.totalorder %s44, %s46
    %p53 = scmp.eq.s32.totalorder %s20, 4
    %p54 = por %p52, %p53
    %p55 = scmp.ne.s32.totalorder %s46, %s47
    %p56 = scmp.eq.s32.totalorder %s20, 0
    %p57 = por %p55, %p56
    %p58 = scmp.ne.s32.totalorder %s46, %s47
    %p59 = scmp.eq.s32.totalorder %s21, 4
    %p60 = por %p58, %p59
    %p62 = scmp.ne.s32.totalorder %s47, %s61
    %p63 = scmp.eq.s32.totalorder %s21, 0
    %p64 = por %p62, %p63
    %s66 = sadd.s32 %s65, 1
    %p69 = scmp.eq.s32.totalorder %s15, 4
    %p70 = scmp.ne.s32.totalorder %s65, %s67
    %p71 = scmp.eq.s32.totalorder %s15, 0
    %p72 = por %p70, %p71
    %p73 = scmp.ne.s32.totalorder %s65, %s67
    %p74 = scmp.eq.s32.totalorder %s20, 4
    %p75 = por %p73, %p74
    %p76 = scmp.ne.s32.totalorder %s67, %s68
    %p77 = scmp.eq.s32.totalorder %s20, 0
    %p78 = por %p76, %p77
    %p79 = scmp.ne.s32.totalorder %s67, %s68
    %p80 = scmp.eq.s32.totalorder %s21, 4
    %p81 = por %p79, %p80
    %p83 = scmp.ne.s32.totalorder %s68, %s82
    %p84 = scmp.eq.s32.totalorder %s21, 0
    %p85 = por %p83, %p84
    %s86 = ssub.s32 %s15, %s22
    %p87 = scmp.eq.s32.totalorder %s86, 0
    %s89 = sadd.s32 %s88, 1
    %s90 = scalar_select %p87, %s88, %s89
    %p93 = pneg %p87
    %p94 = scmp.eq.s32.totalorder %s15, 4
    %p95 = por %p93, %p94
    %p96 = scmp.ne.s32.totalorder %s88, %s91
    %p97 = scmp.eq.s32.totalorder %s15, 0
    %p98 = por %p96, %p97
    %p99 = scmp.ne.s32.totalorder %s88, %s91
    %p100 = scmp.eq.s32.totalorder %s20, 4
    %p101 = por %p99, %p100
    %p102 = scmp.ne.s32.totalorder %s91, %s92
    %p103 = scmp.eq.s32.totalorder %s20, 0
    %p104 = por %p102, %p103
    %p105 = scmp.ne.s32.totalorder %s91, %s92
    %p106 = scmp.eq.s32.totalorder %s21, 4
    %p107 = por %p105, %p106
    %p109 = scmp.ne.s32.totalorder %s92, %s108
    %p110 = scmp.eq.s32.totalorder %s21, 0
    %p111 = por %p109, %p110
    %s112 = ssub.s32 %s15, %s22
    %p113 = scmp.eq.s32.totalorder %s112, 0
    %s115 = sadd.s32 %s114, 1
    %s116 = scalar_select %p113, %s114, %s115
    %p119 = pneg %p113
    %p120 = scmp.eq.s32.totalorder %s15, 4
    %p121 = por %p119, %p120
    %p122 = scmp.ne.s32.totalorder %s114, %s117
    %p123 = scmp.eq.s32.totalorder %s15, 0
    %p124 = por %p122, %p123
    %p125 = scmp.ne.s32.totalorder %s114, %s117
    %p126 = scmp.eq.s32.totalorder %s20, 4
    %p127 = por %p125, %p126
    %p128 = scmp.ne.s32.totalorder %s117, %s118
    %p129 = scmp.eq.s32.totalorder %s20, 0
    %p130 = por %p128, %p129
    %p131 = scmp.ne.s32.totalorder %s117, %s118
    %p132 = scmp.eq.s32.totalorder %s21, 4
    %p133 = por %p131, %p132
    %p135 = scmp.ne.s32.totalorder %s118, %s134
    %p136 = scmp.eq.s32.totalorder %s21, 0
    %p137 = por %p135, %p136
    %s138 = ssub.s32 %s15, %s22
    %p139 = scmp.eq.s32.totalorder %s138, 0
    %s141 = sadd.s32 %s140, 1
    %s142 = scalar_select %p139, %s140, %s141
    %p145 = pneg %p139
    %p146 = scmp.eq.s32.totalorder %s15, 4
    %p147 = por %p145, %p146
    %p148 = scmp.ne.s32.totalorder %s140, %s143
    %p149 = scmp.eq.s32.totalorder %s15, 0
    %p150 = por %p148, %p149
    %p151 = scmp.ne.s32.totalorder %s140, %s143
    %p152 = scmp.eq.s32.totalorder %s20, 4
    %p153 = por %p151, %p152
    %p154 = scmp.ne.s32.totalorder %s143, %s144
    %p155 = scmp.eq.s32.totalorder %s20, 0
    %p156 = por %p154, %p155
    %p157 = scmp.ne.s32.totalorder %s143, %s144
    %p158 = scmp.eq.s32.totalorder %s21, 4
    %p159 = por %p157, %p158
    %p161 = scmp.ne.s32.totalorder %s144, %s160
    %p162 = scmp.eq.s32.totalorder %s21, 0
    %p163 = por %p161, %p162
    %s164 = ssub.s32 %s15, %s22
    %p165 = scmp.eq.s32.totalorder %s164, 0
    %s167 = sadd.s32 %s166, 1
    %s168 = scalar_select %p165, %s166, %s167
    %p171 = pneg %p165
    %p172 = scmp.eq.s32.totalorder %s15, 4
    %p173 = por %p171, %p172
    %p174 = scmp.ne.s32.totalorder %s166, %s169
    %p175 = scmp.eq.s32.totalorder %s15, 0
    %p176 = por %p174, %p175
    %p177 = scmp.ne.s32.totalorder %s166, %s169
    %p178 = scmp.eq.s32.totalorder %s20, 4
    %p179 = por %p177, %p178
    %p180 = scmp.ne.s32.totalorder %s169, %s170
    %p181 = scmp.eq.s32.totalorder %s20, 0
    %p182 = por %p180, %p181
    %p183 = scmp.ne.s32.totalorder %s169, %s170
    %p184 = scmp.eq.s32.totalorder %s21, 4
    %p185 = por %p183, %p184
    %p187 = scmp.ne.s32.totalorder %s170, %s186
    %p188 = scmp.eq.s32.totalorder %s21, 0
    %p189 = por %p187, %p188
    %s190 = ssub.s32 %s15, %s22
    %p191 = scmp.eq.s32.totalorder %s190, 0
    %s193 = sadd.s32 %s192, 1
    %s194 = scalar_select %p191, %s192, %s193
    %p197 = pneg %p191
    %p198 = scmp.eq.s32.totalorder %s15, 4
    %p199 = por %p197, %p198
    %p200 = scmp.ne.s32.totalorder %s192, %s195
    %p201 = scmp.eq.s32.totalorder %s15, 0
    %p202 = por %p200, %p201
    %p203 = scmp.ne.s32.totalorder %s192, %s195
    %p204 = scmp.eq.s32.totalorder %s20, 4
    %p205 = por %p203, %p204
    %p206 = scmp.ne.s32.totalorder %s195, %s196
    %p207 = scmp.eq.s32.totalorder %s20, 0
    %p208 = por %p206, %p207
    %p209 = scmp.ne.s32.totalorder %s195, %s196
    %p210 = scmp.eq.s32.totalorder %s21, 4
    %p211 = por %p209, %p210
    %p213 = scmp.ne.s32.totalorder %s196, %s212
    %p214 = scmp.eq.s32.totalorder %s21, 0
    %p215 = por %p213, %p214
    %s216 = ssub.s32 %s15, %s22
    %p217 = scmp.eq.s32.totalorder %s216, 0
    %s219 = sadd.s32 %s218, 1
    %s220 = scalar_select %p217, %s218, %s219
    %p223 = pneg %p217
    %p224 = scmp.eq.s32.totalorder %s15, 4
    %p225 = por %p223, %p224
    %p226 = scmp.ne.s32.totalorder %s218, %s221
    %p227 = scmp.eq.s32.totalorder %s15, 0
    %p228 = por %p226, %p227
    %p229 = scmp.ne.s32.totalorder %s218, %s221
    %p230 = scmp.eq.s32.totalorder %s20, 4
    %p231 = por %p229, %p230
    %p232 = scmp.ne.s32.totalorder %s221, %s222
    %p233 = scmp.eq.s32.totalorder %s20, 0
    %p234 = por %p232, %p233
    %p235 = scmp.ne.s32.totalorder %s221, %s222
    %p236 = scmp.eq.s32.totalorder %s21, 4
    %p237 = por %p235, %p236
    %p239 = scmp.ne.s32.totalorder %s222, %s238
    %p240 = scmp.eq.s32.totalorder %s21, 0
    %p241 = por %p239, %p240
    %s243 = sadd.s32 %s242, 1
    %p246 = scmp.eq.s32.totalorder %s15, 4
    %p247 = scmp.ne.s32.totalorder %s242, %s244
    %p248 = scmp.eq.s32.totalorder %s15, 0
    %p249 = por %p247, %p248
    %p250 = scmp.ne.s32.totalorder %s242, %s244
    %p251 = scmp.eq.s32.totalorder %s20, 4
    %p252 = por %p250, %p251
    %p253 = scmp.ne.s32.totalorder %s244, %s245
    %p254 = scmp.eq.s32.totalorder %s20, 0
    %p255 = por %p253, %p254
    %p256 = scmp.ne.s32.totalorder %s244, %s245
    %p257 = scmp.eq.s32.totalorder %s21, 4
    %p258 = por %p256, %p257
    %p260 = scmp.ne.s32.totalorder %s245, %s259
    %p261 = scmp.eq.s32.totalorder %s21, 0
    %p262 = por %p260, %p261
    %p263 = scmp.le.s32.totalorder 1, %s15
    %p264 = scmp.lt.s32.totalorder %s15, 6
    %p265 = pnand %p263, %p264
    %p266 = pneg %p265
    // Predicated region
    $region9: #{pnagnn_forward.1} parent=5 // pred_check
      _
    $region10: #{pnagnn_forward.1} parent=5 // pred_check_branch
      %268 = sbr.rel (%p265) target = $region12
    $region11: #{pnagnn_forward.1} parent=5 // pred_region
      %s269 = ssub.s32 %s15, 1
      // Predicated region
      $region13: #{pnagnn_forward.1} parent=11 // pred_check
        %p270 = pneg %p36
      $region14: #{pnagnn_forward.1} parent=11 // pred_check_branch
        %272 = sbr.rel (%p270) target = $region16
      $region15: #{pnagnn_forward.1} parent=11 // pred_region
        _
      $region16: #{pnagnn_forward.1} parent=11 // pred_fallthru
        _
      // Predicated region
      $region17: #{pnagnn_forward.1} parent=11 // pred_check
        %p273 = pneg %p57
      $region18: #{pnagnn_forward.1} parent=11 // pred_check_branch
        %275 = sbr.rel (%p273) target = $region20
      $region19: #{pnagnn_forward.1} parent=11 // pred_region
        _
      $region20: #{pnagnn_forward.1} parent=11 // pred_fallthru
        _
      // Predicated region
      $region21: #{pnagnn_forward.1} parent=11 // pred_check
        %p276 = pneg %p78
      $region22: #{pnagnn_forward.1} parent=11 // pred_check_branch
        %278 = sbr.rel (%p276) target = $region24
      $region23: #{pnagnn_forward.1} parent=11 // pred_region
        _
      $region24: #{pnagnn_forward.1} parent=11 // pred_fallthru
        _
    $region12: #{pnagnn_forward.1} parent=5 // pred_fallthru
      _
    %p279 = scmp.lt.s32.totalorder %s15, 5
    // Predicated region
    $region25: #{pnagnn_forward.1} parent=5 // pred_check
      %p280 = pneg %p279
    $region26: #{pnagnn_forward.1} parent=5 // pred_check_branch
      %282 = sbr.rel (%p280) target = $region28
    $region27: #{pnagnn_forward.1} parent=5 // pred_region
      // Predicated region
      $region29: #{pnagnn_forward.1} parent=27 // pred_check
        %p283 = pneg %p98
      $region30: #{pnagnn_forward.1} parent=27 // pred_check_branch
        %285 = sbr.rel (%p283) target = $region32
      $region31: #{pnagnn_forward.1} parent=27 // pred_region
        %p286 = scmp.lt.s32.totalorder %s15, 4
        %s287 = scalar_select %p286, %s15, 4
        %s288 = smul.addr %s287, 4
        %s289 = smul.addr %s288, 4
        %s290 = scalar_lea.vmem %s3, %s289
      $region32: #{pnagnn_forward.1} parent=27 // pred_fallthru
        _
      // Predicated region
      $region33: #{pnagnn_forward.1} parent=27 // pred_check
        %p291 = pneg %p124
      $region34: #{pnagnn_forward.1} parent=27 // pred_check_branch
        %293 = sbr.rel (%p291) target = $region36
      $region35: #{pnagnn_forward.1} parent=27 // pred_region
        %p294 = scmp.lt.s32.totalorder %s15, 4
        %s295 = scalar_select %p294, %s15, 4
        %s296 = smul.addr %s295, 4
        %s297 = smul.addr %s296, 4
        %s298 = scalar_lea.vmem %s4, %s297
      $region36: #{pnagnn_forward.1} parent=27 // pred_fallthru
        _
      // Predicated region
      $region37: #{pnagnn_forward.1} parent=27 // pred_check
        %p299 = pneg %p150
      $region38: #{pnagnn_forward.1} parent=27 // pred_check_branch
        %301 = sbr.rel (%p299) target = $region40
      $region39: #{pnagnn_forward.1} parent=27 // pred_region
        %p302 = scmp.lt.s32.totalorder %s15, 4
        %s303 = scalar_select %p302, %s15, 4
        %s304 = smul.addr %s303, 4
        %s305 = smul.addr %s304, 8
        %s306 = scalar_lea.vmem %s5, %s305
      $region40: #{pnagnn_forward.1} parent=27 // pred_fallthru
        _
      // Predicated region
      $region41: #{pnagnn_forward.1} parent=27 // pred_check
        %p307 = pneg %p176
      $region42: #{pnagnn_forward.1} parent=27 // pred_check_branch
        %309 = sbr.rel (%p307) target = $region44
      $region43: #{pnagnn_forward.1} parent=27 // pred_region
        %p310 = scmp.lt.s32.totalorder %s15, 4
        %s311 = scalar_select %p310, %s15, 4
        %s312 = scalar_lea.vmem %s6, %s311
      $region44: #{pnagnn_forward.1} parent=27 // pred_fallthru
        _
      // Predicated region
      $region45: #{pnagnn_forward.1} parent=27 // pred_check
        %p313 = pneg %p202
      $region46: #{pnagnn_forward.1} parent=27 // pred_check_branch
        %315 = sbr.rel (%p313) target = $region48
      $region47: #{pnagnn_forward.1} parent=27 // pred_region
        %p316 = scmp.lt.s32.totalorder %s15, 4
        %s317 = scalar_select %p316, %s15, 4
        %s318 = smul.addr %s317, 20
        %s319 = smul.addr %s318, 8
        %s320 = scalar_lea.vmem %s7, %s319
      $region48: #{pnagnn_forward.1} parent=27 // pred_fallthru
        _
      // Predicated region
      $region49: #{pnagnn_forward.1} parent=27 // pred_check
        %p321 = pneg %p228
      $region50: #{pnagnn_forward.1} parent=27 // pred_check_branch
        %323 = sbr.rel (%p321) target = $region52
      $region51: #{pnagnn_forward.1} parent=27 // pred_region
        %p324 = scmp.lt.s32.totalorder %s15, 4
        %s325 = scalar_select %p324, %s15, 4
        %s326 = scalar_lea.vmem %s8, %s325
      $region52: #{pnagnn_forward.1} parent=27 // pred_fallthru
        _
    $region28: #{pnagnn_forward.1} parent=5 // pred_fallthru
      _
    %p327 = scmp.le.s32.totalorder 1, %s15
    %p328 = scmp.lt.s32.totalorder %s15, 6
    %p329 = pnand %p327, %p328
    %p330 = pneg %p329
    // Predicated region
    $region53: #{pnagnn_forward.1} parent=5 // pred_check
      _
    $region54: #{pnagnn_forward.1} parent=5 // pred_check_branch
      %332 = sbr.rel (%p329) target = $region56
    $region55: #{pnagnn_forward.1} parent=5 // pred_region
      %s333 = ssub.s32 %s15, 1
      %p334 = pneg %p36
      %p335 = pneg %p33
      %p336 = pneg %p57
      %p337 = pneg %p54
      %p338 = pneg %p78
      %p339 = pneg %p75
      %p340 = scmp.lt.s32.totalorder %s20, 4
      %s341 = scalar_select %p340, %s20, 4
      %s342 = smul.addr %s341, 4
      %s343 = smul.addr %s342, 4
      %s344 = scalar_lea.vmem %s3, %s343
      %p345 = pneg %p104
      %p346 = pneg %p101
      %p347 = scmp.lt.s32.totalorder %s20, 4
      %s348 = scalar_select %p347, %s20, 4
      %s349 = smul.addr %s348, 4
      %s350 = smul.addr %s349, 4
      %s351 = scalar_lea.vmem %s4, %s350
      %p352 = pneg %p130
      %p353 = pneg %p127
      %p354 = scmp.lt.s32.totalorder %s20, 4
      %s355 = scalar_select %p354, %s20, 4
      %s356 = smul.addr %s355, 4
      %s357 = smul.addr %s356, 8
      %s358 = scalar_lea.vmem %s5, %s357
      %p359 = pneg %p156
      %p360 = pneg %p153
      %p361 = scmp.lt.s32.totalorder %s20, 4
      %s362 = scalar_select %p361, %s20, 4
      %s363 = scalar_lea.vmem %s6, %s362
      %p364 = pneg %p182
      %p365 = pneg %p179
      %p366 = scmp.lt.s32.totalorder %s20, 4
      %s367 = scalar_select %p366, %s20, 4
      %s368 = smul.addr %s367, 20
      %s369 = smul.addr %s368, 8
      %s370 = scalar_lea.vmem %s7, %s369
      %p371 = pneg %p208
      %p372 = pneg %p205
      %p373 = scmp.lt.s32.totalorder %s20, 4
      %s374 = scalar_select %p373, %s20, 4
      %s375 = scalar_lea.vmem %s8, %s374
      %p376 = pneg %p234
      %p377 = pneg %p231
      %p378 = pneg %p255
      %p379 = pneg %p252
      %p380 = scmp.lt.s32.totalorder %s20, 4
      %s381 = scalar_select %p380, %s20, 4
      %s382 = smul.addr %s381, 4
      %s383 = smul.addr %s382, 4
      %s384 = scalar_lea.vmem %s3, %s383
      %p385 = scmp.lt.s32.totalorder %s20, 4
      %s386 = scalar_select %p385, %s20, 4
      %s387 = smul.addr %s386, 4
      %s388 = smul.addr %s387, 4
      %s389 = scalar_lea.vmem %s4, %s388
      %p390 = scmp.lt.s32.totalorder %s20, 4
      %s391 = scalar_select %p390, %s20, 4
      %s392 = smul.addr %s391, 4
      %s393 = smul.addr %s392, 8
      %s394 = scalar_lea.vmem %s5, %s393
      %p395 = scmp.lt.s32.totalorder %s20, 4
      %s396 = scalar_select %p395, %s20, 4
      %s397 = scalar_lea.vmem %s6, %s396
      %p398 = scmp.lt.s32.totalorder %s20, 4
      %s399 = scalar_select %p398, %s20, 4
      %s400 = smul.addr %s399, 20
      %s401 = smul.addr %s400, 8
      %s402 = scalar_lea.vmem %s7, %s401
      %p403 = scmp.lt.s32.totalorder %s20, 4
      %s404 = scalar_select %p403, %s20, 4
      %s405 = scalar_lea.vmem %s8, %s404
      %p407 = scmp.eq.s32.totalorder %s20, 0
      // Predicated region
      $region57: #{pnagnn_forward.1} parent=55 // pred_check
        %p408 = pneg %p407
      $region58: #{pnagnn_forward.1} parent=55 // pred_check_branch
        %410 = sbr.rel (%p408) target = $region60
      $region59: #{pnagnn_forward.1} parent=55 // pred_region
        %v411 = vld [vmem:[%s0] sm:$0xff]
        %v412 = vld [vmem:[%s0 + $0x8] sm:$0xff]
        %v413 = vld [vmem:[%s0 + $0x10] sm:$0xff]
        %v414 = vld [vmem:[%s0 + $0x18] sm:$0xff]
        %v415 = vld [vmem:[%s0 + $0x20] sm:$0xff]
        %v416 = vld [vmem:[%s0 + $0x28] sm:$0xff]
        %v417 = vld [vmem:[%s0 + $0x30] sm:$0xff]
        %v418 = vld [vmem:[%s0 + $0x38] sm:$0xff]
        %vm419 = vcmask 261120
        %420 = vst.msk [vmem:[%s9] sm:$0xff] %vm419, %v411
        %421 = vst.msk [vmem:[%s9 + $0x8] sm:$0xff] %vm419, %v412
        %422 = vst.msk [vmem:[%s9 + $0x10] sm:$0xff] %vm419, %v413
        %423 = vst.msk [vmem:[%s9 + $0x18] sm:$0xff] %vm419, %v414
        %424 = vst.msk [vmem:[%s9 + $0x20] sm:$0xff] %vm419, %v415
        %425 = vst.msk [vmem:[%s9 + $0x28] sm:$0xff] %vm419, %v416
        %426 = vst.msk [vmem:[%s9 + $0x30] sm:$0xff] %vm419, %v417
        %427 = vst.msk [vmem:[%s9 + $0x38] sm:$0xff] %vm419, %v418
      $region60: #{pnagnn_forward.1} parent=55 // pred_fallthru
        _
      %v428 = vld [vmem:[%s9] sm:$0xff]
      %v429 = vld [vmem:[%s9 + $0x8] sm:$0xff]
      %v430 = vld [vmem:[%s9 + $0x10] sm:$0xff]
      %v431 = vld [vmem:[%s9 + $0x18] sm:$0xff]
      %v432 = vld [vmem:[%s9 + $0x20] sm:$0xff]
      %v433 = vld [vmem:[%s9 + $0x28] sm:$0xff]
      %v434 = vld [vmem:[%s9 + $0x30] sm:$0xff]
      %v435 = vld [vmem:[%s9 + $0x38] sm:$0xff]
      %v436 = vld [vmem:[%s394] sm:$0xff]
      %v437 = vld [vmem:[%s394 + $0x8] sm:$0xff]
      %v438 = vld [vmem:[%s394 + $0x10] sm:$0xff]
      %v439 = vld [vmem:[%s394 + $0x18] sm:$0xff]
      %v440 = vld [vmem:[%s397] sm:$0x1]
      %v442 = vperm.slane %v440, 0
      %vm444 = vcmask 261120
      %v446 = vsel %vm444, %v428, 0
      %v449 = vsel %vm444, %v429, 0
      %v452 = vsel %vm444, %v430, 0
      %v455 = vsel %vm444, %v431, 0
      %v458 = vsel %vm444, %v432, 0
      %v461 = vsel %vm444, %v433, 0
      %v464 = vsel %vm444, %v434, 0
      %v467 = vsel %vm444, %v435, 0
      %469 = vmatpush.msra.mxu0 0.0
      %470 = vmatpush.msra.mxu0 0.0
      %471 = vmatpush.msra.mxu0 0.0
      %472 = vmatpush.msra.mxu0 0.0
      %473 = vmatpush.msra.mxu0 0.0
      %474 = vmatpush.msra.mxu0 0.0
      %475 = vmatpush.msra.mxu0 0.0
      %476 = vmatpush.msra.mxu0 0.0
      %477 = vmatpush.msra.mxu0 0.0
      %478 = vmatpush.msra.mxu0 0.0
      %479 = vmatpush.msra.mxu0 0.0
      %480 = vmatpush.msra.mxu0 0.0
      %481 = vmatpush.msra.mxu0 %v439
      %482 = vmatpush.msra.mxu0 %v438
      %483 = vmatpush.msra.mxu0 %v437
      %484 = vmatpush.msra.mxu0 %v436
      %485 = vmatmul.f32.gmra.mxu0 %v446
      %v486 = vpop.f32.mrf.mxu0
      %v487 = vadd.f32 %v442, %v486
      %488 = vmatmul.f32.gmra.mxu0 %v449
      %v489 = vpop.f32.mrf.mxu0
      %v490 = vadd.f32 %v442, %v489
      %491 = vmatmul.f32.gmra.mxu0 %v452
      %v492 = vpop.f32.mrf.mxu0
      %v493 = vadd.f32 %v442, %v492
      %494 = vmatmul.f32.gmra.mxu0 %v455
      %v495 = vpop.f32.mrf.mxu0
      %v496 = vadd.f32 %v442, %v495
      %497 = vmatmul.f32.gmra.mxu0 %v458
      %v498 = vpop.f32.mrf.mxu0
      %v499 = vadd.f32 %v442, %v498
      %500 = vmatmul.f32.gmra.mxu0 %v461
      %v501 = vpop.f32.mrf.mxu0
      %v502 = vadd.f32 %v442, %v501
      %503 = vmatmul.f32.gmra.mxu0 %v464
      %v504 = vpop.f32.mrf.mxu0
      %v505 = vadd.f32 %v442, %v504
      %506 = vmatmul.f32.gmra.mxu0 %v467
      %v507 = vpop.f32.mrf.mxu0
      %v508 = vadd.f32 %v442, %v507
      %509 = vdwg.mxu0
      %v510 = vpack.c.bf16 %v429, %v428
      %v511 = vpack.c.bf16 %v431, %v430
      %v512 = vpack.c.bf16 %v433, %v432
      %v513 = vpack.c.bf16 %v435, %v434
      %v514 = vld [vmem:[%s384] sm:$0xf]
      %v515 = vld [vmem:[%s384 + $0x4] sm:$0xf]
      %v516 = vld [vmem:[%s384 + $0x8] sm:$0xf]
      %v517 = vld [vmem:[%s384 + $0xc] sm:$0xf]
      %v522 = vunpack.c.l.b16 %v514
      %v523 = vunpack.c.l.b16 %v515
      %v524 = vunpack.c.l.b16 %v516
      %v525 = vunpack.c.l.b16 %v517
      %v526 = vpack.c.b16 %v523, %v522
      %v527 = vpack.c.b16 %v525, %v524
      %v531 = vsel %vm444, %v510, 0
      %v534 = vsel %vm444, %v511, 0
      %v537 = vsel %vm444, %v512, 0
      %v540 = vsel %vm444, %v513, 0
      %542 = vmatpush.bf16.msra.mxu0 0
      %543 = vmatpush.bf16.msra.mxu0 0
      %544 = vmatpush.bf16.msra.mxu0 0
      %545 = vmatpush.bf16.msra.mxu0 0
      %546 = vmatpush.bf16.msra.mxu0 0
      %547 = vmatpush.bf16.msra.mxu0 0
      %548 = vmatpush.bf16.msra.mxu0 %v527
      %549 = vmatpush.bf16.msra.mxu0 %v526
      %550 = vmatmul.bf16.gmra.mxu0 %v531
      %v551 = vpop.f32.mrf.mxu0
      %v552 = vadd.f32 0.0, %v551
      %v553 = vpop.f32.mrf.mxu0
      %v554 = vadd.f32 0.0, %v553
      %555 = vmatmul.bf16.gmra.mxu0 %v534
      %v556 = vpop.f32.mrf.mxu0
      %v557 = vadd.f32 0.0, %v556
      %v558 = vpop.f32.mrf.mxu0
      %v559 = vadd.f32 0.0, %v558
      %560 = vmatmul.bf16.gmra.mxu0 %v537
      %v561 = vpop.f32.mrf.mxu0
      %v562 = vadd.f32 0.0, %v561
      %v563 = vpop.f32.mrf.mxu0
      %v564 = vadd.f32 0.0, %v563
      %565 = vmatmul.bf16.gmra.mxu0 %v540
      %v566 = vpop.f32.mrf.mxu0
      %v567 = vadd.f32 0.0, %v566
      %v568 = vpop.f32.mrf.mxu0
      %v569 = vadd.f32 0.0, %v568
      %570 = vdwg.mxu0
      %v571 = vld [vmem:[%s1] sm:$0xf]
      %v572 = vld [vmem:[%s1 + $0x4] sm:$0xf]
      %v573 = vld [vmem:[%s1 + $0x8] sm:$0xf]
      %v574 = vld [vmem:[%s1 + $0xc] sm:$0xf]
      %v575 = vld [vmem:[%s1 + $0x10] sm:$0xf]
      %v576 = vld [vmem:[%s1 + $0x14] sm:$0xf]
      %v577 = vld [vmem:[%s1 + $0x18] sm:$0xf]
      %v578 = vld [vmem:[%s1 + $0x1c] sm:$0xf]
      %v579 = vld [vmem:[%s1 + $0x20] sm:$0xf]
      %v580 = vld [vmem:[%s1 + $0x24] sm:$0xf]
      %v581 = vld [vmem:[%s1 + $0x28] sm:$0xf]
      %v582 = vld [vmem:[%s1 + $0x2c] sm:$0xf]
      %v583 = vld [vmem:[%s1 + $0x30] sm:$0xf]
      %v584 = vld [vmem:[%s1 + $0x34] sm:$0xf]
      %v585 = vld [vmem:[%s1 + $0x38] sm:$0xf]
      %v586 = vld [vmem:[%s1 + $0x3c] sm:$0xf]
      %v587 = vld [vmem:[%s1 + $0x40] sm:$0xf]
      %v588 = vld [vmem:[%s1 + $0x44] sm:$0xf]
      %v589 = vld [vmem:[%s1 + $0x48] sm:$0xf]
      %v590 = vld [vmem:[%s1 + $0x4c] sm:$0xf]
      %v591 = vld [vmem:[%s1 + $0x50] sm:$0xf]
      %v592 = vld [vmem:[%s1 + $0x54] sm:$0xf]
      %v593 = vld [vmem:[%s1 + $0x58] sm:$0xf]
      %v594 = vld [vmem:[%s1 + $0x5c] sm:$0xf]
      %v595 = vld [vmem:[%s1 + $0x60] sm:$0xf]
      %v596 = vld [vmem:[%s1 + $0x64] sm:$0xf]
      %v597 = vld [vmem:[%s1 + $0x68] sm:$0xf]
      %v598 = vld [vmem:[%s1 + $0x6c] sm:$0xf]
      %v599 = vld [vmem:[%s1 + $0x70] sm:$0xf]
      %v600 = vld [vmem:[%s1 + $0x74] sm:$0xf]
      %v601 = vld [vmem:[%s1 + $0x78] sm:$0xf]
      %v602 = vld [vmem:[%s1 + $0x7c] sm:$0xf]
      %v603 = vld [vmem:[%s1 + $0x80] sm:$0xf]
      %v604 = vld [vmem:[%s1 + $0x84] sm:$0xf]
      %v605 = vld [vmem:[%s1 + $0x88] sm:$0xf]
      %v606 = vld [vmem:[%s1 + $0x8c] sm:$0xf]
      %v607 = vld [vmem:[%s1 + $0x90] sm:$0xf]
      %v608 = vld [vmem:[%s1 + $0x94] sm:$0xf]
      %v609 = vld [vmem:[%s1 + $0x98] sm:$0xf]
      %v610 = vld [vmem:[%s1 + $0x9c] sm:$0xf]
      %v611 = vld [vmem:[%s1 + $0xa0] sm:$0xf]
      %v612 = vld [vmem:[%s1 + $0xa4] sm:$0xf]
      %v613 = vld [vmem:[%s1 + $0xa8] sm:$0xf]
      %v614 = vld [vmem:[%s1 + $0xac] sm:$0xf]
      %v615 = vld [vmem:[%s1 + $0xb0] sm:$0xf]
      %v616 = vld [vmem:[%s1 + $0xb4] sm:$0xf]
      %v617 = vld [vmem:[%s1 + $0xb8] sm:$0xf]
      %v618 = vld [vmem:[%s1 + $0xbc] sm:$0xf]
      %v619 = vld [vmem:[%s1 + $0xc0] sm:$0xf]
      %v620 = vld [vmem:[%s1 + $0xc4] sm:$0xf]
      %v621 = vld [vmem:[%s1 + $0xc8] sm:$0xf]
      %v622 = vld [vmem:[%s1 + $0xcc] sm:$0xf]
      %v623 = vld [vmem:[%s1 + $0xd0] sm:$0xf]
      %v624 = vld [vmem:[%s1 + $0xd4] sm:$0xf]
      %v625 = vld [vmem:[%s1 + $0xd8] sm:$0xf]
      %v626 = vld [vmem:[%s1 + $0xdc] sm:$0xf]
      %v627 = vld [vmem:[%s1 + $0xe0] sm:$0xf]
      %v628 = vld [vmem:[%s1 + $0xe4] sm:$0xf]
      %v629 = vld [vmem:[%s1 + $0xe8] sm:$0xf]
      %v630 = vld [vmem:[%s1 + $0xec] sm:$0xf]
      %v631 = vld [vmem:[%s1 + $0xf0] sm:$0xf]
      %v632 = vld [vmem:[%s1 + $0xf4] sm:$0xf]
      %v633 = vld [vmem:[%s1 + $0xf8] sm:$0xf]
      %v634 = vld [vmem:[%s1 + $0xfc] sm:$0xf]
      %v635 = vpack.c.bf16 %v554, %v552
      %v636 = vpack.c.bf16 %v559, %v557
      %v637 = vpack.c.bf16 %v564, %v562
      %v638 = vpack.c.bf16 %v569, %v567
      %v639 = vld [vmem:[%s2] sm:$0xf]
      %v640 = vld [vmem:[%s2 + $0x4] sm:$0xf]
      %v641 = vld [vmem:[%s2 + $0x8] sm:$0xf]
      %v642 = vld [vmem:[%s2 + $0xc] sm:$0xf]
      %v643 = vld [vmem:[%s2 + $0x10] sm:$0xf]
      %v644 = vld [vmem:[%s2 + $0x14] sm:$0xf]
      %v645 = vld [vmem:[%s2 + $0x18] sm:$0xf]
      %v646 = vld [vmem:[%s2 + $0x1c] sm:$0xf]
      %v647 = vld [vmem:[%s2 + $0x20] sm:$0xf]
      %v648 = vld [vmem:[%s2 + $0x24] sm:$0xf]
      %v649 = vld [vmem:[%s2 + $0x28] sm:$0xf]
      %v650 = vld [vmem:[%s2 + $0x2c] sm:$0xf]
      %v651 = vld [vmem:[%s2 + $0x30] sm:$0xf]
      %v652 = vld [vmem:[%s2 + $0x34] sm:$0xf]
      %v653 = vld [vmem:[%s2 + $0x38] sm:$0xf]
      %v654 = vld [vmem:[%s2 + $0x3c] sm:$0xf]
      %v655 = vld [vmem:[%s2 + $0x40] sm:$0xf]
      %v656 = vld [vmem:[%s2 + $0x44] sm:$0xf]
      %v657 = vld [vmem:[%s2 + $0x48] sm:$0xf]
      %v658 = vld [vmem:[%s2 + $0x4c] sm:$0xf]
      %v659 = vld [vmem:[%s2 + $0x50] sm:$0xf]
      %v660 = vld [vmem:[%s2 + $0x54] sm:$0xf]
      %v661 = vld [vmem:[%s2 + $0x58] sm:$0xf]
      %v662 = vld [vmem:[%s2 + $0x5c] sm:$0xf]
      %v663 = vld [vmem:[%s2 + $0x60] sm:$0xf]
      %v664 = vld [vmem:[%s2 + $0x64] sm:$0xf]
      %v665 = vld [vmem:[%s2 + $0x68] sm:$0xf]
      %v666 = vld [vmem:[%s2 + $0x6c] sm:$0xf]
      %v667 = vld [vmem:[%s2 + $0x70] sm:$0xf]
      %v668 = vld [vmem:[%s2 + $0x74] sm:$0xf]
      %v669 = vld [vmem:[%s2 + $0x78] sm:$0xf]
      %v670 = vld [vmem:[%s2 + $0x7c] sm:$0xf]
      %v671 = vld [vmem:[%s2 + $0x80] sm:$0xf]
      %v672 = vld [vmem:[%s2 + $0x84] sm:$0xf]
      %v673 = vld [vmem:[%s2 + $0x88] sm:$0xf]
      %v674 = vld [vmem:[%s2 + $0x8c] sm:$0xf]
      %v675 = vld [vmem:[%s2 + $0x90] sm:$0xf]
      %v676 = vld [vmem:[%s2 + $0x94] sm:$0xf]
      %v677 = vld [vmem:[%s2 + $0x98] sm:$0xf]
      %v678 = vld [vmem:[%s2 + $0x9c] sm:$0xf]
      %v679 = vld [vmem:[%s2 + $0xa0] sm:$0xf]
      %v680 = vld [vmem:[%s2 + $0xa4] sm:$0xf]
      %v681 = vld [vmem:[%s2 + $0xa8] sm:$0xf]
      %v682 = vld [vmem:[%s2 + $0xac] sm:$0xf]
      %v683 = vld [vmem:[%s2 + $0xb0] sm:$0xf]
      %v684 = vld [vmem:[%s2 + $0xb4] sm:$0xf]
      %v685 = vld [vmem:[%s2 + $0xb8] sm:$0xf]
      %v686 = vld [vmem:[%s2 + $0xbc] sm:$0xf]
      %v687 = vld [vmem:[%s2 + $0xc0] sm:$0xf]
      %v688 = vld [vmem:[%s2 + $0xc4] sm:$0xf]
      %v689 = vld [vmem:[%s2 + $0xc8] sm:$0xf]
      %v690 = vld [vmem:[%s2 + $0xcc] sm:$0xf]
      %v691 = vld [vmem:[%s2 + $0xd0] sm:$0xf]
      %v692 = vld [vmem:[%s2 + $0xd4] sm:$0xf]
      %v693 = vld [vmem:[%s2 + $0xd8] sm:$0xf]
      %v694 = vld [vmem:[%s2 + $0xdc] sm:$0xf]
      %v695 = vld [vmem:[%s2 + $0xe0] sm:$0xf]
      %v696 = vld [vmem:[%s2 + $0xe4] sm:$0xf]
      %v697 = vld [vmem:[%s2 + $0xe8] sm:$0xf]
      %v698 = vld [vmem:[%s2 + $0xec] sm:$0xf]
      %v699 = vld [vmem:[%s2 + $0xf0] sm:$0xf]
      %v700 = vld [vmem:[%s2 + $0xf4] sm:$0xf]
      %v701 = vld [vmem:[%s2 + $0xf8] sm:$0xf]
      %v702 = vld [vmem:[%s2 + $0xfc] sm:$0xf]
      %v703 = vld [vmem:[%s389] sm:$0xf]
      %v704 = vld [vmem:[%s389 + $0x4] sm:$0xf]
      %v705 = vld [vmem:[%s389 + $0x8] sm:$0xf]
      %v706 = vld [vmem:[%s389 + $0xc] sm:$0xf]
      %v771 = vunpack.c.l.b16 %v639
      %v772 = vunpack.c.l.b16 %v640
      %v773 = vunpack.c.l.b16 %v641
      %v774 = vunpack.c.l.b16 %v642
      %v775 = vunpack.c.l.b16 %v643
      %v776 = vunpack.c.l.b16 %v644
      %v777 = vunpack.c.l.b16 %v645
      %v778 = vunpack.c.l.b16 %v646
      %v779 = vunpack.c.l.b16 %v647
      %v780 = vunpack.c.l.b16 %v648
      %v781 = vunpack.c.l.b16 %v649
      %v782 = vunpack.c.l.b16 %v650
      %v783 = vunpack.c.l.b16 %v651
      %v784 = vunpack.c.l.b16 %v652
      %v785 = vunpack.c.l.b16 %v653
      %v786 = vunpack.c.l.b16 %v654
      %v787 = vunpack.c.l.b16 %v655
      %v788 = vunpack.c.l.b16 %v656
      %v789 = vunpack.c.l.b16 %v657
      %v790 = vunpack.c.l.b16 %v658
      %v791 = vunpack.c.l.b16 %v659
      %v792 = vunpack.c.l.b16 %v660
      %v793 = vunpack.c.l.b16 %v661
      %v794 = vunpack.c.l.b16 %v662
      %v795 = vunpack.c.l.b16 %v663
      %v796 = vunpack.c.l.b16 %v664
      %v797 = vunpack.c.l.b16 %v665
      %v798 = vunpack.c.l.b16 %v666
      %v799 = vunpack.c.l.b16 %v667
      %v800 = vunpack.c.l.b16 %v668
      %v801 = vunpack.c.l.b16 %v669
      %v802 = vunpack.c.l.b16 %v670
      %v803 = vunpack.c.l.b16 %v671
      %v804 = vunpack.c.l.b16 %v672
      %v805 = vunpack.c.l.b16 %v673
      %v806 = vunpack.c.l.b16 %v674
      %v807 = vunpack.c.l.b16 %v675
      %v808 = vunpack.c.l.b16 %v676
      %v809 = vunpack.c.l.b16 %v677
      %v810 = vunpack.c.l.b16 %v678
      %v811 = vunpack.c.l.b16 %v679
      %v812 = vunpack.c.l.b16 %v680
      %v813 = vunpack.c.l.b16 %v681
      %v814 = vunpack.c.l.b16 %v682
      %v815 = vunpack.c.l.b16 %v683
      %v816 = vunpack.c.l.b16 %v684
      %v817 = vunpack.c.l.b16 %v685
      %v818 = vunpack.c.l.b16 %v686
      %v819 = vunpack.c.l.b16 %v687
      %v820 = vunpack.c.l.b16 %v688
      %v821 = vunpack.c.l.b16 %v689
      %v822 = vunpack.c.l.b16 %v690
      %v823 = vunpack.c.l.b16 %v691
      %v824 = vunpack.c.l.b16 %v692
      %v825 = vunpack.c.l.b16 %v693
      %v826 = vunpack.c.l.b16 %v694
      %v827 = vunpack.c.l.b16 %v695
      %v828 = vunpack.c.l.b16 %v696
      %v829 = vunpack.c.l.b16 %v697
      %v830 = vunpack.c.l.b16 %v698
      %v831 = vunpack.c.l.b16 %v699
      %v832 = vunpack.c.l.b16 %v700
      %v833 = vunpack.c.l.b16 %v701
      %v834 = vunpack.c.l.b16 %v702
      %v835 = vpack.c.b16 %v772, %v771
      %v836 = vpack.c.b16 %v774, %v773
      %v837 = vpack.c.b16 %v776, %v775
      %v838 = vpack.c.b16 %v778, %v777
      %v839 = vpack.c.b16 %v780, %v779
      %v840 = vpack.c.b16 %v782, %v781
      %v841 = vpack.c.b16 %v784, %v783
      %v842 = vpack.c.b16 %v786, %v785
      %v843 = vpack.c.b16 %v788, %v787
      %v844 = vpack.c.b16 %v790, %v789
      %v845 = vpack.c.b16 %v792, %v791
      %v846 = vpack.c.b16 %v794, %v793
      %v847 = vpack.c.b16 %v796, %v795
      %v848 = vpack.c.b16 %v798, %v797
      %v849 = vpack.c.b16 %v800, %v799
      %v850 = vpack.c.b16 %v802, %v801
      %v851 = vpack.c.b16 %v804, %v803
      %v852 = vpack.c.b16 %v806, %v805
      %v853 = vpack.c.b16 %v808, %v807
      %v854 = vpack.c.b16 %v810, %v809
      %v855 = vpack.c.b16 %v812, %v811
      %v856 = vpack.c.b16 %v814, %v813
      %v857 = vpack.c.b16 %v816, %v815
      %v858 = vpack.c.b16 %v818, %v817
      %v859 = vpack.c.b16 %v820, %v819
      %v860 = vpack.c.b16 %v822, %v821
      %v861 = vpack.c.b16 %v824, %v823
      %v862 = vpack.c.b16 %v826, %v825
      %v863 = vpack.c.b16 %v828, %v827
      %v864 = vpack.c.b16 %v830, %v829
      %v865 = vpack.c.b16 %v832, %v831
      %v866 = vpack.c.b16 %v834, %v833
      %v871 = vunpack.c.l.b16 %v703
      %v872 = vunpack.c.l.b16 %v704
      %v873 = vunpack.c.l.b16 %v705
      %v874 = vunpack.c.l.b16 %v706
      %v875 = vpack.c.b16 %v872, %v871
      %v876 = vpack.c.b16 %v874, %v873
      %v880 = vsel %vm444, %v835, 0
      %v883 = vsel %vm444, %v836, 0
      %v886 = vsel %vm444, %v837, 0
      %v889 = vsel %vm444, %v838, 0
      %v892 = vsel %vm444, %v839, 0
      %v895 = vsel %vm444, %v840, 0
      %v898 = vsel %vm444, %v841, 0
      %v901 = vsel %vm444, %v842, 0
      %v904 = vsel %vm444, %v843, 0
      %v907 = vsel %vm444, %v844, 0
      %v910 = vsel %vm444, %v845, 0
      %v913 = vsel %vm444, %v846, 0
      %v916 = vsel %vm444, %v847, 0
      %v919 = vsel %vm444, %v848, 0
      %v922 = vsel %vm444, %v849, 0
      %v925 = vsel %vm444, %v850, 0
      %v928 = vsel %vm444, %v851, 0
      %v931 = vsel %vm444, %v852, 0
      %v934 = vsel %vm444, %v853, 0
      %v937 = vsel %vm444, %v854, 0
      %v940 = vsel %vm444, %v855, 0
      %v943 = vsel %vm444, %v856, 0
      %v946 = vsel %vm444, %v857, 0
      %v949 = vsel %vm444, %v858, 0
      %v952 = vsel %vm444, %v859, 0
      %v955 = vsel %vm444, %v860, 0
      %v958 = vsel %vm444, %v861, 0
      %v961 = vsel %vm444, %v862, 0
      %v964 = vsel %vm444, %v863, 0
      %v967 = vsel %vm444, %v864, 0
      %v970 = vsel %vm444, %v865, 0
      %v973 = vsel %vm444, %v866, 0
      %975 = vmatpush.bf16.msra.mxu0 0
      %976 = vmatpush.bf16.msra.mxu0 0
      %977 = vmatpush.bf16.msra.mxu0 0
      %978 = vmatpush.bf16.msra.mxu0 0
      %979 = vmatpush.bf16.msra.mxu0 0
      %980 = vmatpush.bf16.msra.mxu0 0
      %981 = vmatpush.bf16.msra.mxu0 %v876
      %982 = vmatpush.bf16.msra.mxu0 %v875
      %983 = vmatmul.bf16.gmra.mxu0 %v880
      %v984 = vpop.f32.mrf.mxu0
      %v985 = vadd.f32 0.0, %v984
      %v986 = vpop.f32.mrf.mxu0
      %v987 = vadd.f32 0.0, %v986
      %988 = vmatmul.bf16.gmra.mxu0 %v883
      %v989 = vpop.f32.mrf.mxu0
      %v990 = vadd.f32 0.0, %v989
      %v991 = vpop.f32.mrf.mxu0
      %v992 = vadd.f32 0.0, %v991
      %993 = vmatmul.bf16.gmra.mxu0 %v886
      %v994 = vpop.f32.mrf.mxu0
      %v995 = vadd.f32 0.0, %v994
      %v996 = vpop.f32.mrf.mxu0
      %v997 = vadd.f32 0.0, %v996
      %998 = vmatmul.bf16.gmra.mxu0 %v889
      %v999 = vpop.f32.mrf.mxu0
      %v1000 = vadd.f32 0.0, %v999
      %v1001 = vpop.f32.mrf.mxu0
      %v1002 = vadd.f32 0.0, %v1001
      %1003 = vmatmul.bf16.gmra.mxu0 %v892
      %v1004 = vpop.f32.mrf.mxu0
      %v1005 = vadd.f32 0.0, %v1004
      %v1006 = vpop.f32.mrf.mxu0
      %v1007 = vadd.f32 0.0, %v1006
      %1008 = vmatmul.bf16.gmra.mxu0 %v895
      %v1009 = vpop.f32.mrf.mxu0
      %v1010 = vadd.f32 0.0, %v1009
      %v1011 = vpop.f32.mrf.mxu0
      %v1012 = vadd.f32 0.0, %v1011
      %1013 = vmatmul.bf16.gmra.mxu0 %v898
      %v1014 = vpop.f32.mrf.mxu0
      %v1015 = vadd.f32 0.0, %v1014
      %v1016 = vpop.f32.mrf.mxu0
      %v1017 = vadd.f32 0.0, %v1016
      %1018 = vmatmul.bf16.gmra.mxu0 %v901
      %v1019 = vpop.f32.mrf.mxu0
      %v1020 = vadd.f32 0.0, %v1019
      %v1021 = vpop.f32.mrf.mxu0
      %v1022 = vadd.f32 0.0, %v1021
      %1023 = vmatmul.bf16.gmra.mxu0 %v904
      %v1024 = vpop.f32.mrf.mxu0
      %v1025 = vadd.f32 0.0, %v1024
      %v1026 = vpop.f32.mrf.mxu0
      %v1027 = vadd.f32 0.0, %v1026
      %1028 = vmatmul.bf16.gmra.mxu0 %v907
      %v1029 = vpop.f32.mrf.mxu0
      %v1030 = vadd.f32 0.0, %v1029
      %v1031 = vpop.f32.mrf.mxu0
      %v1032 = vadd.f32 0.0, %v1031
      %1033 = vmatmul.bf16.gmra.mxu0 %v910
      %v1034 = vpop.f32.mrf.mxu0
      %v1035 = vadd.f32 0.0, %v1034
      %v1036 = vpop.f32.mrf.mxu0
      %v1037 = vadd.f32 0.0, %v1036
      %1038 = vmatmul.bf16.gmra.mxu0 %v913
      %v1039 = vpop.f32.mrf.mxu0
      %v1040 = vadd.f32 0.0, %v1039
      %v1041 = vpop.f32.mrf.mxu0
      %v1042 = vadd.f32 0.0, %v1041
      %1043 = vmatmul.bf16.gmra.mxu0 %v916
      %v1044 = vpop.f32.mrf.mxu0
      %v1045 = vadd.f32 0.0, %v1044
      %v1046 = vpop.f32.mrf.mxu0
      %v1047 = vadd.f32 0.0, %v1046
      %1048 = vmatmul.bf16.gmra.mxu0 %v919
      %v1049 = vpop.f32.mrf.mxu0
      %v1050 = vadd.f32 0.0, %v1049
      %v1051 = vpop.f32.mrf.mxu0
      %v1052 = vadd.f32 0.0, %v1051
      %1053 = vmatmul.bf16.gmra.mxu0 %v922
      %v1054 = vpop.f32.mrf.mxu0
      %v1055 = vadd.f32 0.0, %v1054
      %v1056 = vpop.f32.mrf.mxu0
      %v1057 = vadd.f32 0.0, %v1056
      %1058 = vmatmul.bf16.gmra.mxu0 %v925
      %v1059 = vpop.f32.mrf.mxu0
      %v1060 = vadd.f32 0.0, %v1059
      %v1061 = vpop.f32.mrf.mxu0
      %v1062 = vadd.f32 0.0, %v1061
      %1063 = vmatmul.bf16.gmra.mxu0 %v928
      %v1064 = vpop.f32.mrf.mxu0
      %v1065 = vadd.f32 0.0, %v1064
      %v1066 = vpop.f32.mrf.mxu0
      %v1067 = vadd.f32 0.0, %v1066
      %1068 = vmatmul.bf16.gmra.mxu0 %v931
      %v1069 = vpop.f32.mrf.mxu0
      %v1070 = vadd.f32 0.0, %v1069
      %v1071 = vpop.f32.mrf.mxu0
      %v1072 = vadd.f32 0.0, %v1071
      %1073 = vmatmul.bf16.gmra.mxu0 %v934
      %v1074 = vpop.f32.mrf.mxu0
      %v1075 = vadd.f32 0.0, %v1074
      %v1076 = vpop.f32.mrf.mxu0
      %v1077 = vadd.f32 0.0, %v1076
      %1078 = vmatmul.bf16.gmra.mxu0 %v937
      %v1079 = vpop.f32.mrf.mxu0
      %v1080 = vadd.f32 0.0, %v1079
      %v1081 = vpop.f32.mrf.mxu0
      %v1082 = vadd.f32 0.0, %v1081
      %1083 = vmatmul.bf16.gmra.mxu0 %v940
      %v1084 = vpop.f32.mrf.mxu0
      %v1085 = vadd.f32 0.0, %v1084
      %v1086 = vpop.f32.mrf.mxu0
      %v1087 = vadd.f32 0.0, %v1086
      %1088 = vmatmul.bf16.gmra.mxu0 %v943
      %v1089 = vpop.f32.mrf.mxu0
      %v1090 = vadd.f32 0.0, %v1089
      %v1091 = vpop.f32.mrf.mxu0
      %v1092 = vadd.f32 0.0, %v1091
      %1093 = vmatmul.bf16.gmra.mxu0 %v946
      %v1094 = vpop.f32.mrf.mxu0
      %v1095 = vadd.f32 0.0, %v1094
      %v1096 = vpop.f32.mrf.mxu0
      %v1097 = vadd.f32 0.0, %v1096
      %1098 = vmatmul.bf16.gmra.mxu0 %v949
      %v1099 = vpop.f32.mrf.mxu0
      %v1100 = vadd.f32 0.0, %v1099
      %v1101 = vpop.f32.mrf.mxu0
      %v1102 = vadd.f32 0.0, %v1101
      %1103 = vmatmul.bf16.gmra.mxu0 %v952
      %v1104 = vpop.f32.mrf.mxu0
      %v1105 = vadd.f32 0.0, %v1104
      %v1106 = vpop.f32.mrf.mxu0
      %v1107 = vadd.f32 0.0, %v1106
      %1108 = vmatmul.bf16.gmra.mxu0 %v955
      %v1109 = vpop.f32.mrf.mxu0
      %v1110 = vadd.f32 0.0, %v1109
      %v1111 = vpop.f32.mrf.mxu0
      %v1112 = vadd.f32 0.0, %v1111
      %1113 = vmatmul.bf16.gmra.mxu0 %v958
      %v1114 = vpop.f32.mrf.mxu0
      %v1115 = vadd.f32 0.0, %v1114
      %v1116 = vpop.f32.mrf.mxu0
      %v1117 = vadd.f32 0.0, %v1116
      %1118 = vmatmul.bf16.gmra.mxu0 %v961
      %v1119 = vpop.f32.mrf.mxu0
      %v1120 = vadd.f32 0.0, %v1119
      %v1121 = vpop.f32.mrf.mxu0
      %v1122 = vadd.f32 0.0, %v1121
      %1123 = vmatmul.bf16.gmra.mxu0 %v964
      %v1124 = vpop.f32.mrf.mxu0
      %v1125 = vadd.f32 0.0, %v1124
      %v1126 = vpop.f32.mrf.mxu0
      %v1127 = vadd.f32 0.0, %v1126
      %1128 = vmatmul.bf16.gmra.mxu0 %v967
      %v1129 = vpop.f32.mrf.mxu0
      %v1130 = vadd.f32 0.0, %v1129
      %v1131 = vpop.f32.mrf.mxu0
      %v1132 = vadd.f32 0.0, %v1131
      %1133 = vmatmul.bf16.gmra.mxu0 %v970
      %v1134 = vpop.f32.mrf.mxu0
      %v1135 = vadd.f32 0.0, %v1134
      %v1136 = vpop.f32.mrf.mxu0
      %v1137 = vadd.f32 0.0, %v1136
      %1138 = vmatmul.bf16.gmra.mxu0 %v973
      %v1139 = vpop.f32.mrf.mxu0
      %v1140 = vadd.f32 0.0, %v1139
      %v1141 = vpop.f32.mrf.mxu0
      %v1142 = vadd.f32 0.0, %v1141
      %1143 = vdwg.mxu0
      %v1208 = vunpack.c.l.b16 %v571
      %v1209 = vunpack.c.l.b16 %v572
      %v1210 = vunpack.c.l.b16 %v573
      %v1211 = vunpack.c.l.b16 %v574
      %v1212 = vunpack.c.l.b16 %v575
      %v1213 = vunpack.c.l.b16 %v576
      %v1214 = vunpack.c.l.b16 %v577
      %v1215 = vunpack.c.l.b16 %v578
      %v1216 = vunpack.c.l.b16 %v579
      %v1217 = vunpack.c.l.b16 %v580
      %v1218 = vunpack.c.l.b16 %v581
      %v1219 = vunpack.c.l.b16 %v582
      %v1220 = vunpack.c.l.b16 %v583
      %v1221 = vunpack.c.l.b16 %v584
      %v1222 = vunpack.c.l.b16 %v585
      %v1223 = vunpack.c.l.b16 %v586
      %v1224 = vunpack.c.l.b16 %v587
      %v1225 = vunpack.c.l.b16 %v588
      %v1226 = vunpack.c.l.b16 %v589
      %v1227 = vunpack.c.l.b16 %v590
      %v1228 = vunpack.c.l.b16 %v591
      %v1229 = vunpack.c.l.b16 %v592
      %v1230 = vunpack.c.l.b16 %v593
      %v1231 = vunpack.c.l.b16 %v594
      %v1232 = vunpack.c.l.b16 %v595
      %v1233 = vunpack.c.l.b16 %v596
      %v1234 = vunpack.c.l.b16 %v597
      %v1235 = vunpack.c.l.b16 %v598
      %v1236 = vunpack.c.l.b16 %v599
      %v1237 = vunpack.c.l.b16 %v600
      %v1238 = vunpack.c.l.b16 %v601
      %v1239 = vunpack.c.l.b16 %v602
      %v1240 = vunpack.c.l.b16 %v603
      %v1241 = vunpack.c.l.b16 %v604
      %v1242 = vunpack.c.l.b16 %v605
      %v1243 = vunpack.c.l.b16 %v606
      %v1244 = vunpack.c.l.b16 %v607
      %v1245 = vunpack.c.l.b16 %v608
      %v1246 = vunpack.c.l.b16 %v609
      %v1247 = vunpack.c.l.b16 %v610
      %v1248 = vunpack.c.l.b16 %v611
      %v1249 = vunpack.c.l.b16 %v612
      %v1250 = vunpack.c.l.b16 %v613
      %v1251 = vunpack.c.l.b16 %v614
      %v1252 = vunpack.c.l.b16 %v615
      %v1253 = vunpack.c.l.b16 %v616
      %v1254 = vunpack.c.l.b16 %v617
      %v1255 = vunpack.c.l.b16 %v618
      %v1256 = vunpack.c.l.b16 %v619
      %v1257 = vunpack.c.l.b16 %v620
      %v1258 = vunpack.c.l.b16 %v621
      %v1259 = vunpack.c.l.b16 %v622
      %v1260 = vunpack.c.l.b16 %v623
      %v1261 = vunpack.c.l.b16 %v624
      %v1262 = vunpack.c.l.b16 %v625
      %v1263 = vunpack.c.l.b16 %v626
      %v1264 = vunpack.c.l.b16 %v627
      %v1265 = vunpack.c.l.b16 %v628
      %v1266 = vunpack.c.l.b16 %v629
      %v1267 = vunpack.c.l.b16 %v630
      %v1268 = vunpack.c.l.b16 %v631
      %v1269 = vunpack.c.l.b16 %v632
      %v1270 = vunpack.c.l.b16 %v633
      %v1271 = vunpack.c.l.b16 %v634
      %v1272 = vpack.c.b16 %v1209, %v1208
      %v1273 = vpack.c.b16 %v1211, %v1210
      %v1274 = vpack.c.b16 %v1213, %v1212
      %v1275 = vpack.c.b16 %v1215, %v1214
      %v1276 = vpack.c.b16 %v1217, %v1216
      %v1277 = vpack.c.b16 %v1219, %v1218
      %v1278 = vpack.c.b16 %v1221, %v1220
      %v1279 = vpack.c.b16 %v1223, %v1222
      %v1280 = vpack.c.b16 %v1225, %v1224
      %v1281 = vpack.c.b16 %v1227, %v1226
      %v1282 = vpack.c.b16 %v1229, %v1228
      %v1283 = vpack.c.b16 %v1231, %v1230
      %v1284 = vpack.c.b16 %v1233, %v1232
      %v1285 = vpack.c.b16 %v1235, %v1234
      %v1286 = vpack.c.b16 %v1237, %v1236
      %v1287 = vpack.c.b16 %v1239, %v1238
      %v1288 = vpack.c.b16 %v1241, %v1240
      %v1289 = vpack.c.b16 %v1243, %v1242
      %v1290 = vpack.c.b16 %v1245, %v1244
      %v1291 = vpack.c.b16 %v1247, %v1246
      %v1292 = vpack.c.b16 %v1249, %v1248
      %v1293 = vpack.c.b16 %v1251, %v1250
      %v1294 = vpack.c.b16 %v1253, %v1252
      %v1295 = vpack.c.b16 %v1255, %v1254
      %v1296 = vpack.c.b16 %v1257, %v1256
      %v1297 = vpack.c.b16 %v1259, %v1258
      %v1298 = vpack.c.b16 %v1261, %v1260
      %v1299 = vpack.c.b16 %v1263, %v1262
      %v1300 = vpack.c.b16 %v1265, %v1264
      %v1301 = vpack.c.b16 %v1267, %v1266
      %v1302 = vpack.c.b16 %v1269, %v1268
      %v1303 = vpack.c.b16 %v1271, %v1270
      %vm1304 = vcmask 523264
      %v1306 = vsel %vm1304, %v1272, 0
      %v1309 = vsel %vm1304, %v1273, 0
      %v1312 = vsel %vm1304, %v1274, 0
      %v1315 = vsel %vm1304, %v1275, 0
      %v1318 = vsel %vm1304, %v1276, 0
      %v1321 = vsel %vm1304, %v1277, 0
      %v1324 = vsel %vm1304, %v1278, 0
      %v1327 = vsel %vm1304, %v1279, 0
      %v1330 = vsel %vm1304, %v1280, 0
      %v1333 = vsel %vm1304, %v1281, 0
      %v1336 = vsel %vm1304, %v1282, 0
      %v1339 = vsel %vm1304, %v1283, 0
      %v1342 = vsel %vm1304, %v1284, 0
      %v1345 = vsel %vm1304, %v1285, 0
      %v1348 = vsel %vm1304, %v1286, 0
      %v1351 = vsel %vm1304, %v1287, 0
      %v1354 = vsel %vm1304, %v1288, 0
      %v1357 = vsel %vm1304, %v1289, 0
      %v1360 = vsel %vm1304, %v1290, 0
      %v1363 = vsel %vm1304, %v1291, 0
      %v1366 = vsel %vm1304, %v1292, 0
      %v1369 = vsel %vm1304, %v1293, 0
      %v1372 = vsel %vm1304, %v1294, 0
      %v1375 = vsel %vm1304, %v1295, 0
      %v1378 = vsel %vm1304, %v1296, 0
      %v1381 = vsel %vm1304, %v1297, 0
      %v1384 = vsel %vm1304, %v1298, 0
      %v1387 = vsel %vm1304, %v1299, 0
      %v1390 = vsel %vm1304, %v1300, 0
      %v1393 = vsel %vm1304, %v1301, 0
      %v1396 = vsel %vm1304, %v1302, 0
      %v1399 = vsel %vm1304, %v1303, 0
      %1401 = vmatpush.bf16.msra.mxu0 0
      %1402 = vmatpush.bf16.msra.mxu0 0
      %1403 = vmatpush.bf16.msra.mxu0 0
      %1404 = vmatpush.bf16.msra.mxu0 0
      %1405 = vmatpush.bf16.msra.mxu0 %v638
      %1406 = vmatpush.bf16.msra.mxu0 %v637
      %1407 = vmatpush.bf16.msra.mxu0 %v636
      %1408 = vmatpush.bf16.msra.mxu0 %v635
      %1409 = vmatmul.bf16.gmra.mxu0 %v1306
      %v1410 = vpop.f32.mrf.mxu0
      %v1411 = vadd.f32 %v985, %v1410
      %v1412 = vpop.f32.mrf.mxu0
      %v1413 = vadd.f32 %v987, %v1412
      %1414 = vmatmul.bf16.gmra.mxu0 %v1309
      %v1415 = vpop.f32.mrf.mxu0
      %v1416 = vadd.f32 %v990, %v1415
      %v1417 = vpop.f32.mrf.mxu0
      %v1418 = vadd.f32 %v992, %v1417
      %1419 = vmatmul.bf16.gmra.mxu0 %v1312
      %v1420 = vpop.f32.mrf.mxu0
      %v1421 = vadd.f32 %v995, %v1420
      %v1422 = vpop.f32.mrf.mxu0
      %v1423 = vadd.f32 %v997, %v1422
      %1424 = vmatmul.bf16.gmra.mxu0 %v1315
      %v1425 = vpop.f32.mrf.mxu0
      %v1426 = vadd.f32 %v1000, %v1425
      %v1427 = vpop.f32.mrf.mxu0
      %v1428 = vadd.f32 %v1002, %v1427
      %1429 = vmatmul.bf16.gmra.mxu0 %v1318
      %v1430 = vpop.f32.mrf.mxu0
      %v1431 = vadd.f32 %v1005, %v1430
      %v1432 = vpop.f32.mrf.mxu0
      %v1433 = vadd.f32 %v1007, %v1432
      %1434 = vmatmul.bf16.gmra.mxu0 %v1321
      %v1435 = vpop.f32.mrf.mxu0
      %v1436 = vadd.f32 %v1010, %v1435
      %v1437 = vpop.f32.mrf.mxu0
      %v1438 = vadd.f32 %v1012, %v1437
      %1439 = vmatmul.bf16.gmra.mxu0 %v1324
      %v1440 = vpop.f32.mrf.mxu0
      %v1441 = vadd.f32 %v1015, %v1440
      %v1442 = vpop.f32.mrf.mxu0
      %v1443 = vadd.f32 %v1017, %v1442
      %1444 = vmatmul.bf16.gmra.mxu0 %v1327
      %v1445 = vpop.f32.mrf.mxu0
      %v1446 = vadd.f32 %v1020, %v1445
      %v1447 = vpop.f32.mrf.mxu0
      %v1448 = vadd.f32 %v1022, %v1447
      %1449 = vmatmul.bf16.gmra.mxu0 %v1330
      %v1450 = vpop.f32.mrf.mxu0
      %v1451 = vadd.f32 %v1025, %v1450
      %v1452 = vpop.f32.mrf.mxu0
      %v1453 = vadd.f32 %v1027, %v1452
      %1454 = vmatmul.bf16.gmra.mxu0 %v1333
      %v1455 = vpop.f32.mrf.mxu0
      %v1456 = vadd.f32 %v1030, %v1455
      %v1457 = vpop.f32.mrf.mxu0
      %v1458 = vadd.f32 %v1032, %v1457
      %1459 = vmatmul.bf16.gmra.mxu0 %v1336
      %v1460 = vpop.f32.mrf.mxu0
      %v1461 = vadd.f32 %v1035, %v1460
      %v1462 = vpop.f32.mrf.mxu0
      %v1463 = vadd.f32 %v1037, %v1462
      %1464 = vmatmul.bf16.gmra.mxu0 %v1339
      %v1465 = vpop.f32.mrf.mxu0
      %v1466 = vadd.f32 %v1040, %v1465
      %v1467 = vpop.f32.mrf.mxu0
      %v1468 = vadd.f32 %v1042, %v1467
      %1469 = vmatmul.bf16.gmra.mxu0 %v1342
      %v1470 = vpop.f32.mrf.mxu0
      %v1471 = vadd.f32 %v1045, %v1470
      %v1472 = vpop.f32.mrf.mxu0
      %v1473 = vadd.f32 %v1047, %v1472
      %1474 = vmatmul.bf16.gmra.mxu0 %v1345
      %v1475 = vpop.f32.mrf.mxu0
      %v1476 = vadd.f32 %v1050, %v1475
      %v1477 = vpop.f32.mrf.mxu0
      %v1478 = vadd.f32 %v1052, %v1477
      %1479 = vmatmul.bf16.gmra.mxu0 %v1348
      %v1480 = vpop.f32.mrf.mxu0
      %v1481 = vadd.f32 %v1055, %v1480
      %v1482 = vpop.f32.mrf.mxu0
      %v1483 = vadd.f32 %v1057, %v1482
      %1484 = vmatmul.bf16.gmra.mxu0 %v1351
      %v1485 = vpop.f32.mrf.mxu0
      %v1486 = vadd.f32 %v1060, %v1485
      %v1487 = vpop.f32.mrf.mxu0
      %v1488 = vadd.f32 %v1062, %v1487
      %1489 = vmatmul.bf16.gmra.mxu0 %v1354
      %v1490 = vpop.f32.mrf.mxu0
      %v1491 = vadd.f32 %v1065, %v1490
      %v1492 = vpop.f32.mrf.mxu0
      %v1493 = vadd.f32 %v1067, %v1492
      %1494 = vmatmul.bf16.gmra.mxu0 %v1357
      %v1495 = vpop.f32.mrf.mxu0
      %v1496 = vadd.f32 %v1070, %v1495
      %v1497 = vpop.f32.mrf.mxu0
      %v1498 = vadd.f32 %v1072, %v1497
      %1499 = vmatmul.bf16.gmra.mxu0 %v1360
      %v1500 = vpop.f32.mrf.mxu0
      %v1501 = vadd.f32 %v1075, %v1500
      %v1502 = vpop.f32.mrf.mxu0
      %v1503 = vadd.f32 %v1077, %v1502
      %1504 = vmatmul.bf16.gmra.mxu0 %v1363
      %v1505 = vpop.f32.mrf.mxu0
      %v1506 = vadd.f32 %v1080, %v1505
      %v1507 = vpop.f32.mrf.mxu0
      %v1508 = vadd.f32 %v1082, %v1507
      %1509 = vmatmul.bf16.gmra.mxu0 %v1366
      %v1510 = vpop.f32.mrf.mxu0
      %v1511 = vadd.f32 %v1085, %v1510
      %v1512 = vpop.f32.mrf.mxu0
      %v1513 = vadd.f32 %v1087, %v1512
      %1514 = vmatmul.bf16.gmra.mxu0 %v1369
      %v1515 = vpop.f32.mrf.mxu0
      %v1516 = vadd.f32 %v1090, %v1515
      %v1517 = vpop.f32.mrf.mxu0
      %v1518 = vadd.f32 %v1092, %v1517
      %1519 = vmatmul.bf16.gmra.mxu0 %v1372
      %v1520 = vpop.f32.mrf.mxu0
      %v1521 = vadd.f32 %v1095, %v1520
      %v1522 = vpop.f32.mrf.mxu0
      %v1523 = vadd.f32 %v1097, %v1522
      %1524 = vmatmul.bf16.gmra.mxu0 %v1375
      %v1525 = vpop.f32.mrf.mxu0
      %v1526 = vadd.f32 %v1100, %v1525
      %v1527 = vpop.f32.mrf.mxu0
      %v1528 = vadd.f32 %v1102, %v1527
      %1529 = vmatmul.bf16.gmra.mxu0 %v1378
      %v1530 = vpop.f32.mrf.mxu0
      %v1531 = vadd.f32 %v1105, %v1530
      %v1532 = vpop.f32.mrf.mxu0
      %v1533 = vadd.f32 %v1107, %v1532
      %1534 = vmatmul.bf16.gmra.mxu0 %v1381
      %v1535 = vpop.f32.mrf.mxu0
      %v1536 = vadd.f32 %v1110, %v1535
      %v1537 = vpop.f32.mrf.mxu0
      %v1538 = vadd.f32 %v1112, %v1537
      %1539 = vmatmul.bf16.gmra.mxu0 %v1384
      %v1540 = vpop.f32.mrf.mxu0
      %v1541 = vadd.f32 %v1115, %v1540
      %v1542 = vpop.f32.mrf.mxu0
      %v1543 = vadd.f32 %v1117, %v1542
      %1544 = vmatmul.bf16.gmra.mxu0 %v1387
      %v1545 = vpop.f32.mrf.mxu0
      %v1546 = vadd.f32 %v1120, %v1545
      %v1547 = vpop.f32.mrf.mxu0
      %v1548 = vadd.f32 %v1122, %v1547
      %1549 = vmatmul.bf16.gmra.mxu0 %v1390
      %v1550 = vpop.f32.mrf.mxu0
      %v1551 = vadd.f32 %v1125, %v1550
      %v1552 = vpop.f32.mrf.mxu0
      %v1553 = vadd.f32 %v1127, %v1552
      %1554 = vmatmul.bf16.gmra.mxu0 %v1393
      %v1555 = vpop.f32.mrf.mxu0
      %v1556 = vadd.f32 %v1130, %v1555
      %v1557 = vpop.f32.mrf.mxu0
      %v1558 = vadd.f32 %v1132, %v1557
      %1559 = vmatmul.bf16.gmra.mxu0 %v1396
      %v1560 = vpop.f32.mrf.mxu0
      %v1561 = vadd.f32 %v1135, %v1560
      %v1562 = vpop.f32.mrf.mxu0
      %v1563 = vadd.f32 %v1137, %v1562
      %1564 = vmatmul.bf16.gmra.mxu0 %v1399
      %v1565 = vpop.f32.mrf.mxu0
      %v1566 = vadd.f32 %v1140, %v1565
      %v1567 = vpop.f32.mrf.mxu0
      %v1568 = vadd.f32 %v1142, %v1567
      %1569 = vdwg.mxu0
      %v1570 = vsel %vm444, %v1411, 0.0
      %v1571 = vrot.slane %v1570, 4
      %v1572 = vadd.f32 %v1570, %v1571
      %v1573 = vrot.slane %v1572, 2
      %v1574 = vadd.f32 %v1572, %v1573
      %v1575 = vrot.slane %v1574, 1
      %v1576 = vadd.f32 %v1574, %v1575
      %v1577 = vsel %vm444, %v1413, 0.0
      %v1578 = vrot.slane %v1577, 4
      %v1579 = vadd.f32 %v1577, %v1578
      %v1580 = vrot.slane %v1579, 2
      %v1581 = vadd.f32 %v1579, %v1580
      %v1582 = vrot.slane %v1581, 1
      %v1583 = vadd.f32 %v1581, %v1582
      %v1584 = vsel %vm444, %v1416, 0.0
      %v1585 = vrot.slane %v1584, 4
      %v1586 = vadd.f32 %v1584, %v1585
      %v1587 = vrot.slane %v1586, 2
      %v1588 = vadd.f32 %v1586, %v1587
      %v1589 = vrot.slane %v1588, 1
      %v1590 = vadd.f32 %v1588, %v1589
      %v1591 = vsel %vm444, %v1418, 0.0
      %v1592 = vrot.slane %v1591, 4
      %v1593 = vadd.f32 %v1591, %v1592
      %v1594 = vrot.slane %v1593, 2
      %v1595 = vadd.f32 %v1593, %v1594
      %v1596 = vrot.slane %v1595, 1
      %v1597 = vadd.f32 %v1595, %v1596
      %v1598 = vsel %vm444, %v1421, 0.0
      %v1599 = vrot.slane %v1598, 4
      %v1600 = vadd.f32 %v1598, %v1599
      %v1601 = vrot.slane %v1600, 2
      %v1602 = vadd.f32 %v1600, %v1601
      %v1603 = vrot.slane %v1602, 1
      %v1604 = vadd.f32 %v1602, %v1603
      %v1605 = vsel %vm444, %v1423, 0.0
      %v1606 = vrot.slane %v1605, 4
      %v1607 = vadd.f32 %v1605, %v1606
      %v1608 = vrot.slane %v1607, 2
      %v1609 = vadd.f32 %v1607, %v1608
      %v1610 = vrot.slane %v1609, 1
      %v1611 = vadd.f32 %v1609, %v1610
      %v1612 = vsel %vm444, %v1426, 0.0
      %v1613 = vrot.slane %v1612, 4
      %v1614 = vadd.f32 %v1612, %v1613
      %v1615 = vrot.slane %v1614, 2
      %v1616 = vadd.f32 %v1614, %v1615
      %v1617 = vrot.slane %v1616, 1
      %v1618 = vadd.f32 %v1616, %v1617
      %v1619 = vsel %vm444, %v1428, 0.0
      %v1620 = vrot.slane %v1619, 4
      %v1621 = vadd.f32 %v1619, %v1620
      %v1622 = vrot.slane %v1621, 2
      %v1623 = vadd.f32 %v1621, %v1622
      %v1624 = vrot.slane %v1623, 1
      %v1625 = vadd.f32 %v1623, %v1624
      %v1626 = vsel %vm444, %v1431, 0.0
      %v1627 = vrot.slane %v1626, 4
      %v1628 = vadd.f32 %v1626, %v1627
      %v1629 = vrot.slane %v1628, 2
      %v1630 = vadd.f32 %v1628, %v1629
      %v1631 = vrot.slane %v1630, 1
      %v1632 = vadd.f32 %v1630, %v1631
      %v1633 = vsel %vm444, %v1433, 0.0
      %v1634 = vrot.slane %v1633, 4
      %v1635 = vadd.f32 %v1633, %v1634
      %v1636 = vrot.slane %v1635, 2
      %v1637 = vadd.f32 %v1635, %v1636
      %v1638 = vrot.slane %v1637, 1
      %v1639 = vadd.f32 %v1637, %v1638
      %v1640 = vsel %vm444, %v1436, 0.0
      %v1641 = vrot.slane %v1640, 4
      %v1642 = vadd.f32 %v1640, %v1641
      %v1643 = vrot.slane %v1642, 2
      %v1644 = vadd.f32 %v1642, %v1643
      %v1645 = vrot.slane %v1644, 1
      %v1646 = vadd.f32 %v1644, %v1645
      %v1647 = vsel %vm444, %v1438, 0.0
      %v1648 = vrot.slane %v1647, 4
      %v1649 = vadd.f32 %v1647, %v1648
      %v1650 = vrot.slane %v1649, 2
      %v1651 = vadd.f32 %v1649, %v1650
      %v1652 = vrot.slane %v1651, 1
      %v1653 = vadd.f32 %v1651, %v1652
      %v1654 = vsel %vm444, %v1441, 0.0
      %v1655 = vrot.slane %v1654, 4
      %v1656 = vadd.f32 %v1654, %v1655
      %v1657 = vrot.slane %v1656, 2
      %v1658 = vadd.f32 %v1656, %v1657
      %v1659 = vrot.slane %v1658, 1
      %v1660 = vadd.f32 %v1658, %v1659
      %v1661 = vsel %vm444, %v1443, 0.0
      %v1662 = vrot.slane %v1661, 4
      %v1663 = vadd.f32 %v1661, %v1662
      %v1664 = vrot.slane %v1663, 2
      %v1665 = vadd.f32 %v1663, %v1664
      %v1666 = vrot.slane %v1665, 1
      %v1667 = vadd.f32 %v1665, %v1666
      %v1668 = vsel %vm444, %v1446, 0.0
      %v1669 = vrot.slane %v1668, 4
      %v1670 = vadd.f32 %v1668, %v1669
      %v1671 = vrot.slane %v1670, 2
      %v1672 = vadd.f32 %v1670, %v1671
      %v1673 = vrot.slane %v1672, 1
      %v1674 = vadd.f32 %v1672, %v1673
      %v1675 = vsel %vm444, %v1448, 0.0
      %v1676 = vrot.slane %v1675, 4
      %v1677 = vadd.f32 %v1675, %v1676
      %v1678 = vrot.slane %v1677, 2
      %v1679 = vadd.f32 %v1677, %v1678
      %v1680 = vrot.slane %v1679, 1
      %v1681 = vadd.f32 %v1679, %v1680
      %v1682 = vsel %vm444, %v1451, 0.0
      %v1683 = vrot.slane %v1682, 4
      %v1684 = vadd.f32 %v1682, %v1683
      %v1685 = vrot.slane %v1684, 2
      %v1686 = vadd.f32 %v1684, %v1685
      %v1687 = vrot.slane %v1686, 1
      %v1688 = vadd.f32 %v1686, %v1687
      %v1689 = vsel %vm444, %v1453, 0.0
      %v1690 = vrot.slane %v1689, 4
      %v1691 = vadd.f32 %v1689, %v1690
      %v1692 = vrot.slane %v1691, 2
      %v1693 = vadd.f32 %v1691, %v1692
      %v1694 = vrot.slane %v1693, 1
      %v1695 = vadd.f32 %v1693, %v1694
      %v1696 = vsel %vm444, %v1456, 0.0
      %v1697 = vrot.slane %v1696, 4
      %v1698 = vadd.f32 %v1696, %v1697
      %v1699 = vrot.slane %v1698, 2
      %v1700 = vadd.f32 %v1698, %v1699
      %v1701 = vrot.slane %v1700, 1
      %v1702 = vadd.f32 %v1700, %v1701
      %v1703 = vsel %vm444, %v1458, 0.0
      %v1704 = vrot.slane %v1703, 4
      %v1705 = vadd.f32 %v1703, %v1704
      %v1706 = vrot.slane %v1705, 2
      %v1707 = vadd.f32 %v1705, %v1706
      %v1708 = vrot.slane %v1707, 1
      %v1709 = vadd.f32 %v1707, %v1708
      %v1710 = vsel %vm444, %v1461, 0.0
      %v1711 = vrot.slane %v1710, 4
      %v1712 = vadd.f32 %v1710, %v1711
      %v1713 = vrot.slane %v1712, 2
      %v1714 = vadd.f32 %v1712, %v1713
      %v1715 = vrot.slane %v1714, 1
      %v1716 = vadd.f32 %v1714, %v1715
      %v1717 = vsel %vm444, %v1463, 0.0
      %v1718 = vrot.slane %v1717, 4
      %v1719 = vadd.f32 %v1717, %v1718
      %v1720 = vrot.slane %v1719, 2
      %v1721 = vadd.f32 %v1719, %v1720
      %v1722 = vrot.slane %v1721, 1
      %v1723 = vadd.f32 %v1721, %v1722
      %v1724 = vsel %vm444, %v1466, 0.0
      %v1725 = vrot.slane %v1724, 4
      %v1726 = vadd.f32 %v1724, %v1725
      %v1727 = vrot.slane %v1726, 2
      %v1728 = vadd.f32 %v1726, %v1727
      %v1729 = vrot.slane %v1728, 1
      %v1730 = vadd.f32 %v1728, %v1729
      %v1731 = vsel %vm444, %v1468, 0.0
      %v1732 = vrot.slane %v1731, 4
      %v1733 = vadd.f32 %v1731, %v1732
      %v1734 = vrot.slane %v1733, 2
      %v1735 = vadd.f32 %v1733, %v1734
      %v1736 = vrot.slane %v1735, 1
      %v1737 = vadd.f32 %v1735, %v1736
      %v1738 = vsel %vm444, %v1471, 0.0
      %v1739 = vrot.slane %v1738, 4
      %v1740 = vadd.f32 %v1738, %v1739
      %v1741 = vrot.slane %v1740, 2
      %v1742 = vadd.f32 %v1740, %v1741
      %v1743 = vrot.slane %v1742, 1
      %v1744 = vadd.f32 %v1742, %v1743
      %v1745 = vsel %vm444, %v1473, 0.0
      %v1746 = vrot.slane %v1745, 4
      %v1747 = vadd.f32 %v1745, %v1746
      %v1748 = vrot.slane %v1747, 2
      %v1749 = vadd.f32 %v1747, %v1748
      %v1750 = vrot.slane %v1749, 1
      %v1751 = vadd.f32 %v1749, %v1750
      %v1752 = vsel %vm444, %v1476, 0.0
      %v1753 = vrot.slane %v1752, 4
      %v1754 = vadd.f32 %v1752, %v1753
      %v1755 = vrot.slane %v1754, 2
      %v1756 = vadd.f32 %v1754, %v1755
      %v1757 = vrot.slane %v1756, 1
      %v1758 = vadd.f32 %v1756, %v1757
      %v1759 = vsel %vm444, %v1478, 0.0
      %v1760 = vrot.slane %v1759, 4
      %v1761 = vadd.f32 %v1759, %v1760
      %v1762 = vrot.slane %v1761, 2
      %v1763 = vadd.f32 %v1761, %v1762
      %v1764 = vrot.slane %v1763, 1
      %v1765 = vadd.f32 %v1763, %v1764
      %v1766 = vsel %vm444, %v1481, 0.0
      %v1767 = vrot.slane %v1766, 4
      %v1768 = vadd.f32 %v1766, %v1767
      %v1769 = vrot.slane %v1768, 2
      %v1770 = vadd.f32 %v1768, %v1769
      %v1771 = vrot.slane %v1770, 1
      %v1772 = vadd.f32 %v1770, %v1771
      %v1773 = vsel %vm444, %v1483, 0.0
      %v1774 = vrot.slane %v1773, 4
      %v1775 = vadd.f32 %v1773, %v1774
      %v1776 = vrot.slane %v1775, 2
      %v1777 = vadd.f32 %v1775, %v1776
      %v1778 = vrot.slane %v1777, 1
      %v1779 = vadd.f32 %v1777, %v1778
      %v1780 = vsel %vm444, %v1486, 0.0
      %v1781 = vrot.slane %v1780, 4
      %v1782 = vadd.f32 %v1780, %v1781
      %v1783 = vrot.slane %v1782, 2
      %v1784 = vadd.f32 %v1782, %v1783
      %v1785 = vrot.slane %v1784, 1
      %v1786 = vadd.f32 %v1784, %v1785
      %v1787 = vsel %vm444, %v1488, 0.0
      %v1788 = vrot.slane %v1787, 4
      %v1789 = vadd.f32 %v1787, %v1788
      %v1790 = vrot.slane %v1789, 2
      %v1791 = vadd.f32 %v1789, %v1790
      %v1792 = vrot.slane %v1791, 1
      %v1793 = vadd.f32 %v1791, %v1792
      %v1794 = vsel %vm444, %v1491, 0.0
      %v1795 = vrot.slane %v1794, 4
      %v1796 = vadd.f32 %v1794, %v1795
      %v1797 = vrot.slane %v1796, 2
      %v1798 = vadd.f32 %v1796, %v1797
      %v1799 = vrot.slane %v1798, 1
      %v1800 = vadd.f32 %v1798, %v1799
      %v1801 = vsel %vm444, %v1493, 0.0
      %v1802 = vrot.slane %v1801, 4
      %v1803 = vadd.f32 %v1801, %v1802
      %v1804 = vrot.slane %v1803, 2
      %v1805 = vadd.f32 %v1803, %v1804
      %v1806 = vrot.slane %v1805, 1
      %v1807 = vadd.f32 %v1805, %v1806
      %v1808 = vsel %vm444, %v1496, 0.0
      %v1809 = vrot.slane %v1808, 4
      %v1810 = vadd.f32 %v1808, %v1809
      %v1811 = vrot.slane %v1810, 2
      %v1812 = vadd.f32 %v1810, %v1811
      %v1813 = vrot.slane %v1812, 1
      %v1814 = vadd.f32 %v1812, %v1813
      %v1815 = vsel %vm444, %v1498, 0.0
      %v1816 = vrot.slane %v1815, 4
      %v1817 = vadd.f32 %v1815, %v1816
      %v1818 = vrot.slane %v1817, 2
      %v1819 = vadd.f32 %v1817, %v1818
      %v1820 = vrot.slane %v1819, 1
      %v1821 = vadd.f32 %v1819, %v1820
      %v1822 = vsel %vm444, %v1501, 0.0
      %v1823 = vrot.slane %v1822, 4
      %v1824 = vadd.f32 %v1822, %v1823
      %v1825 = vrot.slane %v1824, 2
      %v1826 = vadd.f32 %v1824, %v1825
      %v1827 = vrot.slane %v1826, 1
      %v1828 = vadd.f32 %v1826, %v1827
      %v1829 = vsel %vm444, %v1503, 0.0
      %v1830 = vrot.slane %v1829, 4
      %v1831 = vadd.f32 %v1829, %v1830
      %v1832 = vrot.slane %v1831, 2
      %v1833 = vadd.f32 %v1831, %v1832
      %v1834 = vrot.slane %v1833, 1
      %v1835 = vadd.f32 %v1833, %v1834
      %v1836 = vsel %vm444, %v1506, 0.0
      %v1837 = vrot.slane %v1836, 4
      %v1838 = vadd.f32 %v1836, %v1837
      %v1839 = vrot.slane %v1838, 2
      %v1840 = vadd.f32 %v1838, %v1839
      %v1841 = vrot.slane %v1840, 1
      %v1842 = vadd.f32 %v1840, %v1841
      %v1843 = vsel %vm444, %v1508, 0.0
      %v1844 = vrot.slane %v1843, 4
      %v1845 = vadd.f32 %v1843, %v1844
      %v1846 = vrot.slane %v1845, 2
      %v1847 = vadd.f32 %v1845, %v1846
      %v1848 = vrot.slane %v1847, 1
      %v1849 = vadd.f32 %v1847, %v1848
      %v1850 = vsel %vm444, %v1511, 0.0
      %v1851 = vrot.slane %v1850, 4
      %v1852 = vadd.f32 %v1850, %v1851
      %v1853 = vrot.slane %v1852, 2
      %v1854 = vadd.f32 %v1852, %v1853
      %v1855 = vrot.slane %v1854, 1
      %v1856 = vadd.f32 %v1854, %v1855
      %v1857 = vsel %vm444, %v1513, 0.0
      %v1858 = vrot.slane %v1857, 4
      %v1859 = vadd.f32 %v1857, %v1858
      %v1860 = vrot.slane %v1859, 2
      %v1861 = vadd.f32 %v1859, %v1860
      %v1862 = vrot.slane %v1861, 1
      %v1863 = vadd.f32 %v1861, %v1862
      %v1864 = vsel %vm444, %v1516, 0.0
      %v1865 = vrot.slane %v1864, 4
      %v1866 = vadd.f32 %v1864, %v1865
      %v1867 = vrot.slane %v1866, 2
      %v1868 = vadd.f32 %v1866, %v1867
      %v1869 = vrot.slane %v1868, 1
      %v1870 = vadd.f32 %v1868, %v1869
      %v1871 = vsel %vm444, %v1518, 0.0
      %v1872 = vrot.slane %v1871, 4
      %v1873 = vadd.f32 %v1871, %v1872
      %v1874 = vrot.slane %v1873, 2
      %v1875 = vadd.f32 %v1873, %v1874
      %v1876 = vrot.slane %v1875, 1
      %v1877 = vadd.f32 %v1875, %v1876
      %v1878 = vsel %vm444, %v1521, 0.0
      %v1879 = vrot.slane %v1878, 4
      %v1880 = vadd.f32 %v1878, %v1879
      %v1881 = vrot.slane %v1880, 2
      %v1882 = vadd.f32 %v1880, %v1881
      %v1883 = vrot.slane %v1882, 1
      %v1884 = vadd.f32 %v1882, %v1883
      %v1885 = vsel %vm444, %v1523, 0.0
      %v1886 = vrot.slane %v1885, 4
      %v1887 = vadd.f32 %v1885, %v1886
      %v1888 = vrot.slane %v1887, 2
      %v1889 = vadd.f32 %v1887, %v1888
      %v1890 = vrot.slane %v1889, 1
      %v1891 = vadd.f32 %v1889, %v1890
      %v1892 = vsel %vm444, %v1526, 0.0
      %v1893 = vrot.slane %v1892, 4
      %v1894 = vadd.f32 %v1892, %v1893
      %v1895 = vrot.slane %v1894, 2
      %v1896 = vadd.f32 %v1894, %v1895
      %v1897 = vrot.slane %v1896, 1
      %v1898 = vadd.f32 %v1896, %v1897
      %v1899 = vsel %vm444, %v1528, 0.0
      %v1900 = vrot.slane %v1899, 4
      %v1901 = vadd.f32 %v1899, %v1900
      %v1902 = vrot.slane %v1901, 2
      %v1903 = vadd.f32 %v1901, %v1902
      %v1904 = vrot.slane %v1903, 1
      %v1905 = vadd.f32 %v1903, %v1904
      %v1906 = vsel %vm444, %v1531, 0.0
      %v1907 = vrot.slane %v1906, 4
      %v1908 = vadd.f32 %v1906, %v1907
      %v1909 = vrot.slane %v1908, 2
      %v1910 = vadd.f32 %v1908, %v1909
      %v1911 = vrot.slane %v1910, 1
      %v1912 = vadd.f32 %v1910, %v1911
      %v1913 = vsel %vm444, %v1533, 0.0
      %v1914 = vrot.slane %v1913, 4
      %v1915 = vadd.f32 %v1913, %v1914
      %v1916 = vrot.slane %v1915, 2
      %v1917 = vadd.f32 %v1915, %v1916
      %v1918 = vrot.slane %v1917, 1
      %v1919 = vadd.f32 %v1917, %v1918
      %v1920 = vsel %vm444, %v1536, 0.0
      %v1921 = vrot.slane %v1920, 4
      %v1922 = vadd.f32 %v1920, %v1921
      %v1923 = vrot.slane %v1922, 2
      %v1924 = vadd.f32 %v1922, %v1923
      %v1925 = vrot.slane %v1924, 1
      %v1926 = vadd.f32 %v1924, %v1925
      %v1927 = vsel %vm444, %v1538, 0.0
      %v1928 = vrot.slane %v1927, 4
      %v1929 = vadd.f32 %v1927, %v1928
      %v1930 = vrot.slane %v1929, 2
      %v1931 = vadd.f32 %v1929, %v1930
      %v1932 = vrot.slane %v1931, 1
      %v1933 = vadd.f32 %v1931, %v1932
      %v1934 = vsel %vm444, %v1541, 0.0
      %v1935 = vrot.slane %v1934, 4
      %v1936 = vadd.f32 %v1934, %v1935
      %v1937 = vrot.slane %v1936, 2
      %v1938 = vadd.f32 %v1936, %v1937
      %v1939 = vrot.slane %v1938, 1
      %v1940 = vadd.f32 %v1938, %v1939
      %v1941 = vsel %vm444, %v1543, 0.0
      %v1942 = vrot.slane %v1941, 4
      %v1943 = vadd.f32 %v1941, %v1942
      %v1944 = vrot.slane %v1943, 2
      %v1945 = vadd.f32 %v1943, %v1944
      %v1946 = vrot.slane %v1945, 1
      %v1947 = vadd.f32 %v1945, %v1946
      %v1948 = vsel %vm444, %v1546, 0.0
      %v1949 = vrot.slane %v1948, 4
      %v1950 = vadd.f32 %v1948, %v1949
      %v1951 = vrot.slane %v1950, 2
      %v1952 = vadd.f32 %v1950, %v1951
      %v1953 = vrot.slane %v1952, 1
      %v1954 = vadd.f32 %v1952, %v1953
      %v1955 = vsel %vm444, %v1548, 0.0
      %v1956 = vrot.slane %v1955, 4
      %v1957 = vadd.f32 %v1955, %v1956
      %v1958 = vrot.slane %v1957, 2
      %v1959 = vadd.f32 %v1957, %v1958
      %v1960 = vrot.slane %v1959, 1
      %v1961 = vadd.f32 %v1959, %v1960
      %v1962 = vsel %vm444, %v1551, 0.0
      %v1963 = vrot.slane %v1962, 4
      %v1964 = vadd.f32 %v1962, %v1963
      %v1965 = vrot.slane %v1964, 2
      %v1966 = vadd.f32 %v1964, %v1965
      %v1967 = vrot.slane %v1966, 1
      %v1968 = vadd.f32 %v1966, %v1967
      %v1969 = vsel %vm444, %v1553, 0.0
      %v1970 = vrot.slane %v1969, 4
      %v1971 = vadd.f32 %v1969, %v1970
      %v1972 = vrot.slane %v1971, 2
      %v1973 = vadd.f32 %v1971, %v1972
      %v1974 = vrot.slane %v1973, 1
      %v1975 = vadd.f32 %v1973, %v1974
      %v1976 = vsel %vm444, %v1556, 0.0
      %v1977 = vrot.slane %v1976, 4
      %v1978 = vadd.f32 %v1976, %v1977
      %v1979 = vrot.slane %v1978, 2
      %v1980 = vadd.f32 %v1978, %v1979
      %v1981 = vrot.slane %v1980, 1
      %v1982 = vadd.f32 %v1980, %v1981
      %v1983 = vsel %vm444, %v1558, 0.0
      %v1984 = vrot.slane %v1983, 4
      %v1985 = vadd.f32 %v1983, %v1984
      %v1986 = vrot.slane %v1985, 2
      %v1987 = vadd.f32 %v1985, %v1986
      %v1988 = vrot.slane %v1987, 1
      %v1989 = vadd.f32 %v1987, %v1988
      %v1990 = vsel %vm444, %v1561, 0.0
      %v1991 = vrot.slane %v1990, 4
      %v1992 = vadd.f32 %v1990, %v1991
      %v1993 = vrot.slane %v1992, 2
      %v1994 = vadd.f32 %v1992, %v1993
      %v1995 = vrot.slane %v1994, 1
      %v1996 = vadd.f32 %v1994, %v1995
      %v1997 = vsel %vm444, %v1563, 0.0
      %v1998 = vrot.slane %v1997, 4
      %v1999 = vadd.f32 %v1997, %v1998
      %v2000 = vrot.slane %v1999, 2
      %v2001 = vadd.f32 %v1999, %v2000
      %v2002 = vrot.slane %v2001, 1
      %v2003 = vadd.f32 %v2001, %v2002
      %v2004 = vsel %vm444, %v1566, 0.0
      %v2005 = vrot.slane %v2004, 4
      %v2006 = vadd.f32 %v2004, %v2005
      %v2007 = vrot.slane %v2006, 2
      %v2008 = vadd.f32 %v2006, %v2007
      %v2009 = vrot.slane %v2008, 1
      %v2010 = vadd.f32 %v2008, %v2009
      %v2011 = vsel %vm444, %v1568, 0.0
      %v2012 = vrot.slane %v2011, 4
      %v2013 = vadd.f32 %v2011, %v2012
      %v2014 = vrot.slane %v2013, 2
      %v2015 = vadd.f32 %v2013, %v2014
      %v2016 = vrot.slane %v2015, 1
      %v2017 = vadd.f32 %v2015, %v2016
      %v2018 = vmul.f32 %v1576, 0.125
      %v2019 = vmul.f32 %v1583, 0.125
      %v2020 = vmul.f32 %v1590, 0.125
      %v2021 = vmul.f32 %v1597, 0.125
      %v2022 = vmul.f32 %v1604, 0.125
      %v2023 = vmul.f32 %v1611, 0.125
      %v2024 = vmul.f32 %v1618, 0.125
      %v2025 = vmul.f32 %v1625, 0.125
      %v2026 = vmul.f32 %v1632, 0.125
      %v2027 = vmul.f32 %v1639, 0.125
      %v2028 = vmul.f32 %v1646, 0.125
      %v2029 = vmul.f32 %v1653, 0.125
      %v2030 = vmul.f32 %v1660, 0.125
      %v2031 = vmul.f32 %v1667, 0.125
      %v2032 = vmul.f32 %v1674, 0.125
      %v2033 = vmul.f32 %v1681, 0.125
      %v2034 = vmul.f32 %v1688, 0.125
      %v2035 = vmul.f32 %v1695, 0.125
      %v2036 = vmul.f32 %v1702, 0.125
      %v2037 = vmul.f32 %v1709, 0.125
      %v2038 = vmul.f32 %v1716, 0.125
      %v2039 = vmul.f32 %v1723, 0.125
      %v2040 = vmul.f32 %v1730, 0.125
      %v2041 = vmul.f32 %v1737, 0.125
      %v2042 = vmul.f32 %v1744, 0.125
      %v2043 = vmul.f32 %v1751, 0.125
      %v2044 = vmul.f32 %v1758, 0.125
      %v2045 = vmul.f32 %v1765, 0.125
      %v2046 = vmul.f32 %v1772, 0.125
      %v2047 = vmul.f32 %v1779, 0.125
      %v2048 = vmul.f32 %v1786, 0.125
      %v2049 = vmul.f32 %v1793, 0.125
      %v2050 = vmul.f32 %v1800, 0.125
      %v2051 = vmul.f32 %v1807, 0.125
      %v2052 = vmul.f32 %v1814, 0.125
      %v2053 = vmul.f32 %v1821, 0.125
      %v2054 = vmul.f32 %v1828, 0.125
      %v2055 = vmul.f32 %v1835, 0.125
      %v2056 = vmul.f32 %v1842, 0.125
      %v2057 = vmul.f32 %v1849, 0.125
      %v2058 = vmul.f32 %v1856, 0.125
      %v2059 = vmul.f32 %v1863, 0.125
      %v2060 = vmul.f32 %v1870, 0.125
      %v2061 = vmul.f32 %v1877, 0.125
      %v2062 = vmul.f32 %v1884, 0.125
      %v2063 = vmul.f32 %v1891, 0.125
      %v2064 = vmul.f32 %v1898, 0.125
      %v2065 = vmul.f32 %v1905, 0.125
      %v2066 = vmul.f32 %v1912, 0.125
      %v2067 = vmul.f32 %v1919, 0.125
      %v2068 = vmul.f32 %v1926, 0.125
      %v2069 = vmul.f32 %v1933, 0.125
      %v2070 = vmul.f32 %v1940, 0.125
      %v2071 = vmul.f32 %v1947, 0.125
      %v2072 = vmul.f32 %v1954, 0.125
      %v2073 = vmul.f32 %v1961, 0.125
      %v2074 = vmul.f32 %v1968, 0.125
      %v2075 = vmul.f32 %v1975, 0.125
      %v2076 = vmul.f32 %v1982, 0.125
      %v2077 = vmul.f32 %v1989, 0.125
      %v2078 = vmul.f32 %v1996, 0.125
      %v2079 = vmul.f32 %v2003, 0.125
      %v2080 = vmul.f32 %v2010, 0.125
      %v2081 = vmul.f32 %v2017, 0.125
      %v2082 = vmul.f32 %v1411, %v1411
      %v2083 = vmul.f32 %v1413, %v1413
      %v2084 = vmul.f32 %v1416, %v1416
      %v2085 = vmul.f32 %v1418, %v1418
      %v2086 = vmul.f32 %v1421, %v1421
      %v2087 = vmul.f32 %v1423, %v1423
      %v2088 = vmul.f32 %v1426, %v1426
      %v2089 = vmul.f32 %v1428, %v1428
      %v2090 = vmul.f32 %v1431, %v1431
      %v2091 = vmul.f32 %v1433, %v1433
      %v2092 = vmul.f32 %v1436, %v1436
      %v2093 = vmul.f32 %v1438, %v1438
      %v2094 = vmul.f32 %v1441, %v1441
      %v2095 = vmul.f32 %v1443, %v1443
      %v2096 = vmul.f32 %v1446, %v1446
      %v2097 = vmul.f32 %v1448, %v1448
      %v2098 = vmul.f32 %v1451, %v1451
      %v2099 = vmul.f32 %v1453, %v1453
      %v2100 = vmul.f32 %v1456, %v1456
      %v2101 = vmul.f32 %v1458, %v1458
      %v2102 = vmul.f32 %v1461, %v1461
      %v2103 = vmul.f32 %v1463, %v1463
      %v2104 = vmul.f32 %v1466, %v1466
      %v2105 = vmul.f32 %v1468, %v1468
      %v2106 = vmul.f32 %v1471, %v1471
      %v2107 = vmul.f32 %v1473, %v1473
      %v2108 = vmul.f32 %v1476, %v1476
      %v2109 = vmul.f32 %v1478, %v1478
      %v2110 = vmul.f32 %v1481, %v1481
      %v2111 = vmul.f32 %v1483, %v1483
      %v2112 = vmul.f32 %v1486, %v1486
      %v2113 = vmul.f32 %v1488, %v1488
      %v2114 = vmul.f32 %v1491, %v1491
      %v2115 = vmul.f32 %v1493, %v1493
      %v2116 = vmul.f32 %v1496, %v1496
      %v2117 = vmul.f32 %v1498, %v1498
      %v2118 = vmul.f32 %v1501, %v1501
      %v2119 = vmul.f32 %v1503, %v1503
      %v2120 = vmul.f32 %v1506, %v1506
      %v2121 = vmul.f32 %v1508, %v1508
      %v2122 = vmul.f32 %v1511, %v1511
      %v2123 = vmul.f32 %v1513, %v1513
      %v2124 = vmul.f32 %v1516, %v1516
      %v2125 = vmul.f32 %v1518, %v1518
      %v2126 = vmul.f32 %v1521, %v1521
      %v2127 = vmul.f32 %v1523, %v1523
      %v2128 = vmul.f32 %v1526, %v1526
      %v2129 = vmul.f32 %v1528, %v1528
      %v2130 = vmul.f32 %v1531, %v1531
      %v2131 = vmul.f32 %v1533, %v1533
      %v2132 = vmul.f32 %v1536, %v1536
      %v2133 = vmul.f32 %v1538, %v1538
      %v2134 = vmul.f32 %v1541, %v1541
      %v2135 = vmul.f32 %v1543, %v1543
      %v2136 = vmul.f32 %v1546, %v1546
      %v2137 = vmul.f32 %v1548, %v1548
      %v2138 = vmul.f32 %v1551, %v1551
      %v2139 = vmul.f32 %v1553, %v1553
      %v2140 = vmul.f32 %v1556, %v1556
      %v2141 = vmul.f32 %v1558, %v1558
      %v2142 = vmul.f32 %v1561, %v1561
      %v2143 = vmul.f32 %v1563, %v1563
      %v2144 = vmul.f32 %v1566, %v1566
      %v2145 = vmul.f32 %v1568, %v1568
      %v2146 = vsel %vm444, %v2082, 0.0
      %v2147 = vrot.slane %v2146, 4
      %v2148 = vadd.f32 %v2146, %v2147
      %v2149 = vrot.slane %v2148, 2
      %v2150 = vadd.f32 %v2148, %v2149
      %v2151 = vrot.slane %v2150, 1
      %v2152 = vadd.f32 %v2150, %v2151
      %v2153 = vsel %vm444, %v2083, 0.0
      %v2154 = vrot.slane %v2153, 4
      %v2155 = vadd.f32 %v2153, %v2154
      %v2156 = vrot.slane %v2155, 2
      %v2157 = vadd.f32 %v2155, %v2156
      %v2158 = vrot.slane %v2157, 1
      %v2159 = vadd.f32 %v2157, %v2158
      %v2160 = vsel %vm444, %v2084, 0.0
      %v2161 = vrot.slane %v2160, 4
      %v2162 = vadd.f32 %v2160, %v2161
      %v2163 = vrot.slane %v2162, 2
      %v2164 = vadd.f32 %v2162, %v2163
      %v2165 = vrot.slane %v2164, 1
      %v2166 = vadd.f32 %v2164, %v2165
      %v2167 = vsel %vm444, %v2085, 0.0
      %v2168 = vrot.slane %v2167, 4
      %v2169 = vadd.f32 %v2167, %v2168
      %v2170 = vrot.slane %v2169, 2
      %v2171 = vadd.f32 %v2169, %v2170
      %v2172 = vrot.slane %v2171, 1
      %v2173 = vadd.f32 %v2171, %v2172
      %v2174 = vsel %vm444, %v2086, 0.0
      %v2175 = vrot.slane %v2174, 4
      %v2176 = vadd.f32 %v2174, %v2175
      %v2177 = vrot.slane %v2176, 2
      %v2178 = vadd.f32 %v2176, %v2177
      %v2179 = vrot.slane %v2178, 1
      %v2180 = vadd.f32 %v2178, %v2179
      %v2181 = vsel %vm444, %v2087, 0.0
      %v2182 = vrot.slane %v2181, 4
      %v2183 = vadd.f32 %v2181, %v2182
      %v2184 = vrot.slane %v2183, 2
      %v2185 = vadd.f32 %v2183, %v2184
      %v2186 = vrot.slane %v2185, 1
      %v2187 = vadd.f32 %v2185, %v2186
      %v2188 = vsel %vm444, %v2088, 0.0
      %v2189 = vrot.slane %v2188, 4
      %v2190 = vadd.f32 %v2188, %v2189
      %v2191 = vrot.slane %v2190, 2
      %v2192 = vadd.f32 %v2190, %v2191
      %v2193 = vrot.slane %v2192, 1
      %v2194 = vadd.f32 %v2192, %v2193
      %v2195 = vsel %vm444, %v2089, 0.0
      %v2196 = vrot.slane %v2195, 4
      %v2197 = vadd.f32 %v2195, %v2196
      %v2198 = vrot.slane %v2197, 2
      %v2199 = vadd.f32 %v2197, %v2198
      %v2200 = vrot.slane %v2199, 1
      %v2201 = vadd.f32 %v2199, %v2200
      %v2202 = vsel %vm444, %v2090, 0.0
      %v2203 = vrot.slane %v2202, 4
      %v2204 = vadd.f32 %v2202, %v2203
      %v2205 = vrot.slane %v2204, 2
      %v2206 = vadd.f32 %v2204, %v2205
      %v2207 = vrot.slane %v2206, 1
      %v2208 = vadd.f32 %v2206, %v2207
      %v2209 = vsel %vm444, %v2091, 0.0
      %v2210 = vrot.slane %v2209, 4
      %v2211 = vadd.f32 %v2209, %v2210
      %v2212 = vrot.slane %v2211, 2
      %v2213 = vadd.f32 %v2211, %v2212
      %v2214 = vrot.slane %v2213, 1
      %v2215 = vadd.f32 %v2213, %v2214
      %v2216 = vsel %vm444, %v2092, 0.0
      %v2217 = vrot.slane %v2216, 4
      %v2218 = vadd.f32 %v2216, %v2217
      %v2219 = vrot.slane %v2218, 2
      %v2220 = vadd.f32 %v2218, %v2219
      %v2221 = vrot.slane %v2220, 1
      %v2222 = vadd.f32 %v2220, %v2221
      %v2223 = vsel %vm444, %v2093, 0.0
      %v2224 = vrot.slane %v2223, 4
      %v2225 = vadd.f32 %v2223, %v2224
      %v2226 = vrot.slane %v2225, 2
      %v2227 = vadd.f32 %v2225, %v2226
      %v2228 = vrot.slane %v2227, 1
      %v2229 = vadd.f32 %v2227, %v2228
      %v2230 = vsel %vm444, %v2094, 0.0
      %v2231 = vrot.slane %v2230, 4
      %v2232 = vadd.f32 %v2230, %v2231
      %v2233 = vrot.slane %v2232, 2
      %v2234 = vadd.f32 %v2232, %v2233
      %v2235 = vrot.slane %v2234, 1
      %v2236 = vadd.f32 %v2234, %v2235
      %v2237 = vsel %vm444, %v2095, 0.0
      %v2238 = vrot.slane %v2237, 4
      %v2239 = vadd.f32 %v2237, %v2238
      %v2240 = vrot.slane %v2239, 2
      %v2241 = vadd.f32 %v2239, %v2240
      %v2242 = vrot.slane %v2241, 1
      %v2243 = vadd.f32 %v2241, %v2242
      %v2244 = vsel %vm444, %v2096, 0.0
      %v2245 = vrot.slane %v2244, 4
      %v2246 = vadd.f32 %v2244, %v2245
      %v2247 = vrot.slane %v2246, 2
      %v2248 = vadd.f32 %v2246, %v2247
      %v2249 = vrot.slane %v2248, 1
      %v2250 = vadd.f32 %v2248, %v2249
      %v2251 = vsel %vm444, %v2097, 0.0
      %v2252 = vrot.slane %v2251, 4
      %v2253 = vadd.f32 %v2251, %v2252
      %v2254 = vrot.slane %v2253, 2
      %v2255 = vadd.f32 %v2253, %v2254
      %v2256 = vrot.slane %v2255, 1
      %v2257 = vadd.f32 %v2255, %v2256
      %v2258 = vsel %vm444, %v2098, 0.0
      %v2259 = vrot.slane %v2258, 4
      %v2260 = vadd.f32 %v2258, %v2259
      %v2261 = vrot.slane %v2260, 2
      %v2262 = vadd.f32 %v2260, %v2261
      %v2263 = vrot.slane %v2262, 1
      %v2264 = vadd.f32 %v2262, %v2263
      %v2265 = vsel %vm444, %v2099, 0.0
      %v2266 = vrot.slane %v2265, 4
      %v2267 = vadd.f32 %v2265, %v2266
      %v2268 = vrot.slane %v2267, 2
      %v2269 = vadd.f32 %v2267, %v2268
      %v2270 = vrot.slane %v2269, 1
      %v2271 = vadd.f32 %v2269, %v2270
      %v2272 = vsel %vm444, %v2100, 0.0
      %v2273 = vrot.slane %v2272, 4
      %v2274 = vadd.f32 %v2272, %v2273
      %v2275 = vrot.slane %v2274, 2
      %v2276 = vadd.f32 %v2274, %v2275
      %v2277 = vrot.slane %v2276, 1
      %v2278 = vadd.f32 %v2276, %v2277
      %v2279 = vsel %vm444, %v2101, 0.0
      %v2280 = vrot.slane %v2279, 4
      %v2281 = vadd.f32 %v2279, %v2280
      %v2282 = vrot.slane %v2281, 2
      %v2283 = vadd.f32 %v2281, %v2282
      %v2284 = vrot.slane %v2283, 1
      %v2285 = vadd.f32 %v2283, %v2284
      %v2286 = vsel %vm444, %v2102, 0.0
      %v2287 = vrot.slane %v2286, 4
      %v2288 = vadd.f32 %v2286, %v2287
      %v2289 = vrot.slane %v2288, 2
      %v2290 = vadd.f32 %v2288, %v2289
      %v2291 = vrot.slane %v2290, 1
      %v2292 = vadd.f32 %v2290, %v2291
      %v2293 = vsel %vm444, %v2103, 0.0
      %v2294 = vrot.slane %v2293, 4
      %v2295 = vadd.f32 %v2293, %v2294
      %v2296 = vrot.slane %v2295, 2
      %v2297 = vadd.f32 %v2295, %v2296
      %v2298 = vrot.slane %v2297, 1
      %v2299 = vadd.f32 %v2297, %v2298
      %v2300 = vsel %vm444, %v2104, 0.0
      %v2301 = vrot.slane %v2300, 4
      %v2302 = vadd.f32 %v2300, %v2301
      %v2303 = vrot.slane %v2302, 2
      %v2304 = vadd.f32 %v2302, %v2303
      %v2305 = vrot.slane %v2304, 1
      %v2306 = vadd.f32 %v2304, %v2305
      %v2307 = vsel %vm444, %v2105, 0.0
      %v2308 = vrot.slane %v2307, 4
      %v2309 = vadd.f32 %v2307, %v2308
      %v2310 = vrot.slane %v2309, 2
      %v2311 = vadd.f32 %v2309, %v2310
      %v2312 = vrot.slane %v2311, 1
      %v2313 = vadd.f32 %v2311, %v2312
      %v2314 = vsel %vm444, %v2106, 0.0
      %v2315 = vrot.slane %v2314, 4
      %v2316 = vadd.f32 %v2314, %v2315
      %v2317 = vrot.slane %v2316, 2
      %v2318 = vadd.f32 %v2316, %v2317
      %v2319 = vrot.slane %v2318, 1
      %v2320 = vadd.f32 %v2318, %v2319
      %v2321 = vsel %vm444, %v2107, 0.0
      %v2322 = vrot.slane %v2321, 4
      %v2323 = vadd.f32 %v2321, %v2322
      %v2324 = vrot.slane %v2323, 2
      %v2325 = vadd.f32 %v2323, %v2324
      %v2326 = vrot.slane %v2325, 1
      %v2327 = vadd.f32 %v2325, %v2326
      %v2328 = vsel %vm444, %v2108, 0.0
      %v2329 = vrot.slane %v2328, 4
      %v2330 = vadd.f32 %v2328, %v2329
      %v2331 = vrot.slane %v2330, 2
      %v2332 = vadd.f32 %v2330, %v2331
      %v2333 = vrot.slane %v2332, 1
      %v2334 = vadd.f32 %v2332, %v2333
      %v2335 = vsel %vm444, %v2109, 0.0
      %v2336 = vrot.slane %v2335, 4
      %v2337 = vadd.f32 %v2335, %v2336
      %v2338 = vrot.slane %v2337, 2
      %v2339 = vadd.f32 %v2337, %v2338
      %v2340 = vrot.slane %v2339, 1
      %v2341 = vadd.f32 %v2339, %v2340
      %v2342 = vsel %vm444, %v2110, 0.0
      %v2343 = vrot.slane %v2342, 4
      %v2344 = vadd.f32 %v2342, %v2343
      %v2345 = vrot.slane %v2344, 2
      %v2346 = vadd.f32 %v2344, %v2345
      %v2347 = vrot.slane %v2346, 1
      %v2348 = vadd.f32 %v2346, %v2347
      %v2349 = vsel %vm444, %v2111, 0.0
      %v2350 = vrot.slane %v2349, 4
      %v2351 = vadd.f32 %v2349, %v2350
      %v2352 = vrot.slane %v2351, 2
      %v2353 = vadd.f32 %v2351, %v2352
      %v2354 = vrot.slane %v2353, 1
      %v2355 = vadd.f32 %v2353, %v2354
      %v2356 = vsel %vm444, %v2112, 0.0
      %v2357 = vrot.slane %v2356, 4
      %v2358 = vadd.f32 %v2356, %v2357
      %v2359 = vrot.slane %v2358, 2
      %v2360 = vadd.f32 %v2358, %v2359
      %v2361 = vrot.slane %v2360, 1
      %v2362 = vadd.f32 %v2360, %v2361
      %v2363 = vsel %vm444, %v2113, 0.0
      %v2364 = vrot.slane %v2363, 4
      %v2365 = vadd.f32 %v2363, %v2364
      %v2366 = vrot.slane %v2365, 2
      %v2367 = vadd.f32 %v2365, %v2366
      %v2368 = vrot.slane %v2367, 1
      %v2369 = vadd.f32 %v2367, %v2368
      %v2370 = vsel %vm444, %v2114, 0.0
      %v2371 = vrot.slane %v2370, 4
      %v2372 = vadd.f32 %v2370, %v2371
      %v2373 = vrot.slane %v2372, 2
      %v2374 = vadd.f32 %v2372, %v2373
      %v2375 = vrot.slane %v2374, 1
      %v2376 = vadd.f32 %v2374, %v2375
      %v2377 = vsel %vm444, %v2115, 0.0
      %v2378 = vrot.slane %v2377, 4
      %v2379 = vadd.f32 %v2377, %v2378
      %v2380 = vrot.slane %v2379, 2
      %v2381 = vadd.f32 %v2379, %v2380
      %v2382 = vrot.slane %v2381, 1
      %v2383 = vadd.f32 %v2381, %v2382
      %v2384 = vsel %vm444, %v2116, 0.0
      %v2385 = vrot.slane %v2384, 4
      %v2386 = vadd.f32 %v2384, %v2385
      %v2387 = vrot.slane %v2386, 2
      %v2388 = vadd.f32 %v2386, %v2387
      %v2389 = vrot.slane %v2388, 1
      %v2390 = vadd.f32 %v2388, %v2389
      %v2391 = vsel %vm444, %v2117, 0.0
      %v2392 = vrot.slane %v2391, 4
      %v2393 = vadd.f32 %v2391, %v2392
      %v2394 = vrot.slane %v2393, 2
      %v2395 = vadd.f32 %v2393, %v2394
      %v2396 = vrot.slane %v2395, 1
      %v2397 = vadd.f32 %v2395, %v2396
      %v2398 = vsel %vm444, %v2118, 0.0
      %v2399 = vrot.slane %v2398, 4
      %v2400 = vadd.f32 %v2398, %v2399
      %v2401 = vrot.slane %v2400, 2
      %v2402 = vadd.f32 %v2400, %v2401
      %v2403 = vrot.slane %v2402, 1
      %v2404 = vadd.f32 %v2402, %v2403
      %v2405 = vsel %vm444, %v2119, 0.0
      %v2406 = vrot.slane %v2405, 4
      %v2407 = vadd.f32 %v2405, %v2406
      %v2408 = vrot.slane %v2407, 2
      %v2409 = vadd.f32 %v2407, %v2408
      %v2410 = vrot.slane %v2409, 1
      %v2411 = vadd.f32 %v2409, %v2410
      %v2412 = vsel %vm444, %v2120, 0.0
      %v2413 = vrot.slane %v2412, 4
      %v2414 = vadd.f32 %v2412, %v2413
      %v2415 = vrot.slane %v2414, 2
      %v2416 = vadd.f32 %v2414, %v2415
      %v2417 = vrot.slane %v2416, 1
      %v2418 = vadd.f32 %v2416, %v2417
      %v2419 = vsel %vm444, %v2121, 0.0
      %v2420 = vrot.slane %v2419, 4
      %v2421 = vadd.f32 %v2419, %v2420
      %v2422 = vrot.slane %v2421, 2
      %v2423 = vadd.f32 %v2421, %v2422
      %v2424 = vrot.slane %v2423, 1
      %v2425 = vadd.f32 %v2423, %v2424
      %v2426 = vsel %vm444, %v2122, 0.0
      %v2427 = vrot.slane %v2426, 4
      %v2428 = vadd.f32 %v2426, %v2427
      %v2429 = vrot.slane %v2428, 2
      %v2430 = vadd.f32 %v2428, %v2429
      %v2431 = vrot.slane %v2430, 1
      %v2432 = vadd.f32 %v2430, %v2431
      %v2433 = vsel %vm444, %v2123, 0.0
      %v2434 = vrot.slane %v2433, 4
      %v2435 = vadd.f32 %v2433, %v2434
      %v2436 = vrot.slane %v2435, 2
      %v2437 = vadd.f32 %v2435, %v2436
      %v2438 = vrot.slane %v2437, 1
      %v2439 = vadd.f32 %v2437, %v2438
      %v2440 = vsel %vm444, %v2124, 0.0
      %v2441 = vrot.slane %v2440, 4
      %v2442 = vadd.f32 %v2440, %v2441
      %v2443 = vrot.slane %v2442, 2
      %v2444 = vadd.f32 %v2442, %v2443
      %v2445 = vrot.slane %v2444, 1
      %v2446 = vadd.f32 %v2444, %v2445
      %v2447 = vsel %vm444, %v2125, 0.0
      %v2448 = vrot.slane %v2447, 4
      %v2449 = vadd.f32 %v2447, %v2448
      %v2450 = vrot.slane %v2449, 2
      %v2451 = vadd.f32 %v2449, %v2450
      %v2452 = vrot.slane %v2451, 1
      %v2453 = vadd.f32 %v2451, %v2452
      %v2454 = vsel %vm444, %v2126, 0.0
      %v2455 = vrot.slane %v2454, 4
      %v2456 = vadd.f32 %v2454, %v2455
      %v2457 = vrot.slane %v2456, 2
      %v2458 = vadd.f32 %v2456, %v2457
      %v2459 = vrot.slane %v2458, 1
      %v2460 = vadd.f32 %v2458, %v2459
      %v2461 = vsel %vm444, %v2127, 0.0
      %v2462 = vrot.slane %v2461, 4
      %v2463 = vadd.f32 %v2461, %v2462
      %v2464 = vrot.slane %v2463, 2
      %v2465 = vadd.f32 %v2463, %v2464
      %v2466 = vrot.slane %v2465, 1
      %v2467 = vadd.f32 %v2465, %v2466
      %v2468 = vsel %vm444, %v2128, 0.0
      %v2469 = vrot.slane %v2468, 4
      %v2470 = vadd.f32 %v2468, %v2469
      %v2471 = vrot.slane %v2470, 2
      %v2472 = vadd.f32 %v2470, %v2471
      %v2473 = vrot.slane %v2472, 1
      %v2474 = vadd.f32 %v2472, %v2473
      %v2475 = vsel %vm444, %v2129, 0.0
      %v2476 = vrot.slane %v2475, 4
      %v2477 = vadd.f32 %v2475, %v2476
      %v2478 = vrot.slane %v2477, 2
      %v2479 = vadd.f32 %v2477, %v2478
      %v2480 = vrot.slane %v2479, 1
      %v2481 = vadd.f32 %v2479, %v2480
      %v2482 = vsel %vm444, %v2130, 0.0
      %v2483 = vrot.slane %v2482, 4
      %v2484 = vadd.f32 %v2482, %v2483
      %v2485 = vrot.slane %v2484, 2
      %v2486 = vadd.f32 %v2484, %v2485
      %v2487 = vrot.slane %v2486, 1
      %v2488 = vadd.f32 %v2486, %v2487
      %v2489 = vsel %vm444, %v2131, 0.0
      %v2490 = vrot.slane %v2489, 4
      %v2491 = vadd.f32 %v2489, %v2490
      %v2492 = vrot.slane %v2491, 2
      %v2493 = vadd.f32 %v2491, %v2492
      %v2494 = vrot.slane %v2493, 1
      %v2495 = vadd.f32 %v2493, %v2494
      %v2496 = vsel %vm444, %v2132, 0.0
      %v2497 = vrot.slane %v2496, 4
      %v2498 = vadd.f32 %v2496, %v2497
      %v2499 = vrot.slane %v2498, 2
      %v2500 = vadd.f32 %v2498, %v2499
      %v2501 = vrot.slane %v2500, 1
      %v2502 = vadd.f32 %v2500, %v2501
      %v2503 = vsel %vm444, %v2133, 0.0
      %v2504 = vrot.slane %v2503, 4
      %v2505 = vadd.f32 %v2503, %v2504
      %v2506 = vrot.slane %v2505, 2
      %v2507 = vadd.f32 %v2505, %v2506
      %v2508 = vrot.slane %v2507, 1
      %v2509 = vadd.f32 %v2507, %v2508
      %v2510 = vsel %vm444, %v2134, 0.0
      %v2511 = vrot.slane %v2510, 4
      %v2512 = vadd.f32 %v2510, %v2511
      %v2513 = vrot.slane %v2512, 2
      %v2514 = vadd.f32 %v2512, %v2513
      %v2515 = vrot.slane %v2514, 1
      %v2516 = vadd.f32 %v2514, %v2515
      %v2517 = vsel %vm444, %v2135, 0.0
      %v2518 = vrot.slane %v2517, 4
      %v2519 = vadd.f32 %v2517, %v2518
      %v2520 = vrot.slane %v2519, 2
      %v2521 = vadd.f32 %v2519, %v2520
      %v2522 = vrot.slane %v2521, 1
      %v2523 = vadd.f32 %v2521, %v2522
      %v2524 = vsel %vm444, %v2136, 0.0
      %v2525 = vrot.slane %v2524, 4
      %v2526 = vadd.f32 %v2524, %v2525
      %v2527 = vrot.slane %v2526, 2
      %v2528 = vadd.f32 %v2526, %v2527
      %v2529 = vrot.slane %v2528, 1
      %v2530 = vadd.f32 %v2528, %v2529
      %v2531 = vsel %vm444, %v2137, 0.0
      %v2532 = vrot.slane %v2531, 4
      %v2533 = vadd.f32 %v2531, %v2532
      %v2534 = vrot.slane %v2533, 2
      %v2535 = vadd.f32 %v2533, %v2534
      %v2536 = vrot.slane %v2535, 1
      %v2537 = vadd.f32 %v2535, %v2536
      %v2538 = vsel %vm444, %v2138, 0.0
      %v2539 = vrot.slane %v2538, 4
      %v2540 = vadd.f32 %v2538, %v2539
      %v2541 = vrot.slane %v2540, 2
      %v2542 = vadd.f32 %v2540, %v2541
      %v2543 = vrot.slane %v2542, 1
      %v2544 = vadd.f32 %v2542, %v2543
      %v2545 = vsel %vm444, %v2139, 0.0
      %v2546 = vrot.slane %v2545, 4
      %v2547 = vadd.f32 %v2545, %v2546
      %v2548 = vrot.slane %v2547, 2
      %v2549 = vadd.f32 %v2547, %v2548
      %v2550 = vrot.slane %v2549, 1
      %v2551 = vadd.f32 %v2549, %v2550
      %v2552 = vsel %vm444, %v2140, 0.0
      %v2553 = vrot.slane %v2552, 4
      %v2554 = vadd.f32 %v2552, %v2553
      %v2555 = vrot.slane %v2554, 2
      %v2556 = vadd.f32 %v2554, %v2555
      %v2557 = vrot.slane %v2556, 1
      %v2558 = vadd.f32 %v2556, %v2557
      %v2559 = vsel %vm444, %v2141, 0.0
      %v2560 = vrot.slane %v2559, 4
      %v2561 = vadd.f32 %v2559, %v2560
      %v2562 = vrot.slane %v2561, 2
      %v2563 = vadd.f32 %v2561, %v2562
      %v2564 = vrot.slane %v2563, 1
      %v2565 = vadd.f32 %v2563, %v2564
      %v2566 = vsel %vm444, %v2142, 0.0
      %v2567 = vrot.slane %v2566, 4
      %v2568 = vadd.f32 %v2566, %v2567
      %v2569 = vrot.slane %v2568, 2
      %v2570 = vadd.f32 %v2568, %v2569
      %v2571 = vrot.slane %v2570, 1
      %v2572 = vadd.f32 %v2570, %v2571
      %v2573 = vsel %vm444, %v2143, 0.0
      %v2574 = vrot.slane %v2573, 4
      %v2575 = vadd.f32 %v2573, %v2574
      %v2576 = vrot.slane %v2575, 2
      %v2577 = vadd.f32 %v2575, %v2576
      %v2578 = vrot.slane %v2577, 1
      %v2579 = vadd.f32 %v2577, %v2578
      %v2580 = vsel %vm444, %v2144, 0.0
      %v2581 = vrot.slane %v2580, 4
      %v2582 = vadd.f32 %v2580, %v2581
      %v2583 = vrot.slane %v2582, 2
      %v2584 = vadd.f32 %v2582, %v2583
      %v2585 = vrot.slane %v2584, 1
      %v2586 = vadd.f32 %v2584, %v2585
      %v2587 = vsel %vm444, %v2145, 0.0
      %v2588 = vrot.slane %v2587, 4
      %v2589 = vadd.f32 %v2587, %v2588
      %v2590 = vrot.slane %v2589, 2
      %v2591 = vadd.f32 %v2589, %v2590
      %v2592 = vrot.slane %v2591, 1
      %v2593 = vadd.f32 %v2591, %v2592
      %v2594 = vmul.f32 %v2152, 0.125
      %v2595 = vmul.f32 %v2159, 0.125
      %v2596 = vmul.f32 %v2166, 0.125
      %v2597 = vmul.f32 %v2173, 0.125
      %v2598 = vmul.f32 %v2180, 0.125
      %v2599 = vmul.f32 %v2187, 0.125
      %v2600 = vmul.f32 %v2194, 0.125
      %v2601 = vmul.f32 %v2201, 0.125
      %v2602 = vmul.f32 %v2208, 0.125
      %v2603 = vmul.f32 %v2215, 0.125
      %v2604 = vmul.f32 %v2222, 0.125
      %v2605 = vmul.f32 %v2229, 0.125
      %v2606 = vmul.f32 %v2236, 0.125
      %v2607 = vmul.f32 %v2243, 0.125
      %v2608 = vmul.f32 %v2250, 0.125
      %v2609 = vmul.f32 %v2257, 0.125
      %v2610 = vmul.f32 %v2264, 0.125
      %v2611 = vmul.f32 %v2271, 0.125
      %v2612 = vmul.f32 %v2278, 0.125
      %v2613 = vmul.f32 %v2285, 0.125
      %v2614 = vmul.f32 %v2292, 0.125
      %v2615 = vmul.f32 %v2299, 0.125
      %v2616 = vmul.f32 %v2306, 0.125
      %v2617 = vmul.f32 %v2313, 0.125
      %v2618 = vmul.f32 %v2320, 0.125
      %v2619 = vmul.f32 %v2327, 0.125
      %v2620 = vmul.f32 %v2334, 0.125
      %v2621 = vmul.f32 %v2341, 0.125
      %v2622 = vmul.f32 %v2348, 0.125
      %v2623 = vmul.f32 %v2355, 0.125
      %v2624 = vmul.f32 %v2362, 0.125
      %v2625 = vmul.f32 %v2369, 0.125
      %v2626 = vmul.f32 %v2376, 0.125
      %v2627 = vmul.f32 %v2383, 0.125
      %v2628 = vmul.f32 %v2390, 0.125
      %v2629 = vmul.f32 %v2397, 0.125
      %v2630 = vmul.f32 %v2404, 0.125
      %v2631 = vmul.f32 %v2411, 0.125
      %v2632 = vmul.f32 %v2418, 0.125
      %v2633 = vmul.f32 %v2425, 0.125
      %v2634 = vmul.f32 %v2432, 0.125
      %v2635 = vmul.f32 %v2439, 0.125
      %v2636 = vmul.f32 %v2446, 0.125
      %v2637 = vmul.f32 %v2453, 0.125
      %v2638 = vmul.f32 %v2460, 0.125
      %v2639 = vmul.f32 %v2467, 0.125
      %v2640 = vmul.f32 %v2474, 0.125
      %v2641 = vmul.f32 %v2481, 0.125
      %v2642 = vmul.f32 %v2488, 0.125
      %v2643 = vmul.f32 %v2495, 0.125
      %v2644 = vmul.f32 %v2502, 0.125
      %v2645 = vmul.f32 %v2509, 0.125
      %v2646 = vmul.f32 %v2516, 0.125
      %v2647 = vmul.f32 %v2523, 0.125
      %v2648 = vmul.f32 %v2530, 0.125
      %v2649 = vmul.f32 %v2537, 0.125
      %v2650 = vmul.f32 %v2544, 0.125
      %v2651 = vmul.f32 %v2551, 0.125
      %v2652 = vmul.f32 %v2558, 0.125
      %v2653 = vmul.f32 %v2565, 0.125
      %v2654 = vmul.f32 %v2572, 0.125
      %v2655 = vmul.f32 %v2579, 0.125
      %v2656 = vmul.f32 %v2586, 0.125
      %v2657 = vmul.f32 %v2593, 0.125
      %v2658 = vsel %vm444, %v1411, -inf
      %v2659 = vrot.slane %v2658, 4
      %v2660 = vmax.f32 %v2658, %v2659
      %v2661 = vrot.slane %v2660, 2
      %v2662 = vmax.f32 %v2660, %v2661
      %v2663 = vrot.slane %v2662, 1
      %v2664 = vmax.f32 %v2662, %v2663
      %v2665 = vsel %vm444, %v1413, -inf
      %v2666 = vrot.slane %v2665, 4
      %v2667 = vmax.f32 %v2665, %v2666
      %v2668 = vrot.slane %v2667, 2
      %v2669 = vmax.f32 %v2667, %v2668
      %v2670 = vrot.slane %v2669, 1
      %v2671 = vmax.f32 %v2669, %v2670
      %v2672 = vsel %vm444, %v1416, -inf
      %v2673 = vrot.slane %v2672, 4
      %v2674 = vmax.f32 %v2672, %v2673
      %v2675 = vrot.slane %v2674, 2
      %v2676 = vmax.f32 %v2674, %v2675
      %v2677 = vrot.slane %v2676, 1
      %v2678 = vmax.f32 %v2676, %v2677
      %v2679 = vsel %vm444, %v1418, -inf
      %v2680 = vrot.slane %v2679, 4
      %v2681 = vmax.f32 %v2679, %v2680
      %v2682 = vrot.slane %v2681, 2
      %v2683 = vmax.f32 %v2681, %v2682
      %v2684 = vrot.slane %v2683, 1
      %v2685 = vmax.f32 %v2683, %v2684
      %v2686 = vsel %vm444, %v1421, -inf
      %v2687 = vrot.slane %v2686, 4
      %v2688 = vmax.f32 %v2686, %v2687
      %v2689 = vrot.slane %v2688, 2
      %v2690 = vmax.f32 %v2688, %v2689
      %v2691 = vrot.slane %v2690, 1
      %v2692 = vmax.f32 %v2690, %v2691
      %v2693 = vsel %vm444, %v1423, -inf
      %v2694 = vrot.slane %v2693, 4
      %v2695 = vmax.f32 %v2693, %v2694
      %v2696 = vrot.slane %v2695, 2
      %v2697 = vmax.f32 %v2695, %v2696
      %v2698 = vrot.slane %v2697, 1
      %v2699 = vmax.f32 %v2697, %v2698
      %v2700 = vsel %vm444, %v1426, -inf
      %v2701 = vrot.slane %v2700, 4
      %v2702 = vmax.f32 %v2700, %v2701
      %v2703 = vrot.slane %v2702, 2
      %v2704 = vmax.f32 %v2702, %v2703
      %v2705 = vrot.slane %v2704, 1
      %v2706 = vmax.f32 %v2704, %v2705
      %v2707 = vsel %vm444, %v1428, -inf
      %v2708 = vrot.slane %v2707, 4
      %v2709 = vmax.f32 %v2707, %v2708
      %v2710 = vrot.slane %v2709, 2
      %v2711 = vmax.f32 %v2709, %v2710
      %v2712 = vrot.slane %v2711, 1
      %v2713 = vmax.f32 %v2711, %v2712
      %v2714 = vsel %vm444, %v1431, -inf
      %v2715 = vrot.slane %v2714, 4
      %v2716 = vmax.f32 %v2714, %v2715
      %v2717 = vrot.slane %v2716, 2
      %v2718 = vmax.f32 %v2716, %v2717
      %v2719 = vrot.slane %v2718, 1
      %v2720 = vmax.f32 %v2718, %v2719
      %v2721 = vsel %vm444, %v1433, -inf
      %v2722 = vrot.slane %v2721, 4
      %v2723 = vmax.f32 %v2721, %v2722
      %v2724 = vrot.slane %v2723, 2
      %v2725 = vmax.f32 %v2723, %v2724
      %v2726 = vrot.slane %v2725, 1
      %v2727 = vmax.f32 %v2725, %v2726
      %v2728 = vsel %vm444, %v1436, -inf
      %v2729 = vrot.slane %v2728, 4
      %v2730 = vmax.f32 %v2728, %v2729
      %v2731 = vrot.slane %v2730, 2
      %v2732 = vmax.f32 %v2730, %v2731
      %v2733 = vrot.slane %v2732, 1
      %v2734 = vmax.f32 %v2732, %v2733
      %v2735 = vsel %vm444, %v1438, -inf
      %v2736 = vrot.slane %v2735, 4
      %v2737 = vmax.f32 %v2735, %v2736
      %v2738 = vrot.slane %v2737, 2
      %v2739 = vmax.f32 %v2737, %v2738
      %v2740 = vrot.slane %v2739, 1
      %v2741 = vmax.f32 %v2739, %v2740
      %v2742 = vsel %vm444, %v1441, -inf
      %v2743 = vrot.slane %v2742, 4
      %v2744 = vmax.f32 %v2742, %v2743
      %v2745 = vrot.slane %v2744, 2
      %v2746 = vmax.f32 %v2744, %v2745
      %v2747 = vrot.slane %v2746, 1
      %v2748 = vmax.f32 %v2746, %v2747
      %v2749 = vsel %vm444, %v1443, -inf
      %v2750 = vrot.slane %v2749, 4
      %v2751 = vmax.f32 %v2749, %v2750
      %v2752 = vrot.slane %v2751, 2
      %v2753 = vmax.f32 %v2751, %v2752
      %v2754 = vrot.slane %v2753, 1
      %v2755 = vmax.f32 %v2753, %v2754
      %v2756 = vsel %vm444, %v1446, -inf
      %v2757 = vrot.slane %v2756, 4
      %v2758 = vmax.f32 %v2756, %v2757
      %v2759 = vrot.slane %v2758, 2
      %v2760 = vmax.f32 %v2758, %v2759
      %v2761 = vrot.slane %v2760, 1
      %v2762 = vmax.f32 %v2760, %v2761
      %v2763 = vsel %vm444, %v1448, -inf
      %v2764 = vrot.slane %v2763, 4
      %v2765 = vmax.f32 %v2763, %v2764
      %v2766 = vrot.slane %v2765, 2
      %v2767 = vmax.f32 %v2765, %v2766
      %v2768 = vrot.slane %v2767, 1
      %v2769 = vmax.f32 %v2767, %v2768
      %v2770 = vsel %vm444, %v1451, -inf
      %v2771 = vrot.slane %v2770, 4
      %v2772 = vmax.f32 %v2770, %v2771
      %v2773 = vrot.slane %v2772, 2
      %v2774 = vmax.f32 %v2772, %v2773
      %v2775 = vrot.slane %v2774, 1
      %v2776 = vmax.f32 %v2774, %v2775
      %v2777 = vsel %vm444, %v1453, -inf
      %v2778 = vrot.slane %v2777, 4
      %v2779 = vmax.f32 %v2777, %v2778
      %v2780 = vrot.slane %v2779, 2
      %v2781 = vmax.f32 %v2779, %v2780
      %v2782 = vrot.slane %v2781, 1
      %v2783 = vmax.f32 %v2781, %v2782
      %v2784 = vsel %vm444, %v1456, -inf
      %v2785 = vrot.slane %v2784, 4
      %v2786 = vmax.f32 %v2784, %v2785
      %v2787 = vrot.slane %v2786, 2
      %v2788 = vmax.f32 %v2786, %v2787
      %v2789 = vrot.slane %v2788, 1
      %v2790 = vmax.f32 %v2788, %v2789
      %v2791 = vsel %vm444, %v1458, -inf
      %v2792 = vrot.slane %v2791, 4
      %v2793 = vmax.f32 %v2791, %v2792
      %v2794 = vrot.slane %v2793, 2
      %v2795 = vmax.f32 %v2793, %v2794
      %v2796 = vrot.slane %v2795, 1
      %v2797 = vmax.f32 %v2795, %v2796
      %v2798 = vsel %vm444, %v1461, -inf
      %v2799 = vrot.slane %v2798, 4
      %v2800 = vmax.f32 %v2798, %v2799
      %v2801 = vrot.slane %v2800, 2
      %v2802 = vmax.f32 %v2800, %v2801
      %v2803 = vrot.slane %v2802, 1
      %v2804 = vmax.f32 %v2802, %v2803
      %v2805 = vsel %vm444, %v1463, -inf
      %v2806 = vrot.slane %v2805, 4
      %v2807 = vmax.f32 %v2805, %v2806
      %v2808 = vrot.slane %v2807, 2
      %v2809 = vmax.f32 %v2807, %v2808
      %v2810 = vrot.slane %v2809, 1
      %v2811 = vmax.f32 %v2809, %v2810
      %v2812 = vsel %vm444, %v1466, -inf
      %v2813 = vrot.slane %v2812, 4
      %v2814 = vmax.f32 %v2812, %v2813
      %v2815 = vrot.slane %v2814, 2
      %v2816 = vmax.f32 %v2814, %v2815
      %v2817 = vrot.slane %v2816, 1
      %v2818 = vmax.f32 %v2816, %v2817
      %v2819 = vsel %vm444, %v1468, -inf
      %v2820 = vrot.slane %v2819, 4
      %v2821 = vmax.f32 %v2819, %v2820
      %v2822 = vrot.slane %v2821, 2
      %v2823 = vmax.f32 %v2821, %v2822
      %v2824 = vrot.slane %v2823, 1
      %v2825 = vmax.f32 %v2823, %v2824
      %v2826 = vsel %vm444, %v1471, -inf
      %v2827 = vrot.slane %v2826, 4
      %v2828 = vmax.f32 %v2826, %v2827
      %v2829 = vrot.slane %v2828, 2
      %v2830 = vmax.f32 %v2828, %v2829
      %v2831 = vrot.slane %v2830, 1
      %v2832 = vmax.f32 %v2830, %v2831
      %v2833 = vsel %vm444, %v1473, -inf
      %v2834 = vrot.slane %v2833, 4
      %v2835 = vmax.f32 %v2833, %v2834
      %v2836 = vrot.slane %v2835, 2
      %v2837 = vmax.f32 %v2835, %v2836
      %v2838 = vrot.slane %v2837, 1
      %v2839 = vmax.f32 %v2837, %v2838
      %v2840 = vsel %vm444, %v1476, -inf
      %v2841 = vrot.slane %v2840, 4
      %v2842 = vmax.f32 %v2840, %v2841
      %v2843 = vrot.slane %v2842, 2
      %v2844 = vmax.f32 %v2842, %v2843
      %v2845 = vrot.slane %v2844, 1
      %v2846 = vmax.f32 %v2844, %v2845
      %v2847 = vsel %vm444, %v1478, -inf
      %v2848 = vrot.slane %v2847, 4
      %v2849 = vmax.f32 %v2847, %v2848
      %v2850 = vrot.slane %v2849, 2
      %v2851 = vmax.f32 %v2849, %v2850
      %v2852 = vrot.slane %v2851, 1
      %v2853 = vmax.f32 %v2851, %v2852
      %v2854 = vsel %vm444, %v1481, -inf
      %v2855 = vrot.slane %v2854, 4
      %v2856 = vmax.f32 %v2854, %v2855
      %v2857 = vrot.slane %v2856, 2
      %v2858 = vmax.f32 %v2856, %v2857
      %v2859 = vrot.slane %v2858, 1
      %v2860 = vmax.f32 %v2858, %v2859
      %v2861 = vsel %vm444, %v1483, -inf
      %v2862 = vrot.slane %v2861, 4
      %v2863 = vmax.f32 %v2861, %v2862
      %v2864 = vrot.slane %v2863, 2
      %v2865 = vmax.f32 %v2863, %v2864
      %v2866 = vrot.slane %v2865, 1
      %v2867 = vmax.f32 %v2865, %v2866
      %v2868 = vsel %vm444, %v1486, -inf
      %v2869 = vrot.slane %v2868, 4
      %v2870 = vmax.f32 %v2868, %v2869
      %v2871 = vrot.slane %v2870, 2
      %v2872 = vmax.f32 %v2870, %v2871
      %v2873 = vrot.slane %v2872, 1
      %v2874 = vmax.f32 %v2872, %v2873
      %v2875 = vsel %vm444, %v1488, -inf
      %v2876 = vrot.slane %v2875, 4
      %v2877 = vmax.f32 %v2875, %v2876
      %v2878 = vrot.slane %v2877, 2
      %v2879 = vmax.f32 %v2877, %v2878
      %v2880 = vrot.slane %v2879, 1
      %v2881 = vmax.f32 %v2879, %v2880
      %v2882 = vsel %vm444, %v1491, -inf
      %v2883 = vrot.slane %v2882, 4
      %v2884 = vmax.f32 %v2882, %v2883
      %v2885 = vrot.slane %v2884, 2
      %v2886 = vmax.f32 %v2884, %v2885
      %v2887 = vrot.slane %v2886, 1
      %v2888 = vmax.f32 %v2886, %v2887
      %v2889 = vsel %vm444, %v1493, -inf
      %v2890 = vrot.slane %v2889, 4
      %v2891 = vmax.f32 %v2889, %v2890
      %v2892 = vrot.slane %v2891, 2
      %v2893 = vmax.f32 %v2891, %v2892
      %v2894 = vrot.slane %v2893, 1
      %v2895 = vmax.f32 %v2893, %v2894
      %v2896 = vsel %vm444, %v1496, -inf
      %v2897 = vrot.slane %v2896, 4
      %v2898 = vmax.f32 %v2896, %v2897
      %v2899 = vrot.slane %v2898, 2
      %v2900 = vmax.f32 %v2898, %v2899
      %v2901 = vrot.slane %v2900, 1
      %v2902 = vmax.f32 %v2900, %v2901
      %v2903 = vsel %vm444, %v1498, -inf
      %v2904 = vrot.slane %v2903, 4
      %v2905 = vmax.f32 %v2903, %v2904
      %v2906 = vrot.slane %v2905, 2
      %v2907 = vmax.f32 %v2905, %v2906
      %v2908 = vrot.slane %v2907, 1
      %v2909 = vmax.f32 %v2907, %v2908
      %v2910 = vsel %vm444, %v1501, -inf
      %v2911 = vrot.slane %v2910, 4
      %v2912 = vmax.f32 %v2910, %v2911
      %v2913 = vrot.slane %v2912, 2
      %v2914 = vmax.f32 %v2912, %v2913
      %v2915 = vrot.slane %v2914, 1
      %v2916 = vmax.f32 %v2914, %v2915
      %v2917 = vsel %vm444, %v1503, -inf
      %v2918 = vrot.slane %v2917, 4
      %v2919 = vmax.f32 %v2917, %v2918
      %v2920 = vrot.slane %v2919, 2
      %v2921 = vmax.f32 %v2919, %v2920
      %v2922 = vrot.slane %v2921, 1
      %v2923 = vmax.f32 %v2921, %v2922
      %v2924 = vsel %vm444, %v1506, -inf
      %v2925 = vrot.slane %v2924, 4
      %v2926 = vmax.f32 %v2924, %v2925
      %v2927 = vrot.slane %v2926, 2
      %v2928 = vmax.f32 %v2926, %v2927
      %v2929 = vrot.slane %v2928, 1
      %v2930 = vmax.f32 %v2928, %v2929
      %v2931 = vsel %vm444, %v1508, -inf
      %v2932 = vrot.slane %v2931, 4
      %v2933 = vmax.f32 %v2931, %v2932
      %v2934 = vrot.slane %v2933, 2
      %v2935 = vmax.f32 %v2933, %v2934
      %v2936 = vrot.slane %v2935, 1
      %v2937 = vmax.f32 %v2935, %v2936
      %v2938 = vsel %vm444, %v1511, -inf
      %v2939 = vrot.slane %v2938, 4
      %v2940 = vmax.f32 %v2938, %v2939
      %v2941 = vrot.slane %v2940, 2
      %v2942 = vmax.f32 %v2940, %v2941
      %v2943 = vrot.slane %v2942, 1
      %v2944 = vmax.f32 %v2942, %v2943
      %v2945 = vsel %vm444, %v1513, -inf
      %v2946 = vrot.slane %v2945, 4
      %v2947 = vmax.f32 %v2945, %v2946
      %v2948 = vrot.slane %v2947, 2
      %v2949 = vmax.f32 %v2947, %v2948
      %v2950 = vrot.slane %v2949, 1
      %v2951 = vmax.f32 %v2949, %v2950
      %v2952 = vsel %vm444, %v1516, -inf
      %v2953 = vrot.slane %v2952, 4
      %v2954 = vmax.f32 %v2952, %v2953
      %v2955 = vrot.slane %v2954, 2
      %v2956 = vmax.f32 %v2954, %v2955
      %v2957 = vrot.slane %v2956, 1
      %v2958 = vmax.f32 %v2956, %v2957
      %v2959 = vsel %vm444, %v1518, -inf
      %v2960 = vrot.slane %v2959, 4
      %v2961 = vmax.f32 %v2959, %v2960
      %v2962 = vrot.slane %v2961, 2
      %v2963 = vmax.f32 %v2961, %v2962
      %v2964 = vrot.slane %v2963, 1
      %v2965 = vmax.f32 %v2963, %v2964
      %v2966 = vsel %vm444, %v1521, -inf
      %v2967 = vrot.slane %v2966, 4
      %v2968 = vmax.f32 %v2966, %v2967
      %v2969 = vrot.slane %v2968, 2
      %v2970 = vmax.f32 %v2968, %v2969
      %v2971 = vrot.slane %v2970, 1
      %v2972 = vmax.f32 %v2970, %v2971
      %v2973 = vsel %vm444, %v1523, -inf
      %v2974 = vrot.slane %v2973, 4
      %v2975 = vmax.f32 %v2973, %v2974
      %v2976 = vrot.slane %v2975, 2
      %v2977 = vmax.f32 %v2975, %v2976
      %v2978 = vrot.slane %v2977, 1
      %v2979 = vmax.f32 %v2977, %v2978
      %v2980 = vsel %vm444, %v1526, -inf
      %v2981 = vrot.slane %v2980, 4
      %v2982 = vmax.f32 %v2980, %v2981
      %v2983 = vrot.slane %v2982, 2
      %v2984 = vmax.f32 %v2982, %v2983
      %v2985 = vrot.slane %v2984, 1
      %v2986 = vmax.f32 %v2984, %v2985
      %v2987 = vsel %vm444, %v1528, -inf
      %v2988 = vrot.slane %v2987, 4
      %v2989 = vmax.f32 %v2987, %v2988
      %v2990 = vrot.slane %v2989, 2
      %v2991 = vmax.f32 %v2989, %v2990
      %v2992 = vrot.slane %v2991, 1
      %v2993 = vmax.f32 %v2991, %v2992
      %v2994 = vsel %vm444, %v1531, -inf
      %v2995 = vrot.slane %v2994, 4
      %v2996 = vmax.f32 %v2994, %v2995
      %v2997 = vrot.slane %v2996, 2
      %v2998 = vmax.f32 %v2996, %v2997
      %v2999 = vrot.slane %v2998, 1
      %v3000 = vmax.f32 %v2998, %v2999
      %v3001 = vsel %vm444, %v1533, -inf
      %v3002 = vrot.slane %v3001, 4
      %v3003 = vmax.f32 %v3001, %v3002
      %v3004 = vrot.slane %v3003, 2
      %v3005 = vmax.f32 %v3003, %v3004
      %v3006 = vrot.slane %v3005, 1
      %v3007 = vmax.f32 %v3005, %v3006
      %v3008 = vsel %vm444, %v1536, -inf
      %v3009 = vrot.slane %v3008, 4
      %v3010 = vmax.f32 %v3008, %v3009
      %v3011 = vrot.slane %v3010, 2
      %v3012 = vmax.f32 %v3010, %v3011
      %v3013 = vrot.slane %v3012, 1
      %v3014 = vmax.f32 %v3012, %v3013
      %v3015 = vsel %vm444, %v1538, -inf
      %v3016 = vrot.slane %v3015, 4
      %v3017 = vmax.f32 %v3015, %v3016
      %v3018 = vrot.slane %v3017, 2
      %v3019 = vmax.f32 %v3017, %v3018
      %v3020 = vrot.slane %v3019, 1
      %v3021 = vmax.f32 %v3019, %v3020
      %v3022 = vsel %vm444, %v1541, -inf
      %v3023 = vrot.slane %v3022, 4
      %v3024 = vmax.f32 %v3022, %v3023
      %v3025 = vrot.slane %v3024, 2
      %v3026 = vmax.f32 %v3024, %v3025
      %v3027 = vrot.slane %v3026, 1
      %v3028 = vmax.f32 %v3026, %v3027
      %v3029 = vsel %vm444, %v1543, -inf
      %v3030 = vrot.slane %v3029, 4
      %v3031 = vmax.f32 %v3029, %v3030
      %v3032 = vrot.slane %v3031, 2
      %v3033 = vmax.f32 %v3031, %v3032
      %v3034 = vrot.slane %v3033, 1
      %v3035 = vmax.f32 %v3033, %v3034
      %v3036 = vsel %vm444, %v1546, -inf
      %v3037 = vrot.slane %v3036, 4
      %v3038 = vmax.f32 %v3036, %v3037
      %v3039 = vrot.slane %v3038, 2
      %v3040 = vmax.f32 %v3038, %v3039
      %v3041 = vrot.slane %v3040, 1
      %v3042 = vmax.f32 %v3040, %v3041
      %v3043 = vsel %vm444, %v1548, -inf
      %v3044 = vrot.slane %v3043, 4
      %v3045 = vmax.f32 %v3043, %v3044
      %v3046 = vrot.slane %v3045, 2
      %v3047 = vmax.f32 %v3045, %v3046
      %v3048 = vrot.slane %v3047, 1
      %v3049 = vmax.f32 %v3047, %v3048
      %v3050 = vsel %vm444, %v1551, -inf
      %v3051 = vrot.slane %v3050, 4
      %v3052 = vmax.f32 %v3050, %v3051
      %v3053 = vrot.slane %v3052, 2
      %v3054 = vmax.f32 %v3052, %v3053
      %v3055 = vrot.slane %v3054, 1
      %v3056 = vmax.f32 %v3054, %v3055
      %v3057 = vsel %vm444, %v1553, -inf
      %v3058 = vrot.slane %v3057, 4
      %v3059 = vmax.f32 %v3057, %v3058
      %v3060 = vrot.slane %v3059, 2
      %v3061 = vmax.f32 %v3059, %v3060
      %v3062 = vrot.slane %v3061, 1
      %v3063 = vmax.f32 %v3061, %v3062
      %v3064 = vsel %vm444, %v1556, -inf
      %v3065 = vrot.slane %v3064, 4
      %v3066 = vmax.f32 %v3064, %v3065
      %v3067 = vrot.slane %v3066, 2
      %v3068 = vmax.f32 %v3066, %v3067
      %v3069 = vrot.slane %v3068, 1
      %v3070 = vmax.f32 %v3068, %v3069
      %v3071 = vsel %vm444, %v1558, -inf
      %v3072 = vrot.slane %v3071, 4
      %v3073 = vmax.f32 %v3071, %v3072
      %v3074 = vrot.slane %v3073, 2
      %v3075 = vmax.f32 %v3073, %v3074
      %v3076 = vrot.slane %v3075, 1
      %v3077 = vmax.f32 %v3075, %v3076
      %v3078 = vsel %vm444, %v1561, -inf
      %v3079 = vrot.slane %v3078, 4
      %v3080 = vmax.f32 %v3078, %v3079
      %v3081 = vrot.slane %v3080, 2
      %v3082 = vmax.f32 %v3080, %v3081
      %v3083 = vrot.slane %v3082, 1
      %v3084 = vmax.f32 %v3082, %v3083
      %v3085 = vsel %vm444, %v1563, -inf
      %v3086 = vrot.slane %v3085, 4
      %v3087 = vmax.f32 %v3085, %v3086
      %v3088 = vrot.slane %v3087, 2
      %v3089 = vmax.f32 %v3087, %v3088
      %v3090 = vrot.slane %v3089, 1
      %v3091 = vmax.f32 %v3089, %v3090
      %v3092 = vsel %vm444, %v1566, -inf
      %v3093 = vrot.slane %v3092, 4
      %v3094 = vmax.f32 %v3092, %v3093
      %v3095 = vrot.slane %v3094, 2
      %v3096 = vmax.f32 %v3094, %v3095
      %v3097 = vrot.slane %v3096, 1
      %v3098 = vmax.f32 %v3096, %v3097
      %v3099 = vsel %vm444, %v1568, -inf
      %v3100 = vrot.slane %v3099, 4
      %v3101 = vmax.f32 %v3099, %v3100
      %v3102 = vrot.slane %v3101, 2
      %v3103 = vmax.f32 %v3101, %v3102
      %v3104 = vrot.slane %v3103, 1
      %v3105 = vmax.f32 %v3103, %v3104
      %v3114 = vrot.slane %v487, 1
      %v3115 = vrot.slane %v487, 2
      %v3116 = vrot.slane %v487, 3
      %v3117 = vrot.slane %v487, 4
      %v3118 = vrot.slane %v487, 5
      %v3119 = vrot.slane %v487, 6
      %v3120 = vrot.slane %v487, 7
      %v3121 = vrot.slane %v490, 1
      %v3122 = vrot.slane %v490, 2
      %v3123 = vrot.slane %v490, 3
      %v3124 = vrot.slane %v490, 4
      %v3125 = vrot.slane %v490, 5
      %v3126 = vrot.slane %v490, 6
      %v3127 = vrot.slane %v490, 7
      %v3128 = vrot.slane %v493, 1
      %v3129 = vrot.slane %v493, 2
      %v3130 = vrot.slane %v493, 3
      %v3131 = vrot.slane %v493, 4
      %v3132 = vrot.slane %v493, 5
      %v3133 = vrot.slane %v493, 6
      %v3134 = vrot.slane %v493, 7
      %v3135 = vrot.slane %v496, 1
      %v3136 = vrot.slane %v496, 2
      %v3137 = vrot.slane %v496, 3
      %v3138 = vrot.slane %v496, 4
      %v3139 = vrot.slane %v496, 5
      %v3140 = vrot.slane %v496, 6
      %v3141 = vrot.slane %v496, 7
      %v3142 = vrot.slane %v499, 1
      %v3143 = vrot.slane %v499, 2
      %v3144 = vrot.slane %v499, 3
      %v3145 = vrot.slane %v499, 4
      %v3146 = vrot.slane %v499, 5
      %v3147 = vrot.slane %v499, 6
      %v3148 = vrot.slane %v499, 7
      %v3149 = vrot.slane %v502, 1
      %v3150 = vrot.slane %v502, 2
      %v3151 = vrot.slane %v502, 3
      %v3152 = vrot.slane %v502, 4
      %v3153 = vrot.slane %v502, 5
      %v3154 = vrot.slane %v502, 6
      %v3155 = vrot.slane %v502, 7
      %v3156 = vrot.slane %v505, 1
      %v3157 = vrot.slane %v505, 2
      %v3158 = vrot.slane %v505, 3
      %v3159 = vrot.slane %v505, 4
      %v3160 = vrot.slane %v505, 5
      %v3161 = vrot.slane %v505, 6
      %v3162 = vrot.slane %v505, 7
      %v3163 = vrot.slane %v508, 1
      %v3164 = vrot.slane %v508, 2
      %v3165 = vrot.slane %v508, 3
      %v3166 = vrot.slane %v508, 4
      %v3167 = vrot.slane %v508, 5
      %v3168 = vrot.slane %v508, 6
      %v3169 = vrot.slane %v508, 7
      %v3234 = vadd.f32 %v2664, %v487
      %v3235 = vadd.f32 %v2671, %v3114
      %v3236 = vadd.f32 %v2678, %v3115
      %v3237 = vadd.f32 %v2685, %v3116
      %v3238 = vadd.f32 %v2692, %v3117
      %v3239 = vadd.f32 %v2699, %v3118
      %v3240 = vadd.f32 %v2706, %v3119
      %v3241 = vadd.f32 %v2713, %v3120
      %v3242 = vadd.f32 %v2720, %v490
      %v3243 = vadd.f32 %v2727, %v3121
      %v3244 = vadd.f32 %v2734, %v3122
      %v3245 = vadd.f32 %v2741, %v3123
      %v3246 = vadd.f32 %v2748, %v3124
      %v3247 = vadd.f32 %v2755, %v3125
      %v3248 = vadd.f32 %v2762, %v3126
      %v3249 = vadd.f32 %v2769, %v3127
      %v3250 = vadd.f32 %v2776, %v493
      %v3251 = vadd.f32 %v2783, %v3128
      %v3252 = vadd.f32 %v2790, %v3129
      %v3253 = vadd.f32 %v2797, %v3130
      %v3254 = vadd.f32 %v2804, %v3131
      %v3255 = vadd.f32 %v2811, %v3132
      %v3256 = vadd.f32 %v2818, %v3133
      %v3257 = vadd.f32 %v2825, %v3134
      %v3258 = vadd.f32 %v2832, %v496
      %v3259 = vadd.f32 %v2839, %v3135
      %v3260 = vadd.f32 %v2846, %v3136
      %v3261 = vadd.f32 %v2853, %v3137
      %v3262 = vadd.f32 %v2860, %v3138
      %v3263 = vadd.f32 %v2867, %v3139
      %v3264 = vadd.f32 %v2874, %v3140
      %v3265 = vadd.f32 %v2881, %v3141
      %v3266 = vadd.f32 %v2888, %v499
      %v3267 = vadd.f32 %v2895, %v3142
      %v3268 = vadd.f32 %v2902, %v3143
      %v3269 = vadd.f32 %v2909, %v3144
      %v3270 = vadd.f32 %v2916, %v3145
      %v3271 = vadd.f32 %v2923, %v3146
      %v3272 = vadd.f32 %v2930, %v3147
      %v3273 = vadd.f32 %v2937, %v3148
      %v3274 = vadd.f32 %v2944, %v502
      %v3275 = vadd.f32 %v2951, %v3149
      %v3276 = vadd.f32 %v2958, %v3150
      %v3277 = vadd.f32 %v2965, %v3151
      %v3278 = vadd.f32 %v2972, %v3152
      %v3279 = vadd.f32 %v2979, %v3153
      %v3280 = vadd.f32 %v2986, %v3154
      %v3281 = vadd.f32 %v2993, %v3155
      %v3282 = vadd.f32 %v3000, %v505
      %v3283 = vadd.f32 %v3007, %v3156
      %v3284 = vadd.f32 %v3014, %v3157
      %v3285 = vadd.f32 %v3021, %v3158
      %v3286 = vadd.f32 %v3028, %v3159
      %v3287 = vadd.f32 %v3035, %v3160
      %v3288 = vadd.f32 %v3042, %v3161
      %v3289 = vadd.f32 %v3049, %v3162
      %v3290 = vadd.f32 %v3056, %v508
      %v3291 = vadd.f32 %v3063, %v3163
      %v3292 = vadd.f32 %v3070, %v3164
      %v3293 = vadd.f32 %v3077, %v3165
      %v3294 = vadd.f32 %v3084, %v3166
      %v3295 = vadd.f32 %v3091, %v3167
      %v3296 = vadd.f32 %v3098, %v3168
      %v3297 = vadd.f32 %v3105, %v3169
      %v3298 = vsel %vm444, %v1411, inf
      %v3299 = vrot.slane %v3298, 4
      %v3300 = vmin.f32 %v3298, %v3299
      %v3301 = vrot.slane %v3300, 2
      %v3302 = vmin.f32 %v3300, %v3301
      %v3303 = vrot.slane %v3302, 1
      %v3304 = vmin.f32 %v3302, %v3303
      %v3305 = vsel %vm444, %v1413, inf
      %v3306 = vrot.slane %v3305, 4
      %v3307 = vmin.f32 %v3305, %v3306
      %v3308 = vrot.slane %v3307, 2
      %v3309 = vmin.f32 %v3307, %v3308
      %v3310 = vrot.slane %v3309, 1
      %v3311 = vmin.f32 %v3309, %v3310
      %v3312 = vsel %vm444, %v1416, inf
      %v3313 = vrot.slane %v3312, 4
      %v3314 = vmin.f32 %v3312, %v3313
      %v3315 = vrot.slane %v3314, 2
      %v3316 = vmin.f32 %v3314, %v3315
      %v3317 = vrot.slane %v3316, 1
      %v3318 = vmin.f32 %v3316, %v3317
      %v3319 = vsel %vm444, %v1418, inf
      %v3320 = vrot.slane %v3319, 4
      %v3321 = vmin.f32 %v3319, %v3320
      %v3322 = vrot.slane %v3321, 2
      %v3323 = vmin.f32 %v3321, %v3322
      %v3324 = vrot.slane %v3323, 1
      %v3325 = vmin.f32 %v3323, %v3324
      %v3326 = vsel %vm444, %v1421, inf
      %v3327 = vrot.slane %v3326, 4
      %v3328 = vmin.f32 %v3326, %v3327
      %v3329 = vrot.slane %v3328, 2
      %v3330 = vmin.f32 %v3328, %v3329
      %v3331 = vrot.slane %v3330, 1
      %v3332 = vmin.f32 %v3330, %v3331
      %v3333 = vsel %vm444, %v1423, inf
      %v3334 = vrot.slane %v3333, 4
      %v3335 = vmin.f32 %v3333, %v3334
      %v3336 = vrot.slane %v3335, 2
      %v3337 = vmin.f32 %v3335, %v3336
      %v3338 = vrot.slane %v3337, 1
      %v3339 = vmin.f32 %v3337, %v3338
      %v3340 = vsel %vm444, %v1426, inf
      %v3341 = vrot.slane %v3340, 4
      %v3342 = vmin.f32 %v3340, %v3341
      %v3343 = vrot.slane %v3342, 2
      %v3344 = vmin.f32 %v3342, %v3343
      %v3345 = vrot.slane %v3344, 1
      %v3346 = vmin.f32 %v3344, %v3345
      %v3347 = vsel %vm444, %v1428, inf
      %v3348 = vrot.slane %v3347, 4
      %v3349 = vmin.f32 %v3347, %v3348
      %v3350 = vrot.slane %v3349, 2
      %v3351 = vmin.f32 %v3349, %v3350
      %v3352 = vrot.slane %v3351, 1
      %v3353 = vmin.f32 %v3351, %v3352
      %v3354 = vsel %vm444, %v1431, inf
      %v3355 = vrot.slane %v3354, 4
      %v3356 = vmin.f32 %v3354, %v3355
      %v3357 = vrot.slane %v3356, 2
      %v3358 = vmin.f32 %v3356, %v3357
      %v3359 = vrot.slane %v3358, 1
      %v3360 = vmin.f32 %v3358, %v3359
      %v3361 = vsel %vm444, %v1433, inf
      %v3362 = vrot.slane %v3361, 4
      %v3363 = vmin.f32 %v3361, %v3362
      %v3364 = vrot.slane %v3363, 2
      %v3365 = vmin.f32 %v3363, %v3364
      %v3366 = vrot.slane %v3365, 1
      %v3367 = vmin.f32 %v3365, %v3366
      %v3368 = vsel %vm444, %v1436, inf
      %v3369 = vrot.slane %v3368, 4
      %v3370 = vmin.f32 %v3368, %v3369
      %v3371 = vrot.slane %v3370, 2
      %v3372 = vmin.f32 %v3370, %v3371
      %v3373 = vrot.slane %v3372, 1
      %v3374 = vmin.f32 %v3372, %v3373
      %v3375 = vsel %vm444, %v1438, inf
      %v3376 = vrot.slane %v3375, 4
      %v3377 = vmin.f32 %v3375, %v3376
      %v3378 = vrot.slane %v3377, 2
      %v3379 = vmin.f32 %v3377, %v3378
      %v3380 = vrot.slane %v3379, 1
      %v3381 = vmin.f32 %v3379, %v3380
      %v3382 = vsel %vm444, %v1441, inf
      %v3383 = vrot.slane %v3382, 4
      %v3384 = vmin.f32 %v3382, %v3383
      %v3385 = vrot.slane %v3384, 2
      %v3386 = vmin.f32 %v3384, %v3385
      %v3387 = vrot.slane %v3386, 1
      %v3388 = vmin.f32 %v3386, %v3387
      %v3389 = vsel %vm444, %v1443, inf
      %v3390 = vrot.slane %v3389, 4
      %v3391 = vmin.f32 %v3389, %v3390
      %v3392 = vrot.slane %v3391, 2
      %v3393 = vmin.f32 %v3391, %v3392
      %v3394 = vrot.slane %v3393, 1
      %v3395 = vmin.f32 %v3393, %v3394
      %v3396 = vsel %vm444, %v1446, inf
      %v3397 = vrot.slane %v3396, 4
      %v3398 = vmin.f32 %v3396, %v3397
      %v3399 = vrot.slane %v3398, 2
      %v3400 = vmin.f32 %v3398, %v3399
      %v3401 = vrot.slane %v3400, 1
      %v3402 = vmin.f32 %v3400, %v3401
      %v3403 = vsel %vm444, %v1448, inf
      %v3404 = vrot.slane %v3403, 4
      %v3405 = vmin.f32 %v3403, %v3404
      %v3406 = vrot.slane %v3405, 2
      %v3407 = vmin.f32 %v3405, %v3406
      %v3408 = vrot.slane %v3407, 1
      %v3409 = vmin.f32 %v3407, %v3408
      %v3410 = vsel %vm444, %v1451, inf
      %v3411 = vrot.slane %v3410, 4
      %v3412 = vmin.f32 %v3410, %v3411
      %v3413 = vrot.slane %v3412, 2
      %v3414 = vmin.f32 %v3412, %v3413
      %v3415 = vrot.slane %v3414, 1
      %v3416 = vmin.f32 %v3414, %v3415
      %v3417 = vsel %vm444, %v1453, inf
      %v3418 = vrot.slane %v3417, 4
      %v3419 = vmin.f32 %v3417, %v3418
      %v3420 = vrot.slane %v3419, 2
      %v3421 = vmin.f32 %v3419, %v3420
      %v3422 = vrot.slane %v3421, 1
      %v3423 = vmin.f32 %v3421, %v3422
      %v3424 = vsel %vm444, %v1456, inf
      %v3425 = vrot.slane %v3424, 4
      %v3426 = vmin.f32 %v3424, %v3425
      %v3427 = vrot.slane %v3426, 2
      %v3428 = vmin.f32 %v3426, %v3427
      %v3429 = vrot.slane %v3428, 1
      %v3430 = vmin.f32 %v3428, %v3429
      %v3431 = vsel %vm444, %v1458, inf
      %v3432 = vrot.slane %v3431, 4
      %v3433 = vmin.f32 %v3431, %v3432
      %v3434 = vrot.slane %v3433, 2
      %v3435 = vmin.f32 %v3433, %v3434
      %v3436 = vrot.slane %v3435, 1
      %v3437 = vmin.f32 %v3435, %v3436
      %v3438 = vsel %vm444, %v1461, inf
      %v3439 = vrot.slane %v3438, 4
      %v3440 = vmin.f32 %v3438, %v3439
      %v3441 = vrot.slane %v3440, 2
      %v3442 = vmin.f32 %v3440, %v3441
      %v3443 = vrot.slane %v3442, 1
      %v3444 = vmin.f32 %v3442, %v3443
      %v3445 = vsel %vm444, %v1463, inf
      %v3446 = vrot.slane %v3445, 4
      %v3447 = vmin.f32 %v3445, %v3446
      %v3448 = vrot.slane %v3447, 2
      %v3449 = vmin.f32 %v3447, %v3448
      %v3450 = vrot.slane %v3449, 1
      %v3451 = vmin.f32 %v3449, %v3450
      %v3452 = vsel %vm444, %v1466, inf
      %v3453 = vrot.slane %v3452, 4
      %v3454 = vmin.f32 %v3452, %v3453
      %v3455 = vrot.slane %v3454, 2
      %v3456 = vmin.f32 %v3454, %v3455
      %v3457 = vrot.slane %v3456, 1
      %v3458 = vmin.f32 %v3456, %v3457
      %v3459 = vsel %vm444, %v1468, inf
      %v3460 = vrot.slane %v3459, 4
      %v3461 = vmin.f32 %v3459, %v3460
      %v3462 = vrot.slane %v3461, 2
      %v3463 = vmin.f32 %v3461, %v3462
      %v3464 = vrot.slane %v3463, 1
      %v3465 = vmin.f32 %v3463, %v3464
      %v3466 = vsel %vm444, %v1471, inf
      %v3467 = vrot.slane %v3466, 4
      %v3468 = vmin.f32 %v3466, %v3467
      %v3469 = vrot.slane %v3468, 2
      %v3470 = vmin.f32 %v3468, %v3469
      %v3471 = vrot.slane %v3470, 1
      %v3472 = vmin.f32 %v3470, %v3471
      %v3473 = vsel %vm444, %v1473, inf
      %v3474 = vrot.slane %v3473, 4
      %v3475 = vmin.f32 %v3473, %v3474
      %v3476 = vrot.slane %v3475, 2
      %v3477 = vmin.f32 %v3475, %v3476
      %v3478 = vrot.slane %v3477, 1
      %v3479 = vmin.f32 %v3477, %v3478
      %v3480 = vsel %vm444, %v1476, inf
      %v3481 = vrot.slane %v3480, 4
      %v3482 = vmin.f32 %v3480, %v3481
      %v3483 = vrot.slane %v3482, 2
      %v3484 = vmin.f32 %v3482, %v3483
      %v3485 = vrot.slane %v3484, 1
      %v3486 = vmin.f32 %v3484, %v3485
      %v3487 = vsel %vm444, %v1478, inf
      %v3488 = vrot.slane %v3487, 4
      %v3489 = vmin.f32 %v3487, %v3488
      %v3490 = vrot.slane %v3489, 2
      %v3491 = vmin.f32 %v3489, %v3490
      %v3492 = vrot.slane %v3491, 1
      %v3493 = vmin.f32 %v3491, %v3492
      %v3494 = vsel %vm444, %v1481, inf
      %v3495 = vrot.slane %v3494, 4
      %v3496 = vmin.f32 %v3494, %v3495
      %v3497 = vrot.slane %v3496, 2
      %v3498 = vmin.f32 %v3496, %v3497
      %v3499 = vrot.slane %v3498, 1
      %v3500 = vmin.f32 %v3498, %v3499
      %v3501 = vsel %vm444, %v1483, inf
      %v3502 = vrot.slane %v3501, 4
      %v3503 = vmin.f32 %v3501, %v3502
      %v3504 = vrot.slane %v3503, 2
      %v3505 = vmin.f32 %v3503, %v3504
      %v3506 = vrot.slane %v3505, 1
      %v3507 = vmin.f32 %v3505, %v3506
      %v3508 = vsel %vm444, %v1486, inf
      %v3509 = vrot.slane %v3508, 4
      %v3510 = vmin.f32 %v3508, %v3509
      %v3511 = vrot.slane %v3510, 2
      %v3512 = vmin.f32 %v3510, %v3511
      %v3513 = vrot.slane %v3512, 1
      %v3514 = vmin.f32 %v3512, %v3513
      %v3515 = vsel %vm444, %v1488, inf
      %v3516 = vrot.slane %v3515, 4
      %v3517 = vmin.f32 %v3515, %v3516
      %v3518 = vrot.slane %v3517, 2
      %v3519 = vmin.f32 %v3517, %v3518
      %v3520 = vrot.slane %v3519, 1
      %v3521 = vmin.f32 %v3519, %v3520
      %v3522 = vsel %vm444, %v1491, inf
      %v3523 = vrot.slane %v3522, 4
      %v3524 = vmin.f32 %v3522, %v3523
      %v3525 = vrot.slane %v3524, 2
      %v3526 = vmin.f32 %v3524, %v3525
      %v3527 = vrot.slane %v3526, 1
      %v3528 = vmin.f32 %v3526, %v3527
      %v3529 = vsel %vm444, %v1493, inf
      %v3530 = vrot.slane %v3529, 4
      %v3531 = vmin.f32 %v3529, %v3530
      %v3532 = vrot.slane %v3531, 2
      %v3533 = vmin.f32 %v3531, %v3532
      %v3534 = vrot.slane %v3533, 1
      %v3535 = vmin.f32 %v3533, %v3534
      %v3536 = vsel %vm444, %v1496, inf
      %v3537 = vrot.slane %v3536, 4
      %v3538 = vmin.f32 %v3536, %v3537
      %v3539 = vrot.slane %v3538, 2
      %v3540 = vmin.f32 %v3538, %v3539
      %v3541 = vrot.slane %v3540, 1
      %v3542 = vmin.f32 %v3540, %v3541
      %v3543 = vsel %vm444, %v1498, inf
      %v3544 = vrot.slane %v3543, 4
      %v3545 = vmin.f32 %v3543, %v3544
      %v3546 = vrot.slane %v3545, 2
      %v3547 = vmin.f32 %v3545, %v3546
      %v3548 = vrot.slane %v3547, 1
      %v3549 = vmin.f32 %v3547, %v3548
      %v3550 = vsel %vm444, %v1501, inf
      %v3551 = vrot.slane %v3550, 4
      %v3552 = vmin.f32 %v3550, %v3551
      %v3553 = vrot.slane %v3552, 2
      %v3554 = vmin.f32 %v3552, %v3553
      %v3555 = vrot.slane %v3554, 1
      %v3556 = vmin.f32 %v3554, %v3555
      %v3557 = vsel %vm444, %v1503, inf
      %v3558 = vrot.slane %v3557, 4
      %v3559 = vmin.f32 %v3557, %v3558
      %v3560 = vrot.slane %v3559, 2
      %v3561 = vmin.f32 %v3559, %v3560
      %v3562 = vrot.slane %v3561, 1
      %v3563 = vmin.f32 %v3561, %v3562
      %v3564 = vsel %vm444, %v1506, inf
      %v3565 = vrot.slane %v3564, 4
      %v3566 = vmin.f32 %v3564, %v3565
      %v3567 = vrot.slane %v3566, 2
      %v3568 = vmin.f32 %v3566, %v3567
      %v3569 = vrot.slane %v3568, 1
      %v3570 = vmin.f32 %v3568, %v3569
      %v3571 = vsel %vm444, %v1508, inf
      %v3572 = vrot.slane %v3571, 4
      %v3573 = vmin.f32 %v3571, %v3572
      %v3574 = vrot.slane %v3573, 2
      %v3575 = vmin.f32 %v3573, %v3574
      %v3576 = vrot.slane %v3575, 1
      %v3577 = vmin.f32 %v3575, %v3576
      %v3578 = vsel %vm444, %v1511, inf
      %v3579 = vrot.slane %v3578, 4
      %v3580 = vmin.f32 %v3578, %v3579
      %v3581 = vrot.slane %v3580, 2
      %v3582 = vmin.f32 %v3580, %v3581
      %v3583 = vrot.slane %v3582, 1
      %v3584 = vmin.f32 %v3582, %v3583
      %v3585 = vsel %vm444, %v1513, inf
      %v3586 = vrot.slane %v3585, 4
      %v3587 = vmin.f32 %v3585, %v3586
      %v3588 = vrot.slane %v3587, 2
      %v3589 = vmin.f32 %v3587, %v3588
      %v3590 = vrot.slane %v3589, 1
      %v3591 = vmin.f32 %v3589, %v3590
      %v3592 = vsel %vm444, %v1516, inf
      %v3593 = vrot.slane %v3592, 4
      %v3594 = vmin.f32 %v3592, %v3593
      %v3595 = vrot.slane %v3594, 2
      %v3596 = vmin.f32 %v3594, %v3595
      %v3597 = vrot.slane %v3596, 1
      %v3598 = vmin.f32 %v3596, %v3597
      %v3599 = vsel %vm444, %v1518, inf
      %v3600 = vrot.slane %v3599, 4
      %v3601 = vmin.f32 %v3599, %v3600
      %v3602 = vrot.slane %v3601, 2
      %v3603 = vmin.f32 %v3601, %v3602
      %v3604 = vrot.slane %v3603, 1
      %v3605 = vmin.f32 %v3603, %v3604
      %v3606 = vsel %vm444, %v1521, inf
      %v3607 = vrot.slane %v3606, 4
      %v3608 = vmin.f32 %v3606, %v3607
      %v3609 = vrot.slane %v3608, 2
      %v3610 = vmin.f32 %v3608, %v3609
      %v3611 = vrot.slane %v3610, 1
      %v3612 = vmin.f32 %v3610, %v3611
      %v3613 = vsel %vm444, %v1523, inf
      %v3614 = vrot.slane %v3613, 4
      %v3615 = vmin.f32 %v3613, %v3614
      %v3616 = vrot.slane %v3615, 2
      %v3617 = vmin.f32 %v3615, %v3616
      %v3618 = vrot.slane %v3617, 1
      %v3619 = vmin.f32 %v3617, %v3618
      %v3620 = vsel %vm444, %v1526, inf
      %v3621 = vrot.slane %v3620, 4
      %v3622 = vmin.f32 %v3620, %v3621
      %v3623 = vrot.slane %v3622, 2
      %v3624 = vmin.f32 %v3622, %v3623
      %v3625 = vrot.slane %v3624, 1
      %v3626 = vmin.f32 %v3624, %v3625
      %v3627 = vsel %vm444, %v1528, inf
      %v3628 = vrot.slane %v3627, 4
      %v3629 = vmin.f32 %v3627, %v3628
      %v3630 = vrot.slane %v3629, 2
      %v3631 = vmin.f32 %v3629, %v3630
      %v3632 = vrot.slane %v3631, 1
      %v3633 = vmin.f32 %v3631, %v3632
      %v3634 = vsel %vm444, %v1531, inf
      %v3635 = vrot.slane %v3634, 4
      %v3636 = vmin.f32 %v3634, %v3635
      %v3637 = vrot.slane %v3636, 2
      %v3638 = vmin.f32 %v3636, %v3637
      %v3639 = vrot.slane %v3638, 1
      %v3640 = vmin.f32 %v3638, %v3639
      %v3641 = vsel %vm444, %v1533, inf
      %v3642 = vrot.slane %v3641, 4
      %v3643 = vmin.f32 %v3641, %v3642
      %v3644 = vrot.slane %v3643, 2
      %v3645 = vmin.f32 %v3643, %v3644
      %v3646 = vrot.slane %v3645, 1
      %v3647 = vmin.f32 %v3645, %v3646
      %v3648 = vsel %vm444, %v1536, inf
      %v3649 = vrot.slane %v3648, 4
      %v3650 = vmin.f32 %v3648, %v3649
      %v3651 = vrot.slane %v3650, 2
      %v3652 = vmin.f32 %v3650, %v3651
      %v3653 = vrot.slane %v3652, 1
      %v3654 = vmin.f32 %v3652, %v3653
      %v3655 = vsel %vm444, %v1538, inf
      %v3656 = vrot.slane %v3655, 4
      %v3657 = vmin.f32 %v3655, %v3656
      %v3658 = vrot.slane %v3657, 2
      %v3659 = vmin.f32 %v3657, %v3658
      %v3660 = vrot.slane %v3659, 1
      %v3661 = vmin.f32 %v3659, %v3660
      %v3662 = vsel %vm444, %v1541, inf
      %v3663 = vrot.slane %v3662, 4
      %v3664 = vmin.f32 %v3662, %v3663
      %v3665 = vrot.slane %v3664, 2
      %v3666 = vmin.f32 %v3664, %v3665
      %v3667 = vrot.slane %v3666, 1
      %v3668 = vmin.f32 %v3666, %v3667
      %v3669 = vsel %vm444, %v1543, inf
      %v3670 = vrot.slane %v3669, 4
      %v3671 = vmin.f32 %v3669, %v3670
      %v3672 = vrot.slane %v3671, 2
      %v3673 = vmin.f32 %v3671, %v3672
      %v3674 = vrot.slane %v3673, 1
      %v3675 = vmin.f32 %v3673, %v3674
      %v3676 = vsel %vm444, %v1546, inf
      %v3677 = vrot.slane %v3676, 4
      %v3678 = vmin.f32 %v3676, %v3677
      %v3679 = vrot.slane %v3678, 2
      %v3680 = vmin.f32 %v3678, %v3679
      %v3681 = vrot.slane %v3680, 1
      %v3682 = vmin.f32 %v3680, %v3681
      %v3683 = vsel %vm444, %v1548, inf
      %v3684 = vrot.slane %v3683, 4
      %v3685 = vmin.f32 %v3683, %v3684
      %v3686 = vrot.slane %v3685, 2
      %v3687 = vmin.f32 %v3685, %v3686
      %v3688 = vrot.slane %v3687, 1
      %v3689 = vmin.f32 %v3687, %v3688
      %v3690 = vsel %vm444, %v1551, inf
      %v3691 = vrot.slane %v3690, 4
      %v3692 = vmin.f32 %v3690, %v3691
      %v3693 = vrot.slane %v3692, 2
      %v3694 = vmin.f32 %v3692, %v3693
      %v3695 = vrot.slane %v3694, 1
      %v3696 = vmin.f32 %v3694, %v3695
      %v3697 = vsel %vm444, %v1553, inf
      %v3698 = vrot.slane %v3697, 4
      %v3699 = vmin.f32 %v3697, %v3698
      %v3700 = vrot.slane %v3699, 2
      %v3701 = vmin.f32 %v3699, %v3700
      %v3702 = vrot.slane %v3701, 1
      %v3703 = vmin.f32 %v3701, %v3702
      %v3704 = vsel %vm444, %v1556, inf
      %v3705 = vrot.slane %v3704, 4
      %v3706 = vmin.f32 %v3704, %v3705
      %v3707 = vrot.slane %v3706, 2
      %v3708 = vmin.f32 %v3706, %v3707
      %v3709 = vrot.slane %v3708, 1
      %v3710 = vmin.f32 %v3708, %v3709
      %v3711 = vsel %vm444, %v1558, inf
      %v3712 = vrot.slane %v3711, 4
      %v3713 = vmin.f32 %v3711, %v3712
      %v3714 = vrot.slane %v3713, 2
      %v3715 = vmin.f32 %v3713, %v3714
      %v3716 = vrot.slane %v3715, 1
      %v3717 = vmin.f32 %v3715, %v3716
      %v3718 = vsel %vm444, %v1561, inf
      %v3719 = vrot.slane %v3718, 4
      %v3720 = vmin.f32 %v3718, %v3719
      %v3721 = vrot.slane %v3720, 2
      %v3722 = vmin.f32 %v3720, %v3721
      %v3723 = vrot.slane %v3722, 1
      %v3724 = vmin.f32 %v3722, %v3723
      %v3725 = vsel %vm444, %v1563, inf
      %v3726 = vrot.slane %v3725, 4
      %v3727 = vmin.f32 %v3725, %v3726
      %v3728 = vrot.slane %v3727, 2
      %v3729 = vmin.f32 %v3727, %v3728
      %v3730 = vrot.slane %v3729, 1
      %v3731 = vmin.f32 %v3729, %v3730
      %v3732 = vsel %vm444, %v1566, inf
      %v3733 = vrot.slane %v3732, 4
      %v3734 = vmin.f32 %v3732, %v3733
      %v3735 = vrot.slane %v3734, 2
      %v3736 = vmin.f32 %v3734, %v3735
      %v3737 = vrot.slane %v3736, 1
      %v3738 = vmin.f32 %v3736, %v3737
      %v3739 = vsel %vm444, %v1568, inf
      %v3740 = vrot.slane %v3739, 4
      %v3741 = vmin.f32 %v3739, %v3740
      %v3742 = vrot.slane %v3741, 2
      %v3743 = vmin.f32 %v3741, %v3742
      %v3744 = vrot.slane %v3743, 1
      %v3745 = vmin.f32 %v3743, %v3744
      %v3746 = vadd.f32 %v3304, %v487
      %v3747 = vadd.f32 %v3311, %v3114
      %v3748 = vadd.f32 %v3318, %v3115
      %v3749 = vadd.f32 %v3325, %v3116
      %v3750 = vadd.f32 %v3332, %v3117
      %v3751 = vadd.f32 %v3339, %v3118
      %v3752 = vadd.f32 %v3346, %v3119
      %v3753 = vadd.f32 %v3353, %v3120
      %v3754 = vadd.f32 %v3360, %v490
      %v3755 = vadd.f32 %v3367, %v3121
      %v3756 = vadd.f32 %v3374, %v3122
      %v3757 = vadd.f32 %v3381, %v3123
      %v3758 = vadd.f32 %v3388, %v3124
      %v3759 = vadd.f32 %v3395, %v3125
      %v3760 = vadd.f32 %v3402, %v3126
      %v3761 = vadd.f32 %v3409, %v3127
      %v3762 = vadd.f32 %v3416, %v493
      %v3763 = vadd.f32 %v3423, %v3128
      %v3764 = vadd.f32 %v3430, %v3129
      %v3765 = vadd.f32 %v3437, %v3130
      %v3766 = vadd.f32 %v3444, %v3131
      %v3767 = vadd.f32 %v3451, %v3132
      %v3768 = vadd.f32 %v3458, %v3133
      %v3769 = vadd.f32 %v3465, %v3134
      %v3770 = vadd.f32 %v3472, %v496
      %v3771 = vadd.f32 %v3479, %v3135
      %v3772 = vadd.f32 %v3486, %v3136
      %v3773 = vadd.f32 %v3493, %v3137
      %v3774 = vadd.f32 %v3500, %v3138
      %v3775 = vadd.f32 %v3507, %v3139
      %v3776 = vadd.f32 %v3514, %v3140
      %v3777 = vadd.f32 %v3521, %v3141
      %v3778 = vadd.f32 %v3528, %v499
      %v3779 = vadd.f32 %v3535, %v3142
      %v3780 = vadd.f32 %v3542, %v3143
      %v3781 = vadd.f32 %v3549, %v3144
      %v3782 = vadd.f32 %v3556, %v3145
      %v3783 = vadd.f32 %v3563, %v3146
      %v3784 = vadd.f32 %v3570, %v3147
      %v3785 = vadd.f32 %v3577, %v3148
      %v3786 = vadd.f32 %v3584, %v502
      %v3787 = vadd.f32 %v3591, %v3149
      %v3788 = vadd.f32 %v3598, %v3150
      %v3789 = vadd.f32 %v3605, %v3151
      %v3790 = vadd.f32 %v3612, %v3152
      %v3791 = vadd.f32 %v3619, %v3153
      %v3792 = vadd.f32 %v3626, %v3154
      %v3793 = vadd.f32 %v3633, %v3155
      %v3794 = vadd.f32 %v3640, %v505
      %v3795 = vadd.f32 %v3647, %v3156
      %v3796 = vadd.f32 %v3654, %v3157
      %v3797 = vadd.f32 %v3661, %v3158
      %v3798 = vadd.f32 %v3668, %v3159
      %v3799 = vadd.f32 %v3675, %v3160
      %v3800 = vadd.f32 %v3682, %v3161
      %v3801 = vadd.f32 %v3689, %v3162
      %v3802 = vadd.f32 %v3696, %v508
      %v3803 = vadd.f32 %v3703, %v3163
      %v3804 = vadd.f32 %v3710, %v3164
      %v3805 = vadd.f32 %v3717, %v3165
      %v3806 = vadd.f32 %v3724, %v3166
      %v3807 = vadd.f32 %v3731, %v3167
      %v3808 = vadd.f32 %v3738, %v3168
      %v3809 = vadd.f32 %v3745, %v3169
      %v3810 = vmul.f32 %v2018, %v2018
      %v3811 = vmul.f32 %v2019, %v2019
      %v3812 = vmul.f32 %v2020, %v2020
      %v3813 = vmul.f32 %v2021, %v2021
      %v3814 = vmul.f32 %v2022, %v2022
      %v3815 = vmul.f32 %v2023, %v2023
      %v3816 = vmul.f32 %v2024, %v2024
      %v3817 = vmul.f32 %v2025, %v2025
      %v3818 = vmul.f32 %v2026, %v2026
      %v3819 = vmul.f32 %v2027, %v2027
      %v3820 = vmul.f32 %v2028, %v2028
      %v3821 = vmul.f32 %v2029, %v2029
      %v3822 = vmul.f32 %v2030, %v2030
      %v3823 = vmul.f32 %v2031, %v2031
      %v3824 = vmul.f32 %v2032, %v2032
      %v3825 = vmul.f32 %v2033, %v2033
      %v3826 = vmul.f32 %v2034, %v2034
      %v3827 = vmul.f32 %v2035, %v2035
      %v3828 = vmul.f32 %v2036, %v2036
      %v3829 = vmul.f32 %v2037, %v2037
      %v3830 = vmul.f32 %v2038, %v2038
      %v3831 = vmul.f32 %v2039, %v2039
      %v3832 = vmul.f32 %v2040, %v2040
      %v3833 = vmul.f32 %v2041, %v2041
      %v3834 = vmul.f32 %v2042, %v2042
      %v3835 = vmul.f32 %v2043, %v2043
      %v3836 = vmul.f32 %v2044, %v2044
      %v3837 = vmul.f32 %v2045, %v2045
      %v3838 = vmul.f32 %v2046, %v2046
      %v3839 = vmul.f32 %v2047, %v2047
      %v3840 = vmul.f32 %v2048, %v2048
      %v3841 = vmul.f32 %v2049, %v2049
      %v3842 = vmul.f32 %v2050, %v2050
      %v3843 = vmul.f32 %v2051, %v2051
      %v3844 = vmul.f32 %v2052, %v2052
      %v3845 = vmul.f32 %v2053, %v2053
      %v3846 = vmul.f32 %v2054, %v2054
      %v3847 = vmul.f32 %v2055, %v2055
      %v3848 = vmul.f32 %v2056, %v2056
      %v3849 = vmul.f32 %v2057, %v2057
      %v3850 = vmul.f32 %v2058, %v2058
      %v3851 = vmul.f32 %v2059, %v2059
      %v3852 = vmul.f32 %v2060, %v2060
      %v3853 = vmul.f32 %v2061, %v2061
      %v3854 = vmul.f32 %v2062, %v2062
      %v3855 = vmul.f32 %v2063, %v2063
      %v3856 = vmul.f32 %v2064, %v2064
      %v3857 = vmul.f32 %v2065, %v2065
      %v3858 = vmul.f32 %v2066, %v2066
      %v3859 = vmul.f32 %v2067, %v2067
      %v3860 = vmul.f32 %v2068, %v2068
      %v3861 = vmul.f32 %v2069, %v2069
      %v3862 = vmul.f32 %v2070, %v2070
      %v3863 = vmul.f32 %v2071, %v2071
      %v3864 = vmul.f32 %v2072, %v2072
      %v3865 = vmul.f32 %v2073, %v2073
      %v3866 = vmul.f32 %v2074, %v2074
      %v3867 = vmul.f32 %v2075, %v2075
      %v3868 = vmul.f32 %v2076, %v2076
      %v3869 = vmul.f32 %v2077, %v2077
      %v3870 = vmul.f32 %v2078, %v2078
      %v3871 = vmul.f32 %v2079, %v2079
      %v3872 = vmul.f32 %v2080, %v2080
      %v3873 = vmul.f32 %v2081, %v2081
      %v3874 = vsub.f32 %v2594, %v3810
      %v3875 = vsub.f32 %v2595, %v3811
      %v3876 = vsub.f32 %v2596, %v3812
      %v3877 = vsub.f32 %v2597, %v3813
      %v3878 = vsub.f32 %v2598, %v3814
      %v3879 = vsub.f32 %v2599, %v3815
      %v3880 = vsub.f32 %v2600, %v3816
      %v3881 = vsub.f32 %v2601, %v3817
      %v3882 = vsub.f32 %v2602, %v3818
      %v3883 = vsub.f32 %v2603, %v3819
      %v3884 = vsub.f32 %v2604, %v3820
      %v3885 = vsub.f32 %v2605, %v3821
      %v3886 = vsub.f32 %v2606, %v3822
      %v3887 = vsub.f32 %v2607, %v3823
      %v3888 = vsub.f32 %v2608, %v3824
      %v3889 = vsub.f32 %v2609, %v3825
      %v3890 = vsub.f32 %v2610, %v3826
      %v3891 = vsub.f32 %v2611, %v3827
      %v3892 = vsub.f32 %v2612, %v3828
      %v3893 = vsub.f32 %v2613, %v3829
      %v3894 = vsub.f32 %v2614, %v3830
      %v3895 = vsub.f32 %v2615, %v3831
      %v3896 = vsub.f32 %v2616, %v3832
      %v3897 = vsub.f32 %v2617, %v3833
      %v3898 = vsub.f32 %v2618, %v3834
      %v3899 = vsub.f32 %v2619, %v3835
      %v3900 = vsub.f32 %v2620, %v3836
      %v3901 = vsub.f32 %v2621, %v3837
      %v3902 = vsub.f32 %v2622, %v3838
      %v3903 = vsub.f32 %v2623, %v3839
      %v3904 = vsub.f32 %v2624, %v3840
      %v3905 = vsub.f32 %v2625, %v3841
      %v3906 = vsub.f32 %v2626, %v3842
      %v3907 = vsub.f32 %v2627, %v3843
      %v3908 = vsub.f32 %v2628, %v3844
      %v3909 = vsub.f32 %v2629, %v3845
      %v3910 = vsub.f32 %v2630, %v3846
      %v3911 = vsub.f32 %v2631, %v3847
      %v3912 = vsub.f32 %v2632, %v3848
      %v3913 = vsub.f32 %v2633, %v3849
      %v3914 = vsub.f32 %v2634, %v3850
      %v3915 = vsub.f32 %v2635, %v3851
      %v3916 = vsub.f32 %v2636, %v3852
      %v3917 = vsub.f32 %v2637, %v3853
      %v3918 = vsub.f32 %v2638, %v3854
      %v3919 = vsub.f32 %v2639, %v3855
      %v3920 = vsub.f32 %v2640, %v3856
      %v3921 = vsub.f32 %v2641, %v3857
      %v3922 = vsub.f32 %v2642, %v3858
      %v3923 = vsub.f32 %v2643, %v3859
      %v3924 = vsub.f32 %v2644, %v3860
      %v3925 = vsub.f32 %v2645, %v3861
      %v3926 = vsub.f32 %v2646, %v3862
      %v3927 = vsub.f32 %v2647, %v3863
      %v3928 = vsub.f32 %v2648, %v3864
      %v3929 = vsub.f32 %v2649, %v3865
      %v3930 = vsub.f32 %v2650, %v3866
      %v3931 = vsub.f32 %v2651, %v3867
      %v3932 = vsub.f32 %v2652, %v3868
      %v3933 = vsub.f32 %v2653, %v3869
      %v3934 = vsub.f32 %v2654, %v3870
      %v3935 = vsub.f32 %v2655, %v3871
      %v3936 = vsub.f32 %v2656, %v3872
      %v3937 = vsub.f32 %v2657, %v3873
      %v3938 = vmax.f32 %v3874, 0.0
      %v3939 = vmax.f32 %v3875, 0.0
      %v3940 = vmax.f32 %v3876, 0.0
      %v3941 = vmax.f32 %v3877, 0.0
      %v3942 = vmax.f32 %v3878, 0.0
      %v3943 = vmax.f32 %v3879, 0.0
      %v3944 = vmax.f32 %v3880, 0.0
      %v3945 = vmax.f32 %v3881, 0.0
      %v3946 = vmax.f32 %v3882, 0.0
      %v3947 = vmax.f32 %v3883, 0.0
      %v3948 = vmax.f32 %v3884, 0.0
      %v3949 = vmax.f32 %v3885, 0.0
      %v3950 = vmax.f32 %v3886, 0.0
      %v3951 = vmax.f32 %v3887, 0.0
      %v3952 = vmax.f32 %v3888, 0.0
      %v3953 = vmax.f32 %v3889, 0.0
      %v3954 = vmax.f32 %v3890, 0.0
      %v3955 = vmax.f32 %v3891, 0.0
      %v3956 = vmax.f32 %v3892, 0.0
      %v3957 = vmax.f32 %v3893, 0.0
      %v3958 = vmax.f32 %v3894, 0.0
      %v3959 = vmax.f32 %v3895, 0.0
      %v3960 = vmax.f32 %v3896, 0.0
      %v3961 = vmax.f32 %v3897, 0.0
      %v3962 = vmax.f32 %v3898, 0.0
      %v3963 = vmax.f32 %v3899, 0.0
      %v3964 = vmax.f32 %v3900, 0.0
      %v3965 = vmax.f32 %v3901, 0.0
      %v3966 = vmax.f32 %v3902, 0.0
      %v3967 = vmax.f32 %v3903, 0.0
      %v3968 = vmax.f32 %v3904, 0.0
      %v3969 = vmax.f32 %v3905, 0.0
      %v3970 = vmax.f32 %v3906, 0.0
      %v3971 = vmax.f32 %v3907, 0.0
      %v3972 = vmax.f32 %v3908, 0.0
      %v3973 = vmax.f32 %v3909, 0.0
      %v3974 = vmax.f32 %v3910, 0.0
      %v3975 = vmax.f32 %v3911, 0.0
      %v3976 = vmax.f32 %v3912, 0.0
      %v3977 = vmax.f32 %v3913, 0.0
      %v3978 = vmax.f32 %v3914, 0.0
      %v3979 = vmax.f32 %v3915, 0.0
      %v3980 = vmax.f32 %v3916, 0.0
      %v3981 = vmax.f32 %v3917, 0.0
      %v3982 = vmax.f32 %v3918, 0.0
      %v3983 = vmax.f32 %v3919, 0.0
      %v3984 = vmax.f32 %v3920, 0.0
      %v3985 = vmax.f32 %v3921, 0.0
      %v3986 = vmax.f32 %v3922, 0.0
      %v3987 = vmax.f32 %v3923, 0.0
      %v3988 = vmax.f32 %v3924, 0.0
      %v3989 = vmax.f32 %v3925, 0.0
      %v3990 = vmax.f32 %v3926, 0.0
      %v3991 = vmax.f32 %v3927, 0.0
      %v3992 = vmax.f32 %v3928, 0.0
      %v3993 = vmax.f32 %v3929, 0.0
      %v3994 = vmax.f32 %v3930, 0.0
      %v3995 = vmax.f32 %v3931, 0.0
      %v3996 = vmax.f32 %v3932, 0.0
      %v3997 = vmax.f32 %v3933, 0.0
      %v3998 = vmax.f32 %v3934, 0.0
      %v3999 = vmax.f32 %v3935, 0.0
      %v4000 = vmax.f32 %v3936, 0.0
      %v4001 = vmax.f32 %v3937, 0.0
      %v4002 = vadd.f32 %v3938, 1e-05
      %v4003 = vadd.f32 %v3939, 1e-05
      %v4004 = vadd.f32 %v3940, 1e-05
      %v4005 = vadd.f32 %v3941, 1e-05
      %v4006 = vadd.f32 %v3942, 1e-05
      %v4007 = vadd.f32 %v3943, 1e-05
      %v4008 = vadd.f32 %v3944, 1e-05
      %v4009 = vadd.f32 %v3945, 1e-05
      %v4010 = vadd.f32 %v3946, 1e-05
      %v4011 = vadd.f32 %v3947, 1e-05
      %v4012 = vadd.f32 %v3948, 1e-05
      %v4013 = vadd.f32 %v3949, 1e-05
      %v4014 = vadd.f32 %v3950, 1e-05
      %v4015 = vadd.f32 %v3951, 1e-05
      %v4016 = vadd.f32 %v3952, 1e-05
      %v4017 = vadd.f32 %v3953, 1e-05
      %v4018 = vadd.f32 %v3954, 1e-05
      %v4019 = vadd.f32 %v3955, 1e-05
      %v4020 = vadd.f32 %v3956, 1e-05
      %v4021 = vadd.f32 %v3957, 1e-05
      %v4022 = vadd.f32 %v3958, 1e-05
      %v4023 = vadd.f32 %v3959, 1e-05
      %v4024 = vadd.f32 %v3960, 1e-05
      %v4025 = vadd.f32 %v3961, 1e-05
      %v4026 = vadd.f32 %v3962, 1e-05
      %v4027 = vadd.f32 %v3963, 1e-05
      %v4028 = vadd.f32 %v3964, 1e-05
      %v4029 = vadd.f32 %v3965, 1e-05
      %v4030 = vadd.f32 %v3966, 1e-05
      %v4031 = vadd.f32 %v3967, 1e-05
      %v4032 = vadd.f32 %v3968, 1e-05
      %v4033 = vadd.f32 %v3969, 1e-05
      %v4034 = vadd.f32 %v3970, 1e-05
      %v4035 = vadd.f32 %v3971, 1e-05
      %v4036 = vadd.f32 %v3972, 1e-05
      %v4037 = vadd.f32 %v3973, 1e-05
      %v4038 = vadd.f32 %v3974, 1e-05
      %v4039 = vadd.f32 %v3975, 1e-05
      %v4040 = vadd.f32 %v3976, 1e-05
      %v4041 = vadd.f32 %v3977, 1e-05
      %v4042 = vadd.f32 %v3978, 1e-05
      %v4043 = vadd.f32 %v3979, 1e-05
      %v4044 = vadd.f32 %v3980, 1e-05
      %v4045 = vadd.f32 %v3981, 1e-05
      %v4046 = vadd.f32 %v3982, 1e-05
      %v4047 = vadd.f32 %v3983, 1e-05
      %v4048 = vadd.f32 %v3984, 1e-05
      %v4049 = vadd.f32 %v3985, 1e-05
      %v4050 = vadd.f32 %v3986, 1e-05
      %v4051 = vadd.f32 %v3987, 1e-05
      %v4052 = vadd.f32 %v3988, 1e-05
      %v4053 = vadd.f32 %v3989, 1e-05
      %v4054 = vadd.f32 %v3990, 1e-05
      %v4055 = vadd.f32 %v3991, 1e-05
      %v4056 = vadd.f32 %v3992, 1e-05
      %v4057 = vadd.f32 %v3993, 1e-05
      %v4058 = vadd.f32 %v3994, 1e-05
      %v4059 = vadd.f32 %v3995, 1e-05
      %v4060 = vadd.f32 %v3996, 1e-05
      %v4061 = vadd.f32 %v3997, 1e-05
      %v4062 = vadd.f32 %v3998, 1e-05
      %v4063 = vadd.f32 %v3999, 1e-05
      %v4064 = vadd.f32 %v4000, 1e-05
      %v4065 = vadd.f32 %v4001, 1e-05
      %v4066 = vrsqrt.pop %v4002
      %v4067 = vmul.f32 %v4066, %v4002
      %v4068 = vmul.f32 %v4067, %v4066
      %v4069 = vmul.f32 0.5, %v4068
      %v4070 = vsub.f32 1.5, %v4069
      %v4071 = vmul.f32 %v4066, %v4070
      %v4072 = vmul.f32 %v4002, %v4071
      %vm4073 = vcmp.eq.f32.partialorder %v4002, inf
      %v4074 = vsel %vm4073, %v4002, %v4072
      %vm4075 = vcmp.eq.f32.partialorder %v4002, 0.0
      %v4076 = vand.u32 %v4002, 2147483648
      %v4077 = vsel %vm4075, %v4076, %v4074
      %v4078 = vrsqrt.pop %v4003
      %v4079 = vmul.f32 %v4078, %v4003
      %v4080 = vmul.f32 %v4079, %v4078
      %v4081 = vmul.f32 0.5, %v4080
      %v4082 = vsub.f32 1.5, %v4081
      %v4083 = vmul.f32 %v4078, %v4082
      %v4084 = vmul.f32 %v4003, %v4083
      %vm4085 = vcmp.eq.f32.partialorder %v4003, inf
      %v4086 = vsel %vm4085, %v4003, %v4084
      %vm4087 = vcmp.eq.f32.partialorder %v4003, 0.0
      %v4088 = vand.u32 %v4003, 2147483648
      %v4089 = vsel %vm4087, %v4088, %v4086
      %v4090 = vrsqrt.pop %v4004
      %v4091 = vmul.f32 %v4090, %v4004
      %v4092 = vmul.f32 %v4091, %v4090
      %v4093 = vmul.f32 0.5, %v4092
      %v4094 = vsub.f32 1.5, %v4093
      %v4095 = vmul.f32 %v4090, %v4094
      %v4096 = vmul.f32 %v4004, %v4095
      %vm4097 = vcmp.eq.f32.partialorder %v4004, inf
      %v4098 = vsel %vm4097, %v4004, %v4096
      %vm4099 = vcmp.eq.f32.partialorder %v4004, 0.0
      %v4100 = vand.u32 %v4004, 2147483648
      %v4101 = vsel %vm4099, %v4100, %v4098
      %v4102 = vrsqrt.pop %v4005
      %v4103 = vmul.f32 %v4102, %v4005
      %v4104 = vmul.f32 %v4103, %v4102
      %v4105 = vmul.f32 0.5, %v4104
      %v4106 = vsub.f32 1.5, %v4105
      %v4107 = vmul.f32 %v4102, %v4106
      %v4108 = vmul.f32 %v4005, %v4107
      %vm4109 = vcmp.eq.f32.partialorder %v4005, inf
      %v4110 = vsel %vm4109, %v4005, %v4108
      %vm4111 = vcmp.eq.f32.partialorder %v4005, 0.0
      %v4112 = vand.u32 %v4005, 2147483648
      %v4113 = vsel %vm4111, %v4112, %v4110
      %v4114 = vrsqrt.pop %v4006
      %v4115 = vmul.f32 %v4114, %v4006
      %v4116 = vmul.f32 %v4115, %v4114
      %v4117 = vmul.f32 0.5, %v4116
      %v4118 = vsub.f32 1.5, %v4117
      %v4119 = vmul.f32 %v4114, %v4118
      %v4120 = vmul.f32 %v4006, %v4119
      %vm4121 = vcmp.eq.f32.partialorder %v4006, inf
      %v4122 = vsel %vm4121, %v4006, %v4120
      %vm4123 = vcmp.eq.f32.partialorder %v4006, 0.0
      %v4124 = vand.u32 %v4006, 2147483648
      %v4125 = vsel %vm4123, %v4124, %v4122
      %v4126 = vrsqrt.pop %v4007
      %v4127 = vmul.f32 %v4126, %v4007
      %v4128 = vmul.f32 %v4127, %v4126
      %v4129 = vmul.f32 0.5, %v4128
      %v4130 = vsub.f32 1.5, %v4129
      %v4131 = vmul.f32 %v4126, %v4130
      %v4132 = vmul.f32 %v4007, %v4131
      %vm4133 = vcmp.eq.f32.partialorder %v4007, inf
      %v4134 = vsel %vm4133, %v4007, %v4132
      %vm4135 = vcmp.eq.f32.partialorder %v4007, 0.0
      %v4136 = vand.u32 %v4007, 2147483648
      %v4137 = vsel %vm4135, %v4136, %v4134
      %v4138 = vrsqrt.pop %v4008
      %v4139 = vmul.f32 %v4138, %v4008
      %v4140 = vmul.f32 %v4139, %v4138
      %v4141 = vmul.f32 0.5, %v4140
      %v4142 = vsub.f32 1.5, %v4141
      %v4143 = vmul.f32 %v4138, %v4142
      %v4144 = vmul.f32 %v4008, %v4143
      %vm4145 = vcmp.eq.f32.partialorder %v4008, inf
      %v4146 = vsel %vm4145, %v4008, %v4144
      %vm4147 = vcmp.eq.f32.partialorder %v4008, 0.0
      %v4148 = vand.u32 %v4008, 2147483648
      %v4149 = vsel %vm4147, %v4148, %v4146
      %v4150 = vrsqrt.pop %v4009
      %v4151 = vmul.f32 %v4150, %v4009
      %v4152 = vmul.f32 %v4151, %v4150
      %v4153 = vmul.f32 0.5, %v4152
      %v4154 = vsub.f32 1.5, %v4153
      %v4155 = vmul.f32 %v4150, %v4154
      %v4156 = vmul.f32 %v4009, %v4155
      %vm4157 = vcmp.eq.f32.partialorder %v4009, inf
      %v4158 = vsel %vm4157, %v4009, %v4156
      %vm4159 = vcmp.eq.f32.partialorder %v4009, 0.0
      %v4160 = vand.u32 %v4009, 2147483648
      %v4161 = vsel %vm4159, %v4160, %v4158
      %v4162 = vrsqrt.pop %v4010
      %v4163 = vmul.f32 %v4162, %v4010
      %v4164 = vmul.f32 %v4163, %v4162
      %v4165 = vmul.f32 0.5, %v4164
      %v4166 = vsub.f32 1.5, %v4165
      %v4167 = vmul.f32 %v4162, %v4166
      %v4168 = vmul.f32 %v4010, %v4167
      %vm4169 = vcmp.eq.f32.partialorder %v4010, inf
      %v4170 = vsel %vm4169, %v4010, %v4168
      %vm4171 = vcmp.eq.f32.partialorder %v4010, 0.0
      %v4172 = vand.u32 %v4010, 2147483648
      %v4173 = vsel %vm4171, %v4172, %v4170
      %v4174 = vrsqrt.pop %v4011
      %v4175 = vmul.f32 %v4174, %v4011
      %v4176 = vmul.f32 %v4175, %v4174
      %v4177 = vmul.f32 0.5, %v4176
      %v4178 = vsub.f32 1.5, %v4177
      %v4179 = vmul.f32 %v4174, %v4178
      %v4180 = vmul.f32 %v4011, %v4179
      %vm4181 = vcmp.eq.f32.partialorder %v4011, inf
      %v4182 = vsel %vm4181, %v4011, %v4180
      %vm4183 = vcmp.eq.f32.partialorder %v4011, 0.0
      %v4184 = vand.u32 %v4011, 2147483648
      %v4185 = vsel %vm4183, %v4184, %v4182
      %v4186 = vrsqrt.pop %v4012
      %v4187 = vmul.f32 %v4186, %v4012
      %v4188 = vmul.f32 %v4187, %v4186
      %v4189 = vmul.f32 0.5, %v4188
      %v4190 = vsub.f32 1.5, %v4189
      %v4191 = vmul.f32 %v4186, %v4190
      %v4192 = vmul.f32 %v4012, %v4191
      %vm4193 = vcmp.eq.f32.partialorder %v4012, inf
      %v4194 = vsel %vm4193, %v4012, %v4192
      %vm4195 = vcmp.eq.f32.partialorder %v4012, 0.0
      %v4196 = vand.u32 %v4012, 2147483648
      %v4197 = vsel %vm4195, %v4196, %v4194
      %v4198 = vrsqrt.pop %v4013
      %v4199 = vmul.f32 %v4198, %v4013
      %v4200 = vmul.f32 %v4199, %v4198
      %v4201 = vmul.f32 0.5, %v4200
      %v4202 = vsub.f32 1.5, %v4201
      %v4203 = vmul.f32 %v4198, %v4202
      %v4204 = vmul.f32 %v4013, %v4203
      %vm4205 = vcmp.eq.f32.partialorder %v4013, inf
      %v4206 = vsel %vm4205, %v4013, %v4204
      %vm4207 = vcmp.eq.f32.partialorder %v4013, 0.0
      %v4208 = vand.u32 %v4013, 2147483648
      %v4209 = vsel %vm4207, %v4208, %v4206
      %v4210 = vrsqrt.pop %v4014
      %v4211 = vmul.f32 %v4210, %v4014
      %v4212 = vmul.f32 %v4211, %v4210
      %v4213 = vmul.f32 0.5, %v4212
      %v4214 = vsub.f32 1.5, %v4213
      %v4215 = vmul.f32 %v4210, %v4214
      %v4216 = vmul.f32 %v4014, %v4215
      %vm4217 = vcmp.eq.f32.partialorder %v4014, inf
      %v4218 = vsel %vm4217, %v4014, %v4216
      %vm4219 = vcmp.eq.f32.partialorder %v4014, 0.0
      %v4220 = vand.u32 %v4014, 2147483648
      %v4221 = vsel %vm4219, %v4220, %v4218
      %v4222 = vrsqrt.pop %v4015
      %v4223 = vmul.f32 %v4222, %v4015
      %v4224 = vmul.f32 %v4223, %v4222
      %v4225 = vmul.f32 0.5, %v4224
      %v4226 = vsub.f32 1.5, %v4225
      %v4227 = vmul.f32 %v4222, %v4226
      %v4228 = vmul.f32 %v4015, %v4227
      %vm4229 = vcmp.eq.f32.partialorder %v4015, inf
      %v4230 = vsel %vm4229, %v4015, %v4228
      %vm4231 = vcmp.eq.f32.partialorder %v4015, 0.0
      %v4232 = vand.u32 %v4015, 2147483648
      %v4233 = vsel %vm4231, %v4232, %v4230
      %v4234 = vrsqrt.pop %v4016
      %v4235 = vmul.f32 %v4234, %v4016
      %v4236 = vmul.f32 %v4235, %v4234
      %v4237 = vmul.f32 0.5, %v4236
      %v4238 = vsub.f32 1.5, %v4237
      %v4239 = vmul.f32 %v4234, %v4238
      %v4240 = vmul.f32 %v4016, %v4239
      %vm4241 = vcmp.eq.f32.partialorder %v4016, inf
      %v4242 = vsel %vm4241, %v4016, %v4240
      %vm4243 = vcmp.eq.f32.partialorder %v4016, 0.0
      %v4244 = vand.u32 %v4016, 2147483648
      %v4245 = vsel %vm4243, %v4244, %v4242
      %v4246 = vrsqrt.pop %v4017
      %v4247 = vmul.f32 %v4246, %v4017
      %v4248 = vmul.f32 %v4247, %v4246
      %v4249 = vmul.f32 0.5, %v4248
      %v4250 = vsub.f32 1.5, %v4249
      %v4251 = vmul.f32 %v4246, %v4250
      %v4252 = vmul.f32 %v4017, %v4251
      %vm4253 = vcmp.eq.f32.partialorder %v4017, inf
      %v4254 = vsel %vm4253, %v4017, %v4252
      %vm4255 = vcmp.eq.f32.partialorder %v4017, 0.0
      %v4256 = vand.u32 %v4017, 2147483648
      %v4257 = vsel %vm4255, %v4256, %v4254
      %v4258 = vrsqrt.pop %v4018
      %v4259 = vmul.f32 %v4258, %v4018
      %v4260 = vmul.f32 %v4259, %v4258
      %v4261 = vmul.f32 0.5, %v4260
      %v4262 = vsub.f32 1.5, %v4261
      %v4263 = vmul.f32 %v4258, %v4262
      %v4264 = vmul.f32 %v4018, %v4263
      %vm4265 = vcmp.eq.f32.partialorder %v4018, inf
      %v4266 = vsel %vm4265, %v4018, %v4264
      %vm4267 = vcmp.eq.f32.partialorder %v4018, 0.0
      %v4268 = vand.u32 %v4018, 2147483648
      %v4269 = vsel %vm4267, %v4268, %v4266
      %v4270 = vrsqrt.pop %v4019
      %v4271 = vmul.f32 %v4270, %v4019
      %v4272 = vmul.f32 %v4271, %v4270
      %v4273 = vmul.f32 0.5, %v4272
      %v4274 = vsub.f32 1.5, %v4273
      %v4275 = vmul.f32 %v4270, %v4274
      %v4276 = vmul.f32 %v4019, %v4275
      %vm4277 = vcmp.eq.f32.partialorder %v4019, inf
      %v4278 = vsel %vm4277, %v4019, %v4276
      %vm4279 = vcmp.eq.f32.partialorder %v4019, 0.0
      %v4280 = vand.u32 %v4019, 2147483648
      %v4281 = vsel %vm4279, %v4280, %v4278
      %v4282 = vrsqrt.pop %v4020
      %v4283 = vmul.f32 %v4282, %v4020
      %v4284 = vmul.f32 %v4283, %v4282
      %v4285 = vmul.f32 0.5, %v4284
      %v4286 = vsub.f32 1.5, %v4285
      %v4287 = vmul.f32 %v4282, %v4286
      %v4288 = vmul.f32 %v4020, %v4287
      %vm4289 = vcmp.eq.f32.partialorder %v4020, inf
      %v4290 = vsel %vm4289, %v4020, %v4288
      %vm4291 = vcmp.eq.f32.partialorder %v4020, 0.0
      %v4292 = vand.u32 %v4020, 2147483648
      %v4293 = vsel %vm4291, %v4292, %v4290
      %v4294 = vrsqrt.pop %v4021
      %v4295 = vmul.f32 %v4294, %v4021
      %v4296 = vmul.f32 %v4295, %v4294
      %v4297 = vmul.f32 0.5, %v4296
      %v4298 = vsub.f32 1.5, %v4297
      %v4299 = vmul.f32 %v4294, %v4298
      %v4300 = vmul.f32 %v4021, %v4299
      %vm4301 = vcmp.eq.f32.partialorder %v4021, inf
      %v4302 = vsel %vm4301, %v4021, %v4300
      %vm4303 = vcmp.eq.f32.partialorder %v4021, 0.0
      %v4304 = vand.u32 %v4021, 2147483648
      %v4305 = vsel %vm4303, %v4304, %v4302
      %v4306 = vrsqrt.pop %v4022
      %v4307 = vmul.f32 %v4306, %v4022
      %v4308 = vmul.f32 %v4307, %v4306
      %v4309 = vmul.f32 0.5, %v4308
      %v4310 = vsub.f32 1.5, %v4309
      %v4311 = vmul.f32 %v4306, %v4310
      %v4312 = vmul.f32 %v4022, %v4311
      %vm4313 = vcmp.eq.f32.partialorder %v4022, inf
      %v4314 = vsel %vm4313, %v4022, %v4312
      %vm4315 = vcmp.eq.f32.partialorder %v4022, 0.0
      %v4316 = vand.u32 %v4022, 2147483648
      %v4317 = vsel %vm4315, %v4316, %v4314
      %v4318 = vrsqrt.pop %v4023
      %v4319 = vmul.f32 %v4318, %v4023
      %v4320 = vmul.f32 %v4319, %v4318
      %v4321 = vmul.f32 0.5, %v4320
      %v4322 = vsub.f32 1.5, %v4321
      %v4323 = vmul.f32 %v4318, %v4322
      %v4324 = vmul.f32 %v4023, %v4323
      %vm4325 = vcmp.eq.f32.partialorder %v4023, inf
      %v4326 = vsel %vm4325, %v4023, %v4324
      %vm4327 = vcmp.eq.f32.partialorder %v4023, 0.0
      %v4328 = vand.u32 %v4023, 2147483648
      %v4329 = vsel %vm4327, %v4328, %v4326
      %v4330 = vrsqrt.pop %v4024
      %v4331 = vmul.f32 %v4330, %v4024
      %v4332 = vmul.f32 %v4331, %v4330
      %v4333 = vmul.f32 0.5, %v4332
      %v4334 = vsub.f32 1.5, %v4333
      %v4335 = vmul.f32 %v4330, %v4334
      %v4336 = vmul.f32 %v4024, %v4335
      %vm4337 = vcmp.eq.f32.partialorder %v4024, inf
      %v4338 = vsel %vm4337, %v4024, %v4336
      %vm4339 = vcmp.eq.f32.partialorder %v4024, 0.0
      %v4340 = vand.u32 %v4024, 2147483648
      %v4341 = vsel %vm4339, %v4340, %v4338
      %v4342 = vrsqrt.pop %v4025
      %v4343 = vmul.f32 %v4342, %v4025
      %v4344 = vmul.f32 %v4343, %v4342
      %v4345 = vmul.f32 0.5, %v4344
      %v4346 = vsub.f32 1.5, %v4345
      %v4347 = vmul.f32 %v4342, %v4346
      %v4348 = vmul.f32 %v4025, %v4347
      %vm4349 = vcmp.eq.f32.partialorder %v4025, inf
      %v4350 = vsel %vm4349, %v4025, %v4348
      %vm4351 = vcmp.eq.f32.partialorder %v4025, 0.0
      %v4352 = vand.u32 %v4025, 2147483648
      %v4353 = vsel %vm4351, %v4352, %v4350
      %v4354 = vrsqrt.pop %v4026
      %v4355 = vmul.f32 %v4354, %v4026
      %v4356 = vmul.f32 %v4355, %v4354
      %v4357 = vmul.f32 0.5, %v4356
      %v4358 = vsub.f32 1.5, %v4357
      %v4359 = vmul.f32 %v4354, %v4358
      %v4360 = vmul.f32 %v4026, %v4359
      %vm4361 = vcmp.eq.f32.partialorder %v4026, inf
      %v4362 = vsel %vm4361, %v4026, %v4360
      %vm4363 = vcmp.eq.f32.partialorder %v4026, 0.0
      %v4364 = vand.u32 %v4026, 2147483648
      %v4365 = vsel %vm4363, %v4364, %v4362
      %v4366 = vrsqrt.pop %v4027
      %v4367 = vmul.f32 %v4366, %v4027
      %v4368 = vmul.f32 %v4367, %v4366
      %v4369 = vmul.f32 0.5, %v4368
      %v4370 = vsub.f32 1.5, %v4369
      %v4371 = vmul.f32 %v4366, %v4370
      %v4372 = vmul.f32 %v4027, %v4371
      %vm4373 = vcmp.eq.f32.partialorder %v4027, inf
      %v4374 = vsel %vm4373, %v4027, %v4372
      %vm4375 = vcmp.eq.f32.partialorder %v4027, 0.0
      %v4376 = vand.u32 %v4027, 2147483648
      %v4377 = vsel %vm4375, %v4376, %v4374
      %v4378 = vrsqrt.pop %v4028
      %v4379 = vmul.f32 %v4378, %v4028
      %v4380 = vmul.f32 %v4379, %v4378
      %v4381 = vmul.f32 0.5, %v4380
      %v4382 = vsub.f32 1.5, %v4381
      %v4383 = vmul.f32 %v4378, %v4382
      %v4384 = vmul.f32 %v4028, %v4383
      %vm4385 = vcmp.eq.f32.partialorder %v4028, inf
      %v4386 = vsel %vm4385, %v4028, %v4384
      %vm4387 = vcmp.eq.f32.partialorder %v4028, 0.0
      %v4388 = vand.u32 %v4028, 2147483648
      %v4389 = vsel %vm4387, %v4388, %v4386
      %v4390 = vrsqrt.pop %v4029
      %v4391 = vmul.f32 %v4390, %v4029
      %v4392 = vmul.f32 %v4391, %v4390
      %v4393 = vmul.f32 0.5, %v4392
      %v4394 = vsub.f32 1.5, %v4393
      %v4395 = vmul.f32 %v4390, %v4394
      %v4396 = vmul.f32 %v4029, %v4395
      %vm4397 = vcmp.eq.f32.partialorder %v4029, inf
      %v4398 = vsel %vm4397, %v4029, %v4396
      %vm4399 = vcmp.eq.f32.partialorder %v4029, 0.0
      %v4400 = vand.u32 %v4029, 2147483648
      %v4401 = vsel %vm4399, %v4400, %v4398
      %v4402 = vrsqrt.pop %v4030
      %v4403 = vmul.f32 %v4402, %v4030
      %v4404 = vmul.f32 %v4403, %v4402
      %v4405 = vmul.f32 0.5, %v4404
      %v4406 = vsub.f32 1.5, %v4405
      %v4407 = vmul.f32 %v4402, %v4406
      %v4408 = vmul.f32 %v4030, %v4407
      %vm4409 = vcmp.eq.f32.partialorder %v4030, inf
      %v4410 = vsel %vm4409, %v4030, %v4408
      %vm4411 = vcmp.eq.f32.partialorder %v4030, 0.0
      %v4412 = vand.u32 %v4030, 2147483648
      %v4413 = vsel %vm4411, %v4412, %v4410
      %v4414 = vrsqrt.pop %v4031
      %v4415 = vmul.f32 %v4414, %v4031
      %v4416 = vmul.f32 %v4415, %v4414
      %v4417 = vmul.f32 0.5, %v4416
      %v4418 = vsub.f32 1.5, %v4417
      %v4419 = vmul.f32 %v4414, %v4418
      %v4420 = vmul.f32 %v4031, %v4419
      %vm4421 = vcmp.eq.f32.partialorder %v4031, inf
      %v4422 = vsel %vm4421, %v4031, %v4420
      %vm4423 = vcmp.eq.f32.partialorder %v4031, 0.0
      %v4424 = vand.u32 %v4031, 2147483648
      %v4425 = vsel %vm4423, %v4424, %v4422
      %v4426 = vrsqrt.pop %v4032
      %v4427 = vmul.f32 %v4426, %v4032
      %v4428 = vmul.f32 %v4427, %v4426
      %v4429 = vmul.f32 0.5, %v4428
      %v4430 = vsub.f32 1.5, %v4429
      %v4431 = vmul.f32 %v4426, %v4430
      %v4432 = vmul.f32 %v4032, %v4431
      %vm4433 = vcmp.eq.f32.partialorder %v4032, inf
      %v4434 = vsel %vm4433, %v4032, %v4432
      %vm4435 = vcmp.eq.f32.partialorder %v4032, 0.0
      %v4436 = vand.u32 %v4032, 2147483648
      %v4437 = vsel %vm4435, %v4436, %v4434
      %v4438 = vrsqrt.pop %v4033
      %v4439 = vmul.f32 %v4438, %v4033
      %v4440 = vmul.f32 %v4439, %v4438
      %v4441 = vmul.f32 0.5, %v4440
      %v4442 = vsub.f32 1.5, %v4441
      %v4443 = vmul.f32 %v4438, %v4442
      %v4444 = vmul.f32 %v4033, %v4443
      %vm4445 = vcmp.eq.f32.partialorder %v4033, inf
      %v4446 = vsel %vm4445, %v4033, %v4444
      %vm4447 = vcmp.eq.f32.partialorder %v4033, 0.0
      %v4448 = vand.u32 %v4033, 2147483648
      %v4449 = vsel %vm4447, %v4448, %v4446
      %v4450 = vrsqrt.pop %v4034
      %v4451 = vmul.f32 %v4450, %v4034
      %v4452 = vmul.f32 %v4451, %v4450
      %v4453 = vmul.f32 0.5, %v4452
      %v4454 = vsub.f32 1.5, %v4453
      %v4455 = vmul.f32 %v4450, %v4454
      %v4456 = vmul.f32 %v4034, %v4455
      %vm4457 = vcmp.eq.f32.partialorder %v4034, inf
      %v4458 = vsel %vm4457, %v4034, %v4456
      %vm4459 = vcmp.eq.f32.partialorder %v4034, 0.0
      %v4460 = vand.u32 %v4034, 2147483648
      %v4461 = vsel %vm4459, %v4460, %v4458
      %v4462 = vrsqrt.pop %v4035
      %v4463 = vmul.f32 %v4462, %v4035
      %v4464 = vmul.f32 %v4463, %v4462
      %v4465 = vmul.f32 0.5, %v4464
      %v4466 = vsub.f32 1.5, %v4465
      %v4467 = vmul.f32 %v4462, %v4466
      %v4468 = vmul.f32 %v4035, %v4467
      %vm4469 = vcmp.eq.f32.partialorder %v4035, inf
      %v4470 = vsel %vm4469, %v4035, %v4468
      %vm4471 = vcmp.eq.f32.partialorder %v4035, 0.0
      %v4472 = vand.u32 %v4035, 2147483648
      %v4473 = vsel %vm4471, %v4472, %v4470
      %v4474 = vrsqrt.pop %v4036
      %v4475 = vmul.f32 %v4474, %v4036
      %v4476 = vmul.f32 %v4475, %v4474
      %v4477 = vmul.f32 0.5, %v4476
      %v4478 = vsub.f32 1.5, %v4477
      %v4479 = vmul.f32 %v4474, %v4478
      %v4480 = vmul.f32 %v4036, %v4479
      %vm4481 = vcmp.eq.f32.partialorder %v4036, inf
      %v4482 = vsel %vm4481, %v4036, %v4480
      %vm4483 = vcmp.eq.f32.partialorder %v4036, 0.0
      %v4484 = vand.u32 %v4036, 2147483648
      %v4485 = vsel %vm4483, %v4484, %v4482
      %v4486 = vrsqrt.pop %v4037
      %v4487 = vmul.f32 %v4486, %v4037
      %v4488 = vmul.f32 %v4487, %v4486
      %v4489 = vmul.f32 0.5, %v4488
      %v4490 = vsub.f32 1.5, %v4489
      %v4491 = vmul.f32 %v4486, %v4490
      %v4492 = vmul.f32 %v4037, %v4491
      %vm4493 = vcmp.eq.f32.partialorder %v4037, inf
      %v4494 = vsel %vm4493, %v4037, %v4492
      %vm4495 = vcmp.eq.f32.partialorder %v4037, 0.0
      %v4496 = vand.u32 %v4037, 2147483648
      %v4497 = vsel %vm4495, %v4496, %v4494
      %v4498 = vrsqrt.pop %v4038
      %v4499 = vmul.f32 %v4498, %v4038
      %v4500 = vmul.f32 %v4499, %v4498
      %v4501 = vmul.f32 0.5, %v4500
      %v4502 = vsub.f32 1.5, %v4501
      %v4503 = vmul.f32 %v4498, %v4502
      %v4504 = vmul.f32 %v4038, %v4503
      %vm4505 = vcmp.eq.f32.partialorder %v4038, inf
      %v4506 = vsel %vm4505, %v4038, %v4504
      %vm4507 = vcmp.eq.f32.partialorder %v4038, 0.0
      %v4508 = vand.u32 %v4038, 2147483648
      %v4509 = vsel %vm4507, %v4508, %v4506
      %v4510 = vrsqrt.pop %v4039
      %v4511 = vmul.f32 %v4510, %v4039
      %v4512 = vmul.f32 %v4511, %v4510
      %v4513 = vmul.f32 0.5, %v4512
      %v4514 = vsub.f32 1.5, %v4513
      %v4515 = vmul.f32 %v4510, %v4514
      %v4516 = vmul.f32 %v4039, %v4515
      %vm4517 = vcmp.eq.f32.partialorder %v4039, inf
      %v4518 = vsel %vm4517, %v4039, %v4516
      %vm4519 = vcmp.eq.f32.partialorder %v4039, 0.0
      %v4520 = vand.u32 %v4039, 2147483648
      %v4521 = vsel %vm4519, %v4520, %v4518
      %v4522 = vrsqrt.pop %v4040
      %v4523 = vmul.f32 %v4522, %v4040
      %v4524 = vmul.f32 %v4523, %v4522
      %v4525 = vmul.f32 0.5, %v4524
      %v4526 = vsub.f32 1.5, %v4525
      %v4527 = vmul.f32 %v4522, %v4526
      %v4528 = vmul.f32 %v4040, %v4527
      %vm4529 = vcmp.eq.f32.partialorder %v4040, inf
      %v4530 = vsel %vm4529, %v4040, %v4528
      %vm4531 = vcmp.eq.f32.partialorder %v4040, 0.0
      %v4532 = vand.u32 %v4040, 2147483648
      %v4533 = vsel %vm4531, %v4532, %v4530
      %v4534 = vrsqrt.pop %v4041
      %v4535 = vmul.f32 %v4534, %v4041
      %v4536 = vmul.f32 %v4535, %v4534
      %v4537 = vmul.f32 0.5, %v4536
      %v4538 = vsub.f32 1.5, %v4537
      %v4539 = vmul.f32 %v4534, %v4538
      %v4540 = vmul.f32 %v4041, %v4539
      %vm4541 = vcmp.eq.f32.partialorder %v4041, inf
      %v4542 = vsel %vm4541, %v4041, %v4540
      %vm4543 = vcmp.eq.f32.partialorder %v4041, 0.0
      %v4544 = vand.u32 %v4041, 2147483648
      %v4545 = vsel %vm4543, %v4544, %v4542
      %v4546 = vrsqrt.pop %v4042
      %v4547 = vmul.f32 %v4546, %v4042
      %v4548 = vmul.f32 %v4547, %v4546
      %v4549 = vmul.f32 0.5, %v4548
      %v4550 = vsub.f32 1.5, %v4549
      %v4551 = vmul.f32 %v4546, %v4550
      %v4552 = vmul.f32 %v4042, %v4551
      %vm4553 = vcmp.eq.f32.partialorder %v4042, inf
      %v4554 = vsel %vm4553, %v4042, %v4552
      %vm4555 = vcmp.eq.f32.partialorder %v4042, 0.0
      %v4556 = vand.u32 %v4042, 2147483648
      %v4557 = vsel %vm4555, %v4556, %v4554
      %v4558 = vrsqrt.pop %v4043
      %v4559 = vmul.f32 %v4558, %v4043
      %v4560 = vmul.f32 %v4559, %v4558
      %v4561 = vmul.f32 0.5, %v4560
      %v4562 = vsub.f32 1.5, %v4561
      %v4563 = vmul.f32 %v4558, %v4562
      %v4564 = vmul.f32 %v4043, %v4563
      %vm4565 = vcmp.eq.f32.partialorder %v4043, inf
      %v4566 = vsel %vm4565, %v4043, %v4564
      %vm4567 = vcmp.eq.f32.partialorder %v4043, 0.0
      %v4568 = vand.u32 %v4043, 2147483648
      %v4569 = vsel %vm4567, %v4568, %v4566
      %v4570 = vrsqrt.pop %v4044
      %v4571 = vmul.f32 %v4570, %v4044
      %v4572 = vmul.f32 %v4571, %v4570
      %v4573 = vmul.f32 0.5, %v4572
      %v4574 = vsub.f32 1.5, %v4573
      %v4575 = vmul.f32 %v4570, %v4574
      %v4576 = vmul.f32 %v4044, %v4575
      %vm4577 = vcmp.eq.f32.partialorder %v4044, inf
      %v4578 = vsel %vm4577, %v4044, %v4576
      %vm4579 = vcmp.eq.f32.partialorder %v4044, 0.0
      %v4580 = vand.u32 %v4044, 2147483648
      %v4581 = vsel %vm4579, %v4580, %v4578
      %v4582 = vrsqrt.pop %v4045
      %v4583 = vmul.f32 %v4582, %v4045
      %v4584 = vmul.f32 %v4583, %v4582
      %v4585 = vmul.f32 0.5, %v4584
      %v4586 = vsub.f32 1.5, %v4585
      %v4587 = vmul.f32 %v4582, %v4586
      %v4588 = vmul.f32 %v4045, %v4587
      %vm4589 = vcmp.eq.f32.partialorder %v4045, inf
      %v4590 = vsel %vm4589, %v4045, %v4588
      %vm4591 = vcmp.eq.f32.partialorder %v4045, 0.0
      %v4592 = vand.u32 %v4045, 2147483648
      %v4593 = vsel %vm4591, %v4592, %v4590
      %v4594 = vrsqrt.pop %v4046
      %v4595 = vmul.f32 %v4594, %v4046
      %v4596 = vmul.f32 %v4595, %v4594
      %v4597 = vmul.f32 0.5, %v4596
      %v4598 = vsub.f32 1.5, %v4597
      %v4599 = vmul.f32 %v4594, %v4598
      %v4600 = vmul.f32 %v4046, %v4599
      %vm4601 = vcmp.eq.f32.partialorder %v4046, inf
      %v4602 = vsel %vm4601, %v4046, %v4600
      %vm4603 = vcmp.eq.f32.partialorder %v4046, 0.0
      %v4604 = vand.u32 %v4046, 2147483648
      %v4605 = vsel %vm4603, %v4604, %v4602
      %v4606 = vrsqrt.pop %v4047
      %v4607 = vmul.f32 %v4606, %v4047
      %v4608 = vmul.f32 %v4607, %v4606
      %v4609 = vmul.f32 0.5, %v4608
      %v4610 = vsub.f32 1.5, %v4609
      %v4611 = vmul.f32 %v4606, %v4610
      %v4612 = vmul.f32 %v4047, %v4611
      %vm4613 = vcmp.eq.f32.partialorder %v4047, inf
      %v4614 = vsel %vm4613, %v4047, %v4612
      %vm4615 = vcmp.eq.f32.partialorder %v4047, 0.0
      %v4616 = vand.u32 %v4047, 2147483648
      %v4617 = vsel %vm4615, %v4616, %v4614
      %v4618 = vrsqrt.pop %v4048
      %v4619 = vmul.f32 %v4618, %v4048
      %v4620 = vmul.f32 %v4619, %v4618
      %v4621 = vmul.f32 0.5, %v4620
      %v4622 = vsub.f32 1.5, %v4621
      %v4623 = vmul.f32 %v4618, %v4622
      %v4624 = vmul.f32 %v4048, %v4623
      %vm4625 = vcmp.eq.f32.partialorder %v4048, inf
      %v4626 = vsel %vm4625, %v4048, %v4624
      %vm4627 = vcmp.eq.f32.partialorder %v4048, 0.0
      %v4628 = vand.u32 %v4048, 2147483648
      %v4629 = vsel %vm4627, %v4628, %v4626
      %v4630 = vrsqrt.pop %v4049
      %v4631 = vmul.f32 %v4630, %v4049
      %v4632 = vmul.f32 %v4631, %v4630
      %v4633 = vmul.f32 0.5, %v4632
      %v4634 = vsub.f32 1.5, %v4633
      %v4635 = vmul.f32 %v4630, %v4634
      %v4636 = vmul.f32 %v4049, %v4635
      %vm4637 = vcmp.eq.f32.partialorder %v4049, inf
      %v4638 = vsel %vm4637, %v4049, %v4636
      %vm4639 = vcmp.eq.f32.partialorder %v4049, 0.0
      %v4640 = vand.u32 %v4049, 2147483648
      %v4641 = vsel %vm4639, %v4640, %v4638
      %v4642 = vrsqrt.pop %v4050
      %v4643 = vmul.f32 %v4642, %v4050
      %v4644 = vmul.f32 %v4643, %v4642
      %v4645 = vmul.f32 0.5, %v4644
      %v4646 = vsub.f32 1.5, %v4645
      %v4647 = vmul.f32 %v4642, %v4646
      %v4648 = vmul.f32 %v4050, %v4647
      %vm4649 = vcmp.eq.f32.partialorder %v4050, inf
      %v4650 = vsel %vm4649, %v4050, %v4648
      %vm4651 = vcmp.eq.f32.partialorder %v4050, 0.0
      %v4652 = vand.u32 %v4050, 2147483648
      %v4653 = vsel %vm4651, %v4652, %v4650
      %v4654 = vrsqrt.pop %v4051
      %v4655 = vmul.f32 %v4654, %v4051
      %v4656 = vmul.f32 %v4655, %v4654
      %v4657 = vmul.f32 0.5, %v4656
      %v4658 = vsub.f32 1.5, %v4657
      %v4659 = vmul.f32 %v4654, %v4658
      %v4660 = vmul.f32 %v4051, %v4659
      %vm4661 = vcmp.eq.f32.partialorder %v4051, inf
      %v4662 = vsel %vm4661, %v4051, %v4660
      %vm4663 = vcmp.eq.f32.partialorder %v4051, 0.0
      %v4664 = vand.u32 %v4051, 2147483648
      %v4665 = vsel %vm4663, %v4664, %v4662
      %v4666 = vrsqrt.pop %v4052
      %v4667 = vmul.f32 %v4666, %v4052
      %v4668 = vmul.f32 %v4667, %v4666
      %v4669 = vmul.f32 0.5, %v4668
      %v4670 = vsub.f32 1.5, %v4669
      %v4671 = vmul.f32 %v4666, %v4670
      %v4672 = vmul.f32 %v4052, %v4671
      %vm4673 = vcmp.eq.f32.partialorder %v4052, inf
      %v4674 = vsel %vm4673, %v4052, %v4672
      %vm4675 = vcmp.eq.f32.partialorder %v4052, 0.0
      %v4676 = vand.u32 %v4052, 2147483648
      %v4677 = vsel %vm4675, %v4676, %v4674
      %v4678 = vrsqrt.pop %v4053
      %v4679 = vmul.f32 %v4678, %v4053
      %v4680 = vmul.f32 %v4679, %v4678
      %v4681 = vmul.f32 0.5, %v4680
      %v4682 = vsub.f32 1.5, %v4681
      %v4683 = vmul.f32 %v4678, %v4682
      %v4684 = vmul.f32 %v4053, %v4683
      %vm4685 = vcmp.eq.f32.partialorder %v4053, inf
      %v4686 = vsel %vm4685, %v4053, %v4684
      %vm4687 = vcmp.eq.f32.partialorder %v4053, 0.0
      %v4688 = vand.u32 %v4053, 2147483648
      %v4689 = vsel %vm4687, %v4688, %v4686
      %v4690 = vrsqrt.pop %v4054
      %v4691 = vmul.f32 %v4690, %v4054
      %v4692 = vmul.f32 %v4691, %v4690
      %v4693 = vmul.f32 0.5, %v4692
      %v4694 = vsub.f32 1.5, %v4693
      %v4695 = vmul.f32 %v4690, %v4694
      %v4696 = vmul.f32 %v4054, %v4695
      %vm4697 = vcmp.eq.f32.partialorder %v4054, inf
      %v4698 = vsel %vm4697, %v4054, %v4696
      %vm4699 = vcmp.eq.f32.partialorder %v4054, 0.0
      %v4700 = vand.u32 %v4054, 2147483648
      %v4701 = vsel %vm4699, %v4700, %v4698
      %v4702 = vrsqrt.pop %v4055
      %v4703 = vmul.f32 %v4702, %v4055
      %v4704 = vmul.f32 %v4703, %v4702
      %v4705 = vmul.f32 0.5, %v4704
      %v4706 = vsub.f32 1.5, %v4705
      %v4707 = vmul.f32 %v4702, %v4706
      %v4708 = vmul.f32 %v4055, %v4707
      %vm4709 = vcmp.eq.f32.partialorder %v4055, inf
      %v4710 = vsel %vm4709, %v4055, %v4708
      %vm4711 = vcmp.eq.f32.partialorder %v4055, 0.0
      %v4712 = vand.u32 %v4055, 2147483648
      %v4713 = vsel %vm4711, %v4712, %v4710
      %v4714 = vrsqrt.pop %v4056
      %v4715 = vmul.f32 %v4714, %v4056
      %v4716 = vmul.f32 %v4715, %v4714
      %v4717 = vmul.f32 0.5, %v4716
      %v4718 = vsub.f32 1.5, %v4717
      %v4719 = vmul.f32 %v4714, %v4718
      %v4720 = vmul.f32 %v4056, %v4719
      %vm4721 = vcmp.eq.f32.partialorder %v4056, inf
      %v4722 = vsel %vm4721, %v4056, %v4720
      %vm4723 = vcmp.eq.f32.partialorder %v4056, 0.0
      %v4724 = vand.u32 %v4056, 2147483648
      %v4725 = vsel %vm4723, %v4724, %v4722
      %v4726 = vrsqrt.pop %v4057
      %v4727 = vmul.f32 %v4726, %v4057
      %v4728 = vmul.f32 %v4727, %v4726
      %v4729 = vmul.f32 0.5, %v4728
      %v4730 = vsub.f32 1.5, %v4729
      %v4731 = vmul.f32 %v4726, %v4730
      %v4732 = vmul.f32 %v4057, %v4731
      %vm4733 = vcmp.eq.f32.partialorder %v4057, inf
      %v4734 = vsel %vm4733, %v4057, %v4732
      %vm4735 = vcmp.eq.f32.partialorder %v4057, 0.0
      %v4736 = vand.u32 %v4057, 2147483648
      %v4737 = vsel %vm4735, %v4736, %v4734
      %v4738 = vrsqrt.pop %v4058
      %v4739 = vmul.f32 %v4738, %v4058
      %v4740 = vmul.f32 %v4739, %v4738
      %v4741 = vmul.f32 0.5, %v4740
      %v4742 = vsub.f32 1.5, %v4741
      %v4743 = vmul.f32 %v4738, %v4742
      %v4744 = vmul.f32 %v4058, %v4743
      %vm4745 = vcmp.eq.f32.partialorder %v4058, inf
      %v4746 = vsel %vm4745, %v4058, %v4744
      %vm4747 = vcmp.eq.f32.partialorder %v4058, 0.0
      %v4748 = vand.u32 %v4058, 2147483648
      %v4749 = vsel %vm4747, %v4748, %v4746
      %v4750 = vrsqrt.pop %v4059
      %v4751 = vmul.f32 %v4750, %v4059
      %v4752 = vmul.f32 %v4751, %v4750
      %v4753 = vmul.f32 0.5, %v4752
      %v4754 = vsub.f32 1.5, %v4753
      %v4755 = vmul.f32 %v4750, %v4754
      %v4756 = vmul.f32 %v4059, %v4755
      %vm4757 = vcmp.eq.f32.partialorder %v4059, inf
      %v4758 = vsel %vm4757, %v4059, %v4756
      %vm4759 = vcmp.eq.f32.partialorder %v4059, 0.0
      %v4760 = vand.u32 %v4059, 2147483648
      %v4761 = vsel %vm4759, %v4760, %v4758
      %v4762 = vrsqrt.pop %v4060
      %v4763 = vmul.f32 %v4762, %v4060
      %v4764 = vmul.f32 %v4763, %v4762
      %v4765 = vmul.f32 0.5, %v4764
      %v4766 = vsub.f32 1.5, %v4765
      %v4767 = vmul.f32 %v4762, %v4766
      %v4768 = vmul.f32 %v4060, %v4767
      %vm4769 = vcmp.eq.f32.partialorder %v4060, inf
      %v4770 = vsel %vm4769, %v4060, %v4768
      %vm4771 = vcmp.eq.f32.partialorder %v4060, 0.0
      %v4772 = vand.u32 %v4060, 2147483648
      %v4773 = vsel %vm4771, %v4772, %v4770
      %v4774 = vrsqrt.pop %v4061
      %v4775 = vmul.f32 %v4774, %v4061
      %v4776 = vmul.f32 %v4775, %v4774
      %v4777 = vmul.f32 0.5, %v4776
      %v4778 = vsub.f32 1.5, %v4777
      %v4779 = vmul.f32 %v4774, %v4778
      %v4780 = vmul.f32 %v4061, %v4779
      %vm4781 = vcmp.eq.f32.partialorder %v4061, inf
      %v4782 = vsel %vm4781, %v4061, %v4780
      %vm4783 = vcmp.eq.f32.partialorder %v4061, 0.0
      %v4784 = vand.u32 %v4061, 2147483648
      %v4785 = vsel %vm4783, %v4784, %v4782
      %v4786 = vrsqrt.pop %v4062
      %v4787 = vmul.f32 %v4786, %v4062
      %v4788 = vmul.f32 %v4787, %v4786
      %v4789 = vmul.f32 0.5, %v4788
      %v4790 = vsub.f32 1.5, %v4789
      %v4791 = vmul.f32 %v4786, %v4790
      %v4792 = vmul.f32 %v4062, %v4791
      %vm4793 = vcmp.eq.f32.partialorder %v4062, inf
      %v4794 = vsel %vm4793, %v4062, %v4792
      %vm4795 = vcmp.eq.f32.partialorder %v4062, 0.0
      %v4796 = vand.u32 %v4062, 2147483648
      %v4797 = vsel %vm4795, %v4796, %v4794
      %v4798 = vrsqrt.pop %v4063
      %v4799 = vmul.f32 %v4798, %v4063
      %v4800 = vmul.f32 %v4799, %v4798
      %v4801 = vmul.f32 0.5, %v4800
      %v4802 = vsub.f32 1.5, %v4801
      %v4803 = vmul.f32 %v4798, %v4802
      %v4804 = vmul.f32 %v4063, %v4803
      %vm4805 = vcmp.eq.f32.partialorder %v4063, inf
      %v4806 = vsel %vm4805, %v4063, %v4804
      %vm4807 = vcmp.eq.f32.partialorder %v4063, 0.0
      %v4808 = vand.u32 %v4063, 2147483648
      %v4809 = vsel %vm4807, %v4808, %v4806
      %v4810 = vrsqrt.pop %v4064
      %v4811 = vmul.f32 %v4810, %v4064
      %v4812 = vmul.f32 %v4811, %v4810
      %v4813 = vmul.f32 0.5, %v4812
      %v4814 = vsub.f32 1.5, %v4813
      %v4815 = vmul.f32 %v4810, %v4814
      %v4816 = vmul.f32 %v4064, %v4815
      %vm4817 = vcmp.eq.f32.partialorder %v4064, inf
      %v4818 = vsel %vm4817, %v4064, %v4816
      %vm4819 = vcmp.eq.f32.partialorder %v4064, 0.0
      %v4820 = vand.u32 %v4064, 2147483648
      %v4821 = vsel %vm4819, %v4820, %v4818
      %v4822 = vrsqrt.pop %v4065
      %v4823 = vmul.f32 %v4822, %v4065
      %v4824 = vmul.f32 %v4823, %v4822
      %v4825 = vmul.f32 0.5, %v4824
      %v4826 = vsub.f32 1.5, %v4825
      %v4827 = vmul.f32 %v4822, %v4826
      %v4828 = vmul.f32 %v4065, %v4827
      %vm4829 = vcmp.eq.f32.partialorder %v4065, inf
      %v4830 = vsel %vm4829, %v4065, %v4828
      %vm4831 = vcmp.eq.f32.partialorder %v4065, 0.0
      %v4832 = vand.u32 %v4065, 2147483648
      %v4833 = vsel %vm4831, %v4832, %v4830
      %v4834 = vadd.f32 %v2018, %v487
      %v4835 = vadd.f32 %v2019, %v3114
      %v4836 = vadd.f32 %v2020, %v3115
      %v4837 = vadd.f32 %v2021, %v3116
      %v4838 = vadd.f32 %v2022, %v3117
      %v4839 = vadd.f32 %v2023, %v3118
      %v4840 = vadd.f32 %v2024, %v3119
      %v4841 = vadd.f32 %v2025, %v3120
      %v4842 = vadd.f32 %v2026, %v490
      %v4843 = vadd.f32 %v2027, %v3121
      %v4844 = vadd.f32 %v2028, %v3122
      %v4845 = vadd.f32 %v2029, %v3123
      %v4846 = vadd.f32 %v2030, %v3124
      %v4847 = vadd.f32 %v2031, %v3125
      %v4848 = vadd.f32 %v2032, %v3126
      %v4849 = vadd.f32 %v2033, %v3127
      %v4850 = vadd.f32 %v2034, %v493
      %v4851 = vadd.f32 %v2035, %v3128
      %v4852 = vadd.f32 %v2036, %v3129
      %v4853 = vadd.f32 %v2037, %v3130
      %v4854 = vadd.f32 %v2038, %v3131
      %v4855 = vadd.f32 %v2039, %v3132
      %v4856 = vadd.f32 %v2040, %v3133
      %v4857 = vadd.f32 %v2041, %v3134
      %v4858 = vadd.f32 %v2042, %v496
      %v4859 = vadd.f32 %v2043, %v3135
      %v4860 = vadd.f32 %v2044, %v3136
      %v4861 = vadd.f32 %v2045, %v3137
      %v4862 = vadd.f32 %v2046, %v3138
      %v4863 = vadd.f32 %v2047, %v3139
      %v4864 = vadd.f32 %v2048, %v3140
      %v4865 = vadd.f32 %v2049, %v3141
      %v4866 = vadd.f32 %v2050, %v499
      %v4867 = vadd.f32 %v2051, %v3142
      %v4868 = vadd.f32 %v2052, %v3143
      %v4869 = vadd.f32 %v2053, %v3144
      %v4870 = vadd.f32 %v2054, %v3145
      %v4871 = vadd.f32 %v2055, %v3146
      %v4872 = vadd.f32 %v2056, %v3147
      %v4873 = vadd.f32 %v2057, %v3148
      %v4874 = vadd.f32 %v2058, %v502
      %v4875 = vadd.f32 %v2059, %v3149
      %v4876 = vadd.f32 %v2060, %v3150
      %v4877 = vadd.f32 %v2061, %v3151
      %v4878 = vadd.f32 %v2062, %v3152
      %v4879 = vadd.f32 %v2063, %v3153
      %v4880 = vadd.f32 %v2064, %v3154
      %v4881 = vadd.f32 %v2065, %v3155
      %v4882 = vadd.f32 %v2066, %v505
      %v4883 = vadd.f32 %v2067, %v3156
      %v4884 = vadd.f32 %v2068, %v3157
      %v4885 = vadd.f32 %v2069, %v3158
      %v4886 = vadd.f32 %v2070, %v3159
      %v4887 = vadd.f32 %v2071, %v3160
      %v4888 = vadd.f32 %v2072, %v3161
      %v4889 = vadd.f32 %v2073, %v3162
      %v4890 = vadd.f32 %v2074, %v508
      %v4891 = vadd.f32 %v2075, %v3163
      %v4892 = vadd.f32 %v2076, %v3164
      %v4893 = vadd.f32 %v2077, %v3165
      %v4894 = vadd.f32 %v2078, %v3166
      %v4895 = vadd.f32 %v2079, %v3167
      %v4896 = vadd.f32 %v2080, %v3168
      %v4897 = vadd.f32 %v2081, %v3169
      %v4962 = vrot.slane %v4835, 7
      %vm4963 = vcmask 1041409
      %v4964 = vsel %vm4963, %v4962, %v4834
      %v4965 = vrot.slane %v4836, 6
      %vm4966 = vcmask 1042434
      %v4967 = vsel %vm4966, %v4965, %v4964
      %v4968 = vrot.slane %v4837, 5
      %vm4969 = vcmask 1043459
      %v4970 = vsel %vm4969, %v4968, %v4967
      %v4971 = vrot.slane %v4838, 4
      %vm4972 = vcmask 1044484
      %v4973 = vsel %vm4972, %v4971, %v4970
      %v4974 = vrot.slane %v4839, 3
      %vm4975 = vcmask 1045509
      %v4976 = vsel %vm4975, %v4974, %v4973
      %v4977 = vrot.slane %v4840, 2
      %vm4978 = vcmask 1046534
      %v4979 = vsel %vm4978, %v4977, %v4976
      %v4980 = vrot.slane %v4841, 1
      %vm4981 = vcmask 1047559
      %v4982 = vsel %vm4981, %v4980, %v4979
      %v4983 = vrot.slane %v4843, 7
      %v4984 = vsel %vm4963, %v4983, %v4842
      %v4985 = vrot.slane %v4844, 6
      %v4986 = vsel %vm4966, %v4985, %v4984
      %v4987 = vrot.slane %v4845, 5
      %v4988 = vsel %vm4969, %v4987, %v4986
      %v4989 = vrot.slane %v4846, 4
      %v4990 = vsel %vm4972, %v4989, %v4988
      %v4991 = vrot.slane %v4847, 3
      %v4992 = vsel %vm4975, %v4991, %v4990
      %v4993 = vrot.slane %v4848, 2
      %v4994 = vsel %vm4978, %v4993, %v4992
      %v4995 = vrot.slane %v4849, 1
      %v4996 = vsel %vm4981, %v4995, %v4994
      %v4997 = vrot.slane %v4851, 7
      %v4998 = vsel %vm4963, %v4997, %v4850
      %v4999 = vrot.slane %v4852, 6
      %v5000 = vsel %vm4966, %v4999, %v4998
      %v5001 = vrot.slane %v4853, 5
      %v5002 = vsel %vm4969, %v5001, %v5000
      %v5003 = vrot.slane %v4854, 4
      %v5004 = vsel %vm4972, %v5003, %v5002
      %v5005 = vrot.slane %v4855, 3
      %v5006 = vsel %vm4975, %v5005, %v5004
      %v5007 = vrot.slane %v4856, 2
      %v5008 = vsel %vm4978, %v5007, %v5006
      %v5009 = vrot.slane %v4857, 1
      %v5010 = vsel %vm4981, %v5009, %v5008
      %v5011 = vrot.slane %v4859, 7
      %v5012 = vsel %vm4963, %v5011, %v4858
      %v5013 = vrot.slane %v4860, 6
      %v5014 = vsel %vm4966, %v5013, %v5012
      %v5015 = vrot.slane %v4861, 5
      %v5016 = vsel %vm4969, %v5015, %v5014
      %v5017 = vrot.slane %v4862, 4
      %v5018 = vsel %vm4972, %v5017, %v5016
      %v5019 = vrot.slane %v4863, 3
      %v5020 = vsel %vm4975, %v5019, %v5018
      %v5021 = vrot.slane %v4864, 2
      %v5022 = vsel %vm4978, %v5021, %v5020
      %v5023 = vrot.slane %v4865, 1
      %v5024 = vsel %vm4981, %v5023, %v5022
      %v5025 = vrot.slane %v4867, 7
      %v5026 = vsel %vm4963, %v5025, %v4866
      %v5027 = vrot.slane %v4868, 6
      %v5028 = vsel %vm4966, %v5027, %v5026
      %v5029 = vrot.slane %v4869, 5
      %v5030 = vsel %vm4969, %v5029, %v5028
      %v5031 = vrot.slane %v4870, 4
      %v5032 = vsel %vm4972, %v5031, %v5030
      %v5033 = vrot.slane %v4871, 3
      %v5034 = vsel %vm4975, %v5033, %v5032
      %v5035 = vrot.slane %v4872, 2
      %v5036 = vsel %vm4978, %v5035, %v5034
      %v5037 = vrot.slane %v4873, 1
      %v5038 = vsel %vm4981, %v5037, %v5036
      %v5039 = vrot.slane %v4875, 7
      %v5040 = vsel %vm4963, %v5039, %v4874
      %v5041 = vrot.slane %v4876, 6
      %v5042 = vsel %vm4966, %v5041, %v5040
      %v5043 = vrot.slane %v4877, 5
      %v5044 = vsel %vm4969, %v5043, %v5042
      %v5045 = vrot.slane %v4878, 4
      %v5046 = vsel %vm4972, %v5045, %v5044
      %v5047 = vrot.slane %v4879, 3
      %v5048 = vsel %vm4975, %v5047, %v5046
      %v5049 = vrot.slane %v4880, 2
      %v5050 = vsel %vm4978, %v5049, %v5048
      %v5051 = vrot.slane %v4881, 1
      %v5052 = vsel %vm4981, %v5051, %v5050
      %v5053 = vrot.slane %v4883, 7
      %v5054 = vsel %vm4963, %v5053, %v4882
      %v5055 = vrot.slane %v4884, 6
      %v5056 = vsel %vm4966, %v5055, %v5054
      %v5057 = vrot.slane %v4885, 5
      %v5058 = vsel %vm4969, %v5057, %v5056
      %v5059 = vrot.slane %v4886, 4
      %v5060 = vsel %vm4972, %v5059, %v5058
      %v5061 = vrot.slane %v4887, 3
      %v5062 = vsel %vm4975, %v5061, %v5060
      %v5063 = vrot.slane %v4888, 2
      %v5064 = vsel %vm4978, %v5063, %v5062
      %v5065 = vrot.slane %v4889, 1
      %v5066 = vsel %vm4981, %v5065, %v5064
      %v5067 = vrot.slane %v4891, 7
      %v5068 = vsel %vm4963, %v5067, %v4890
      %v5069 = vrot.slane %v4892, 6
      %v5070 = vsel %vm4966, %v5069, %v5068
      %v5071 = vrot.slane %v4893, 5
      %v5072 = vsel %vm4969, %v5071, %v5070
      %v5073 = vrot.slane %v4894, 4
      %v5074 = vsel %vm4972, %v5073, %v5072
      %v5075 = vrot.slane %v4895, 3
      %v5076 = vsel %vm4975, %v5075, %v5074
      %v5077 = vrot.slane %v4896, 2
      %v5078 = vsel %vm4978, %v5077, %v5076
      %v5079 = vrot.slane %v4897, 1
      %v5080 = vsel %vm4981, %v5079, %v5078
      %5081 = vrot.lane.b32.xlu0 %v4982, 32
      %v5082 = vpop.permute.xlu0 %5081
      %5083 = vrot.lane.b32.xlu0 %v4996, 32
      %v5084 = vpop.permute.xlu0 %5083
      %5085 = vrot.lane.b32.xlu0 %v5010, 32
      %v5086 = vpop.permute.xlu0 %5085
      %5087 = vrot.lane.b32.xlu0 %v5024, 32
      %v5088 = vpop.permute.xlu0 %5087
      %5089 = vrot.lane.b32.xlu0 %v5038, 32
      %v5090 = vpop.permute.xlu0 %5089
      %5091 = vrot.lane.b32.xlu0 %v5052, 32
      %v5092 = vpop.permute.xlu0 %5091
      %5093 = vrot.lane.b32.xlu0 %v5066, 32
      %v5094 = vpop.permute.xlu0 %5093
      %5095 = vrot.lane.b32.xlu0 %v5080, 32
      %v5096 = vpop.permute.xlu0 %5095
      %v5169 = vrot.slane %v3235, 7
      %v5170 = vsel %vm4963, %v5169, %v3234
      %v5171 = vrot.slane %v3236, 6
      %v5172 = vsel %vm4966, %v5171, %v5170
      %v5173 = vrot.slane %v3237, 5
      %v5174 = vsel %vm4969, %v5173, %v5172
      %v5175 = vrot.slane %v3238, 4
      %v5176 = vsel %vm4972, %v5175, %v5174
      %v5177 = vrot.slane %v3239, 3
      %v5178 = vsel %vm4975, %v5177, %v5176
      %v5179 = vrot.slane %v3240, 2
      %v5180 = vsel %vm4978, %v5179, %v5178
      %v5181 = vrot.slane %v3241, 1
      %v5182 = vsel %vm4981, %v5181, %v5180
      %v5183 = vrot.slane %v3243, 7
      %v5184 = vsel %vm4963, %v5183, %v3242
      %v5185 = vrot.slane %v3244, 6
      %v5186 = vsel %vm4966, %v5185, %v5184
      %v5187 = vrot.slane %v3245, 5
      %v5188 = vsel %vm4969, %v5187, %v5186
      %v5189 = vrot.slane %v3246, 4
      %v5190 = vsel %vm4972, %v5189, %v5188
      %v5191 = vrot.slane %v3247, 3
      %v5192 = vsel %vm4975, %v5191, %v5190
      %v5193 = vrot.slane %v3248, 2
      %v5194 = vsel %vm4978, %v5193, %v5192
      %v5195 = vrot.slane %v3249, 1
      %v5196 = vsel %vm4981, %v5195, %v5194
      %v5197 = vrot.slane %v3251, 7
      %v5198 = vsel %vm4963, %v5197, %v3250
      %v5199 = vrot.slane %v3252, 6
      %v5200 = vsel %vm4966, %v5199, %v5198
      %v5201 = vrot.slane %v3253, 5
      %v5202 = vsel %vm4969, %v5201, %v5200
      %v5203 = vrot.slane %v3254, 4
      %v5204 = vsel %vm4972, %v5203, %v5202
      %v5205 = vrot.slane %v3255, 3
      %v5206 = vsel %vm4975, %v5205, %v5204
      %v5207 = vrot.slane %v3256, 2
      %v5208 = vsel %vm4978, %v5207, %v5206
      %v5209 = vrot.slane %v3257, 1
      %v5210 = vsel %vm4981, %v5209, %v5208
      %v5211 = vrot.slane %v3259, 7
      %v5212 = vsel %vm4963, %v5211, %v3258
      %v5213 = vrot.slane %v3260, 6
      %v5214 = vsel %vm4966, %v5213, %v5212
      %v5215 = vrot.slane %v3261, 5
      %v5216 = vsel %vm4969, %v5215, %v5214
      %v5217 = vrot.slane %v3262, 4
      %v5218 = vsel %vm4972, %v5217, %v5216
      %v5219 = vrot.slane %v3263, 3
      %v5220 = vsel %vm4975, %v5219, %v5218
      %v5221 = vrot.slane %v3264, 2
      %v5222 = vsel %vm4978, %v5221, %v5220
      %v5223 = vrot.slane %v3265, 1
      %v5224 = vsel %vm4981, %v5223, %v5222
      %v5225 = vrot.slane %v3267, 7
      %v5226 = vsel %vm4963, %v5225, %v3266
      %v5227 = vrot.slane %v3268, 6
      %v5228 = vsel %vm4966, %v5227, %v5226
      %v5229 = vrot.slane %v3269, 5
      %v5230 = vsel %vm4969, %v5229, %v5228
      %v5231 = vrot.slane %v3270, 4
      %v5232 = vsel %vm4972, %v5231, %v5230
      %v5233 = vrot.slane %v3271, 3
      %v5234 = vsel %vm4975, %v5233, %v5232
      %v5235 = vrot.slane %v3272, 2
      %v5236 = vsel %vm4978, %v5235, %v5234
      %v5237 = vrot.slane %v3273, 1
      %v5238 = vsel %vm4981, %v5237, %v5236
      %v5239 = vrot.slane %v3275, 7
      %v5240 = vsel %vm4963, %v5239, %v3274
      %v5241 = vrot.slane %v3276, 6
      %v5242 = vsel %vm4966, %v5241, %v5240
      %v5243 = vrot.slane %v3277, 5
      %v5244 = vsel %vm4969, %v5243, %v5242
      %v5245 = vrot.slane %v3278, 4
      %v5246 = vsel %vm4972, %v5245, %v5244
      %v5247 = vrot.slane %v3279, 3
      %v5248 = vsel %vm4975, %v5247, %v5246
      %v5249 = vrot.slane %v3280, 2
      %v5250 = vsel %vm4978, %v5249, %v5248
      %v5251 = vrot.slane %v3281, 1
      %v5252 = vsel %vm4981, %v5251, %v5250
      %v5253 = vrot.slane %v3283, 7
      %v5254 = vsel %vm4963, %v5253, %v3282
      %v5255 = vrot.slane %v3284, 6
      %v5256 = vsel %vm4966, %v5255, %v5254
      %v5257 = vrot.slane %v3285, 5
      %v5258 = vsel %vm4969, %v5257, %v5256
      %v5259 = vrot.slane %v3286, 4
      %v5260 = vsel %vm4972, %v5259, %v5258
      %v5261 = vrot.slane %v3287, 3
      %v5262 = vsel %vm4975, %v5261, %v5260
      %v5263 = vrot.slane %v3288, 2
      %v5264 = vsel %vm4978, %v5263, %v5262
      %v5265 = vrot.slane %v3289, 1
      %v5266 = vsel %vm4981, %v5265, %v5264
      %v5267 = vrot.slane %v3291, 7
      %v5268 = vsel %vm4963, %v5267, %v3290
      %v5269 = vrot.slane %v3292, 6
      %v5270 = vsel %vm4966, %v5269, %v5268
      %v5271 = vrot.slane %v3293, 5
      %v5272 = vsel %vm4969, %v5271, %v5270
      %v5273 = vrot.slane %v3294, 4
      %v5274 = vsel %vm4972, %v5273, %v5272
      %v5275 = vrot.slane %v3295, 3
      %v5276 = vsel %vm4975, %v5275, %v5274
      %v5277 = vrot.slane %v3296, 2
      %v5278 = vsel %vm4978, %v5277, %v5276
      %v5279 = vrot.slane %v3297, 1
      %v5280 = vsel %vm4981, %v5279, %v5278
      %5281 = vrot.lane.b32.xlu0 %v5182, 64
      %v5282 = vpop.permute.xlu0 %5281
      %5283 = vrot.lane.b32.xlu0 %v5196, 64
      %v5284 = vpop.permute.xlu0 %5283
      %5285 = vrot.lane.b32.xlu0 %v5210, 64
      %v5286 = vpop.permute.xlu0 %5285
      %5287 = vrot.lane.b32.xlu0 %v5224, 64
      %v5288 = vpop.permute.xlu0 %5287
      %5289 = vrot.lane.b32.xlu0 %v5238, 64
      %v5290 = vpop.permute.xlu0 %5289
      %5291 = vrot.lane.b32.xlu0 %v5252, 64
      %v5292 = vpop.permute.xlu0 %5291
      %5293 = vrot.lane.b32.xlu0 %v5266, 64
      %v5294 = vpop.permute.xlu0 %5293
      %5295 = vrot.lane.b32.xlu0 %v5280, 64
      %v5296 = vpop.permute.xlu0 %5295
      %v5369 = vrot.slane %v3747, 7
      %v5370 = vsel %vm4963, %v5369, %v3746
      %v5371 = vrot.slane %v3748, 6
      %v5372 = vsel %vm4966, %v5371, %v5370
      %v5373 = vrot.slane %v3749, 5
      %v5374 = vsel %vm4969, %v5373, %v5372
      %v5375 = vrot.slane %v3750, 4
      %v5376 = vsel %vm4972, %v5375, %v5374
      %v5377 = vrot.slane %v3751, 3
      %v5378 = vsel %vm4975, %v5377, %v5376
      %v5379 = vrot.slane %v3752, 2
      %v5380 = vsel %vm4978, %v5379, %v5378
      %v5381 = vrot.slane %v3753, 1
      %v5382 = vsel %vm4981, %v5381, %v5380
      %v5383 = vrot.slane %v3755, 7
      %v5384 = vsel %vm4963, %v5383, %v3754
      %v5385 = vrot.slane %v3756, 6
      %v5386 = vsel %vm4966, %v5385, %v5384
      %v5387 = vrot.slane %v3757, 5
      %v5388 = vsel %vm4969, %v5387, %v5386
      %v5389 = vrot.slane %v3758, 4
      %v5390 = vsel %vm4972, %v5389, %v5388
      %v5391 = vrot.slane %v3759, 3
      %v5392 = vsel %vm4975, %v5391, %v5390
      %v5393 = vrot.slane %v3760, 2
      %v5394 = vsel %vm4978, %v5393, %v5392
      %v5395 = vrot.slane %v3761, 1
      %v5396 = vsel %vm4981, %v5395, %v5394
      %v5397 = vrot.slane %v3763, 7
      %v5398 = vsel %vm4963, %v5397, %v3762
      %v5399 = vrot.slane %v3764, 6
      %v5400 = vsel %vm4966, %v5399, %v5398
      %v5401 = vrot.slane %v3765, 5
      %v5402 = vsel %vm4969, %v5401, %v5400
      %v5403 = vrot.slane %v3766, 4
      %v5404 = vsel %vm4972, %v5403, %v5402
      %v5405 = vrot.slane %v3767, 3
      %v5406 = vsel %vm4975, %v5405, %v5404
      %v5407 = vrot.slane %v3768, 2
      %v5408 = vsel %vm4978, %v5407, %v5406
      %v5409 = vrot.slane %v3769, 1
      %v5410 = vsel %vm4981, %v5409, %v5408
      %v5411 = vrot.slane %v3771, 7
      %v5412 = vsel %vm4963, %v5411, %v3770
      %v5413 = vrot.slane %v3772, 6
      %v5414 = vsel %vm4966, %v5413, %v5412
      %v5415 = vrot.slane %v3773, 5
      %v5416 = vsel %vm4969, %v5415, %v5414
      %v5417 = vrot.slane %v3774, 4
      %v5418 = vsel %vm4972, %v5417, %v5416
      %v5419 = vrot.slane %v3775, 3
      %v5420 = vsel %vm4975, %v5419, %v5418
      %v5421 = vrot.slane %v3776, 2
      %v5422 = vsel %vm4978, %v5421, %v5420
      %v5423 = vrot.slane %v3777, 1
      %v5424 = vsel %vm4981, %v5423, %v5422
      %v5425 = vrot.slane %v3779, 7
      %v5426 = vsel %vm4963, %v5425, %v3778
      %v5427 = vrot.slane %v3780, 6
      %v5428 = vsel %vm4966, %v5427, %v5426
      %v5429 = vrot.slane %v3781, 5
      %v5430 = vsel %vm4969, %v5429, %v5428
      %v5431 = vrot.slane %v3782, 4
      %v5432 = vsel %vm4972, %v5431, %v5430
      %v5433 = vrot.slane %v3783, 3
      %v5434 = vsel %vm4975, %v5433, %v5432
      %v5435 = vrot.slane %v3784, 2
      %v5436 = vsel %vm4978, %v5435, %v5434
      %v5437 = vrot.slane %v3785, 1
      %v5438 = vsel %vm4981, %v5437, %v5436
      %v5439 = vrot.slane %v3787, 7
      %v5440 = vsel %vm4963, %v5439, %v3786
      %v5441 = vrot.slane %v3788, 6
      %v5442 = vsel %vm4966, %v5441, %v5440
      %v5443 = vrot.slane %v3789, 5
      %v5444 = vsel %vm4969, %v5443, %v5442
      %v5445 = vrot.slane %v3790, 4
      %v5446 = vsel %vm4972, %v5445, %v5444
      %v5447 = vrot.slane %v3791, 3
      %v5448 = vsel %vm4975, %v5447, %v5446
      %v5449 = vrot.slane %v3792, 2
      %v5450 = vsel %vm4978, %v5449, %v5448
      %v5451 = vrot.slane %v3793, 1
      %v5452 = vsel %vm4981, %v5451, %v5450
      %v5453 = vrot.slane %v3795, 7
      %v5454 = vsel %vm4963, %v5453, %v3794
      %v5455 = vrot.slane %v3796, 6
      %v5456 = vsel %vm4966, %v5455, %v5454
      %v5457 = vrot.slane %v3797, 5
      %v5458 = vsel %vm4969, %v5457, %v5456
      %v5459 = vrot.slane %v3798, 4
      %v5460 = vsel %vm4972, %v5459, %v5458
      %v5461 = vrot.slane %v3799, 3
      %v5462 = vsel %vm4975, %v5461, %v5460
      %v5463 = vrot.slane %v3800, 2
      %v5464 = vsel %vm4978, %v5463, %v5462
      %v5465 = vrot.slane %v3801, 1
      %v5466 = vsel %vm4981, %v5465, %v5464
      %v5467 = vrot.slane %v3803, 7
      %v5468 = vsel %vm4963, %v5467, %v3802
      %v5469 = vrot.slane %v3804, 6
      %v5470 = vsel %vm4966, %v5469, %v5468
      %v5471 = vrot.slane %v3805, 5
      %v5472 = vsel %vm4969, %v5471, %v5470
      %v5473 = vrot.slane %v3806, 4
      %v5474 = vsel %vm4972, %v5473, %v5472
      %v5475 = vrot.slane %v3807, 3
      %v5476 = vsel %vm4975, %v5475, %v5474
      %v5477 = vrot.slane %v3808, 2
      %v5478 = vsel %vm4978, %v5477, %v5476
      %v5479 = vrot.slane %v3809, 1
      %v5480 = vsel %vm4981, %v5479, %v5478
      %5481 = vrot.lane.b32.xlu0 %v5382, 96
      %v5482 = vpop.permute.xlu0 %5481
      %5483 = vrot.lane.b32.xlu0 %v5396, 96
      %v5484 = vpop.permute.xlu0 %5483
      %5485 = vrot.lane.b32.xlu0 %v5410, 96
      %v5486 = vpop.permute.xlu0 %5485
      %5487 = vrot.lane.b32.xlu0 %v5424, 96
      %v5488 = vpop.permute.xlu0 %5487
      %5489 = vrot.lane.b32.xlu0 %v5438, 96
      %v5490 = vpop.permute.xlu0 %5489
      %5491 = vrot.lane.b32.xlu0 %v5452, 96
      %v5492 = vpop.permute.xlu0 %5491
      %5493 = vrot.lane.b32.xlu0 %v5466, 96
      %v5494 = vpop.permute.xlu0 %5493
      %5495 = vrot.lane.b32.xlu0 %v5480, 96
      %v5496 = vpop.permute.xlu0 %5495
      %v5569 = vsel %vm4963, %v4089, %v4077
      %v5570 = vsel %vm4966, %v4101, %v5569
      %v5571 = vsel %vm4969, %v4113, %v5570
      %v5572 = vsel %vm4972, %v4125, %v5571
      %v5573 = vsel %vm4975, %v4137, %v5572
      %v5574 = vsel %vm4978, %v4149, %v5573
      %v5575 = vsel %vm4981, %v4161, %v5574
      %v5576 = vsel %vm4963, %v4185, %v4173
      %v5577 = vsel %vm4966, %v4197, %v5576
      %v5578 = vsel %vm4969, %v4209, %v5577
      %v5579 = vsel %vm4972, %v4221, %v5578
      %v5580 = vsel %vm4975, %v4233, %v5579
      %v5581 = vsel %vm4978, %v4245, %v5580
      %v5582 = vsel %vm4981, %v4257, %v5581
      %v5583 = vsel %vm4963, %v4281, %v4269
      %v5584 = vsel %vm4966, %v4293, %v5583
      %v5585 = vsel %vm4969, %v4305, %v5584
      %v5586 = vsel %vm4972, %v4317, %v5585
      %v5587 = vsel %vm4975, %v4329, %v5586
      %v5588 = vsel %vm4978, %v4341, %v5587
      %v5589 = vsel %vm4981, %v4353, %v5588
      %v5590 = vsel %vm4963, %v4377, %v4365
      %v5591 = vsel %vm4966, %v4389, %v5590
      %v5592 = vsel %vm4969, %v4401, %v5591
      %v5593 = vsel %vm4972, %v4413, %v5592
      %v5594 = vsel %vm4975, %v4425, %v5593
      %v5595 = vsel %vm4978, %v4437, %v5594
      %v5596 = vsel %vm4981, %v4449, %v5595
      %v5597 = vsel %vm4963, %v4473, %v4461
      %v5598 = vsel %vm4966, %v4485, %v5597
      %v5599 = vsel %vm4969, %v4497, %v5598
      %v5600 = vsel %vm4972, %v4509, %v5599
      %v5601 = vsel %vm4975, %v4521, %v5600
      %v5602 = vsel %vm4978, %v4533, %v5601
      %v5603 = vsel %vm4981, %v4545, %v5602
      %v5604 = vsel %vm4963, %v4569, %v4557
      %v5605 = vsel %vm4966, %v4581, %v5604
      %v5606 = vsel %vm4969, %v4593, %v5605
      %v5607 = vsel %vm4972, %v4605, %v5606
      %v5608 = vsel %vm4975, %v4617, %v5607
      %v5609 = vsel %vm4978, %v4629, %v5608
      %v5610 = vsel %vm4981, %v4641, %v5609
      %v5611 = vsel %vm4963, %v4665, %v4653
      %v5612 = vsel %vm4966, %v4677, %v5611
      %v5613 = vsel %vm4969, %v4689, %v5612
      %v5614 = vsel %vm4972, %v4701, %v5613
      %v5615 = vsel %vm4975, %v4713, %v5614
      %v5616 = vsel %vm4978, %v4725, %v5615
      %v5617 = vsel %vm4981, %v4737, %v5616
      %v5618 = vsel %vm4963, %v4761, %v4749
      %v5619 = vsel %vm4966, %v4773, %v5618
      %v5620 = vsel %vm4969, %v4785, %v5619
      %v5621 = vsel %vm4972, %v4797, %v5620
      %v5622 = vsel %vm4975, %v4809, %v5621
      %v5623 = vsel %vm4978, %v4821, %v5622
      %v5624 = vsel %vm4981, %v4833, %v5623
      %v5625 = vsel %vm444, %v428, %v5082
      %v5626 = vsel %vm444, %v429, %v5084
      %v5627 = vsel %vm444, %v430, %v5086
      %v5628 = vsel %vm444, %v431, %v5088
      %v5629 = vsel %vm444, %v432, %v5090
      %v5630 = vsel %vm444, %v433, %v5092
      %v5631 = vsel %vm444, %v434, %v5094
      %v5632 = vsel %vm444, %v435, %v5096
      %v5633 = vsel %vm1304, %v5625, %v5282
      %v5634 = vsel %vm1304, %v5626, %v5284
      %v5635 = vsel %vm1304, %v5627, %v5286
      %v5636 = vsel %vm1304, %v5628, %v5288
      %v5637 = vsel %vm1304, %v5629, %v5290
      %v5638 = vsel %vm1304, %v5630, %v5292
      %v5639 = vsel %vm1304, %v5631, %v5294
      %v5640 = vsel %vm1304, %v5632, %v5296
      %vm5641 = vcmask 785408
      %v5642 = vsel %vm5641, %v5633, %v5482
      %v5643 = vsel %vm5641, %v5634, %v5484
      %v5644 = vsel %vm5641, %v5635, %v5486
      %v5645 = vsel %vm5641, %v5636, %v5488
      %v5646 = vsel %vm5641, %v5637, %v5490
      %v5647 = vsel %vm5641, %v5638, %v5492
      %v5648 = vsel %vm5641, %v5639, %v5494
      %v5649 = vsel %vm5641, %v5640, %v5496
      %v5650 = vld [vmem:[%s402] sm:$0xff]
      %v5651 = vld [vmem:[%s402 + $0x8] sm:$0xff]
      %v5652 = vld [vmem:[%s402 + $0x10] sm:$0xff]
      %v5653 = vld [vmem:[%s402 + $0x18] sm:$0xff]
      %v5654 = vld [vmem:[%s402 + $0x20] sm:$0xff]
      %v5655 = vld [vmem:[%s402 + $0x28] sm:$0xff]
      %v5656 = vld [vmem:[%s402 + $0x30] sm:$0xff]
      %v5657 = vld [vmem:[%s402 + $0x38] sm:$0xff]
      %v5658 = vld [vmem:[%s402 + $0x40] sm:$0xff]
      %v5659 = vld [vmem:[%s402 + $0x48] sm:$0xff]
      %v5660 = vld [vmem:[%s402 + $0x50] sm:$0xff]
      %v5661 = vld [vmem:[%s402 + $0x58] sm:$0xff]
      %v5662 = vld [vmem:[%s402 + $0x60] sm:$0xff]
      %v5663 = vld [vmem:[%s402 + $0x68] sm:$0xff]
      %v5664 = vld [vmem:[%s402 + $0x70] sm:$0xff]
      %v5665 = vld [vmem:[%s402 + $0x78] sm:$0xff]
      %v5666 = vld [vmem:[%s402 + $0x80] sm:$0xff]
      %v5667 = vld [vmem:[%s402 + $0x88] sm:$0xff]
      %v5668 = vld [vmem:[%s402 + $0x90] sm:$0xff]
      %v5669 = vld [vmem:[%s402 + $0x98] sm:$0xff]
      %v5670 = vld [vmem:[%s405] sm:$0x1]
      %v5672 = vperm.slane %v5670, 0
      %v5674 = vsel %vm444, %v5575, 0
      %v5676 = vsel %vm444, %v5582, 0
      %v5678 = vsel %vm444, %v5589, 0
      %v5680 = vsel %vm444, %v5596, 0
      %v5682 = vsel %vm444, %v5603, 0
      %v5684 = vsel %vm444, %v5610, 0
      %v5686 = vsel %vm444, %v5617, 0
      %v5688 = vsel %vm444, %v5624, 0
      %5690 = vmatpush.msra.mxu0 %v5665
      %5691 = vmatpush.msra.mxu0 %v5664
      %5692 = vmatpush.msra.mxu0 %v5663
      %5693 = vmatpush.msra.mxu0 %v5662
      %5694 = vmatpush.msra.mxu0 %v5661
      %5695 = vmatpush.msra.mxu0 %v5660
      %5696 = vmatpush.msra.mxu0 %v5659
      %5697 = vmatpush.msra.mxu0 %v5658
      %5698 = vmatpush.msra.mxu0 %v5657
      %5699 = vmatpush.msra.mxu0 %v5656
      %5700 = vmatpush.msra.mxu0 %v5655
      %5701 = vmatpush.msra.mxu0 %v5654
      %5702 = vmatpush.msra.mxu0 %v5653
      %5703 = vmatpush.msra.mxu0 %v5652
      %5704 = vmatpush.msra.mxu0 %v5651
      %5705 = vmatpush.msra.mxu0 %v5650
      %5706 = vmatmul.f32.gmra.mxu0 %v5642
      %v5707 = vpop.f32.mrf.mxu0
      %v5708 = vadd.f32 %v5672, %v5707
      %5709 = vmatmul.f32.gmra.mxu0 %v5643
      %v5710 = vpop.f32.mrf.mxu0
      %v5711 = vadd.f32 %v5672, %v5710
      %5712 = vmatmul.f32.gmra.mxu0 %v5644
      %v5713 = vpop.f32.mrf.mxu0
      %v5714 = vadd.f32 %v5672, %v5713
      %5715 = vmatmul.f32.gmra.mxu0 %v5645
      %v5716 = vpop.f32.mrf.mxu0
      %v5717 = vadd.f32 %v5672, %v5716
      %5718 = vmatmul.f32.gmra.mxu0 %v5646
      %v5719 = vpop.f32.mrf.mxu0
      %v5720 = vadd.f32 %v5672, %v5719
      %5721 = vmatmul.f32.gmra.mxu0 %v5647
      %v5722 = vpop.f32.mrf.mxu0
      %v5723 = vadd.f32 %v5672, %v5722
      %5724 = vmatmul.f32.gmra.mxu0 %v5648
      %v5725 = vpop.f32.mrf.mxu0
      %v5726 = vadd.f32 %v5672, %v5725
      %5727 = vmatmul.f32.gmra.mxu0 %v5649
      %v5728 = vpop.f32.mrf.mxu0
      %v5729 = vadd.f32 %v5672, %v5728
      %5730 = vdwg.mxu0
      %5731 = vmatpush.msra.mxu0 0.0
      %5732 = vmatpush.msra.mxu0 0.0
      %5733 = vmatpush.msra.mxu0 0.0
      %5734 = vmatpush.msra.mxu0 0.0
      %5735 = vmatpush.msra.mxu0 0.0
      %5736 = vmatpush.msra.mxu0 0.0
      %5737 = vmatpush.msra.mxu0 0.0
      %5738 = vmatpush.msra.mxu0 0.0
      %5739 = vmatpush.msra.mxu0 0.0
      %5740 = vmatpush.msra.mxu0 0.0
      %5741 = vmatpush.msra.mxu0 0.0
      %5742 = vmatpush.msra.mxu0 0.0
      %5743 = vmatpush.msra.mxu0 %v5669
      %5744 = vmatpush.msra.mxu0 %v5668
      %5745 = vmatpush.msra.mxu0 %v5667
      %5746 = vmatpush.msra.mxu0 %v5666
      %5747 = vmatmul.f32.gmra.mxu0 %v5674
      %v5748 = vpop.f32.mrf.mxu0
      %v5749 = vadd.f32 %v5708, %v5748
      %5750 = vmatmul.f32.gmra.mxu0 %v5676
      %v5751 = vpop.f32.mrf.mxu0
      %v5752 = vadd.f32 %v5711, %v5751
      %5753 = vmatmul.f32.gmra.mxu0 %v5678
      %v5754 = vpop.f32.mrf.mxu0
      %v5755 = vadd.f32 %v5714, %v5754
      %5756 = vmatmul.f32.gmra.mxu0 %v5680
      %v5757 = vpop.f32.mrf.mxu0
      %v5758 = vadd.f32 %v5717, %v5757
      %5759 = vmatmul.f32.gmra.mxu0 %v5682
      %v5760 = vpop.f32.mrf.mxu0
      %v5761 = vadd.f32 %v5720, %v5760
      %5762 = vmatmul.f32.gmra.mxu0 %v5684
      %v5763 = vpop.f32.mrf.mxu0
      %v5764 = vadd.f32 %v5723, %v5763
      %5765 = vmatmul.f32.gmra.mxu0 %v5686
      %v5766 = vpop.f32.mrf.mxu0
      %v5767 = vadd.f32 %v5726, %v5766
      %5768 = vmatmul.f32.gmra.mxu0 %v5688
      %v5769 = vpop.f32.mrf.mxu0
      %v5770 = vadd.f32 %v5729, %v5769
      %5771 = vdwg.mxu0
      %v5772 = vadd.f32 %v5749, %v428
      %v5773 = vadd.f32 %v5752, %v429
      %v5774 = vadd.f32 %v5755, %v430
      %v5775 = vadd.f32 %v5758, %v431
      %v5776 = vadd.f32 %v5761, %v432
      %v5777 = vadd.f32 %v5764, %v433
      %v5778 = vadd.f32 %v5767, %v434
      %v5779 = vadd.f32 %v5770, %v435
      %5780 = vst.msk [vmem:[%s9] sm:$0xff] %vm444, %v5772
      %5781 = vst.msk [vmem:[%s9 + $0x8] sm:$0xff] %vm444, %v5773
      %5782 = vst.msk [vmem:[%s9 + $0x10] sm:$0xff] %vm444, %v5774
      %5783 = vst.msk [vmem:[%s9 + $0x18] sm:$0xff] %vm444, %v5775
      %5784 = vst.msk [vmem:[%s9 + $0x20] sm:$0xff] %vm444, %v5776
      %5785 = vst.msk [vmem:[%s9 + $0x28] sm:$0xff] %vm444, %v5777
      %5786 = vst.msk [vmem:[%s9 + $0x30] sm:$0xff] %vm444, %v5778
      %5787 = vst.msk [vmem:[%s9 + $0x38] sm:$0xff] %vm444, %v5779
      // Predicated region
      $region61: #{pnagnn_forward.1} parent=55 // pred_check
        %p5788 = pneg %p252
      $region62: #{pnagnn_forward.1} parent=55 // pred_check_branch
        %5790 = sbr.rel (%p5788) target = $region64
      $region63: #{pnagnn_forward.1} parent=55 // pred_region
        _
      $region64: #{pnagnn_forward.1} parent=55 // pred_fallthru
        _
      // Predicated region
      $region65: #{pnagnn_forward.1} parent=55 // pred_check
        %p5791 = pneg %p252
      $region66: #{pnagnn_forward.1} parent=55 // pred_check_branch
        %5793 = sbr.rel (%p5791) target = $region68
      $region67: #{pnagnn_forward.1} parent=55 // pred_region
        _
      $region68: #{pnagnn_forward.1} parent=55 // pred_fallthru
        _
    $region56: #{pnagnn_forward.1} parent=5 // pred_fallthru
      _
    %p5794 = scmp.le.s32.totalorder 2, %s15
    // Predicated region
    $region69: #{pnagnn_forward.1} parent=5 // pred_check
      %p5795 = pneg %p5794
    $region70: #{pnagnn_forward.1} parent=5 // pred_check_branch
      %5797 = sbr.rel (%p5795) target = $region72
    $region71: #{pnagnn_forward.1} parent=5 // pred_region
      %s5798 = ssub.s32 %s15, 2
    $region72: #{pnagnn_forward.1} parent=5 // pred_fallthru
      _
  $region6: #{pnagnn_forward.1} parent=0 // loop_footer
    %s19 = sadd.s32 1, %s15
  $region7: #{pnagnn_forward.1} parent=0 // loop_footer_branch
    %14 = sbr.rel target = $region3
  $region8: #{pnagnn_forward.1} parent=0 // loop_exit
    _

</llo_original>
